<compile_context>
chip_gen: v7x
topology: tpu7x:2x2x1
jax: 0.10.0
libtpu: 0.0.40
codegen_flags: <defaults>
</compile_context>

<pallas_src>
import functools

import jax
import jax.numpy as jnp
from jax import lax
from jax.experimental import pallas as pl
from jax.experimental.pallas import tpu as pltpu


def _mdcn_kernel(w_ref, b_ref, mask_ref, gc_ref, rc_ref, depth_ref, out_ref,
                 *, KK, G, R, P, dkn_residual):
    """One (image, pixel-tile) block of the modulated deformable conv.

    Layouts:
      mask_ref  : (1, KK, P)    modulation mask, tap on sublanes
      gc_ref    : (1, 1, KK*P)  sample coord along the G (matmul) axis,
                                lane m = t*P + p  ->  tap t, pixel p
      rc_ref    : (1, 1, KK*P)  sample coord along the R (reduce) axis
      depth_ref : (1, R, G)     depth, reduce axis first / gather axis last
    """
    M = KK * P

    mask = mask_ref[0]                       # (KK, P)
    gc = gc_ref[0]                           # (1, M)
    rc = rc_ref[0]                           # (1, M)
    depth_rg = depth_ref[0]                  # (R, G)

    # normalize the modulation mask over the K*K tap axis (torch forward)
    if dkn_residual:
        scale = mask - jnp.mean(mask, axis=0, keepdims=True)
    else:
        scale = mask / jnp.sum(mask, axis=0, keepdims=True)

    # Closed-form bilinear "tent" weights.  Identical to the two-corner
    # bilinear weights with zero padding: out-of-range coordinates are >= 1
    # away from every grid point and get weight 0 automatically.
    iota_g = lax.broadcasted_iota(jnp.int32, (G, 1), 0).astype(jnp.float32)
    gW = jnp.maximum(0.0, 1.0 - jnp.abs(iota_g - gc))             # (G, M)

    # Stage 1 (MXU): one batched gather-matmul for all K*K taps.
    gsel = jnp.dot(depth_rg, gW, preferred_element_type=jnp.float32,
                   precision=lax.Precision.HIGHEST)               # (R, M)

    # Stage 2 (VPU): tent weights along the short axis + sublane reduce.
    iota_r = lax.broadcasted_iota(jnp.int32, (R, 1), 0).astype(jnp.float32)
    rW = jnp.maximum(0.0, 1.0 - jnp.abs(iota_r - rc))             # (R, M)
    partial = jnp.sum(rW * gsel, axis=0, keepdims=True)           # (1, M)

    # Combine taps: out[p] = b + sum_t w[t] * scale[t, p] * partial[t, p]
    acc = jnp.zeros((1, P), jnp.float32)
    for t in range(KK):                                           # KK tiny (1,P) FMAs
        acc = acc + (w_ref[t] * scale[t:t + 1]) * partial[:, t * P:(t + 1) * P]
    acc = acc + b_ref[0]

    out_ref[0, :, :] = acc.astype(out_ref.dtype)


def post_process_deconv(depth, mask, offset, w, b, *, kernel_size,
                        dkn_residual, pixel_tile=512,
                        vmem_budget_bytes=12 * 2**20):
    """Pallas port of Post_process_deconv.forward (NCHW in / NCHW out)."""
    N, C, H, W = depth.shape
    assert C == 1, "Post_process_deconv operates on a single-channel depth map"
    K = kernel_size
    KK = K * K
    HW = H * W
    pad = (K - 1) // 2
    f32 = jnp.float32

    # MXU contracts the larger spatial axis (G); the smaller one (R) is the
    # short elementwise reduce.
    g_is_rows = H >= W
    G_len, R_len = (H, W) if g_is_rows else (W, H)

    # ---- pixel tile selection: multiple of 128, bounded by a VMEM budget ----
    def vmem_estimate(p):
        temps = (G_len + 2 * R_len) * KK * p * 4            # gW, gsel, rW
        blocks = 2 * (3 * KK * p * 4 + p * 4)               # dbl-buffered tiles
        resident = 2 * R_len * G_len * 4                    # depth_rg
        return temps + blocks + resident

    hw_ceil = pl.cdiv(HW, 128) * 128
    P = min(max(128, (pixel_tile // 128) * 128), hw_ceil)
    if N < 2:  # make sure both v7x TensorCores get at least one grid step
        P = min(P, max(128, (hw_ceil // 2) // 128 * 128))
    while P > 128 and vmem_estimate(P) > vmem_budget_bytes:
        P -= 128
    HW_pad = pl.cdiv(HW, P) * P
    n_tiles = HW_pad // P
    est_bytes = vmem_estimate(P)

    def pad_pix(a, value):
        if HW_pad == HW:
            return a
        cfg = [(0, 0)] * (a.ndim - 1) + [(0, HW_pad - HW)]
        return jnp.pad(a, cfg, constant_values=value)

    # ---- data prep (cheap elementwise / relayout work; XLA fuses it) ----
    depth_f = depth.reshape(N, H, W).astype(f32)
    mask_f = pad_pix(mask.reshape(N, KK, HW).astype(f32), 1.0)    # (N, KK, HW_pad)

    off = offset.reshape(N, KK, 2, HW).astype(f32)
    pix = jnp.arange(HW, dtype=jnp.int32)
    row = (pix // W).astype(f32)
    col = (pix % W).astype(f32)
    tap = jnp.arange(KK, dtype=jnp.int32)
    tap_dy = (tap // K - pad).astype(f32)
    tap_dx = (tap % K - pad).astype(f32)
    ycoord = row[None, None, :] + tap_dy[None, :, None] + off[:, :, 0, :]
    xcoord = col[None, None, :] + tap_dx[None, :, None] + off[:, :, 1, :]

    if g_is_rows:
        gcoord, rcoord = ycoord, xcoord
        depth_rg = jnp.transpose(depth_f, (0, 2, 1))     # (N, W, H) = (N, R, G)
    else:
        gcoord, rcoord = xcoord, ycoord
        depth_rg = depth_f                               # (N, H, W) = (N, R, G)

    def tile_flat(a):
        # (N, KK, HW) -> (N*n_tiles, 1, KK*P).  Padded pixels get coordinate
        # -2.0 (>= 2 away from every grid point => zero tent weight).
        a = pad_pix(a, -2.0)
        a = a.reshape(N, KK, n_tiles, P).transpose(0, 2, 1, 3)
        return a.reshape(N * n_tiles, 1, KK * P)

    gc_flat = tile_flat(gcoord)
    rc_flat = tile_flat(rcoord)

    w_flat = w.reshape(KK).astype(f32)
    b_flat = b.reshape(1).astype(f32)

    kern = functools.partial(_mdcn_kernel, KK=KK, G=G_len, R=R_len, P=P,
                             dkn_residual=dkn_residual)

    out = pl.pallas_call(
        kern,
        out_shape=jax.ShapeDtypeStruct((N, 1, HW_pad), f32),
        grid_spec=pltpu.PrefetchScalarGridSpec(
            num_scalar_prefetch=0,
            grid=(N, n_tiles),
            in_specs=[
                pl.BlockSpec(memory_space=pltpu.MemorySpace.SMEM),   # conv w (K*K,)
                pl.BlockSpec(memory_space=pltpu.MemorySpace.SMEM),   # conv b (1,)
                pl.BlockSpec((1, KK, P), lambda n, t: (n, 0, t)),            # mask tile
                pl.BlockSpec((1, 1, KK * P),
                             lambda n, t: (n * n_tiles + t, 0, 0)),          # g coords
                pl.BlockSpec((1, 1, KK * P),
                             lambda n, t: (n * n_tiles + t, 0, 0)),          # r coords
                pl.BlockSpec((1, R_len, G_len), lambda n, t: (n, 0, 0)),     # depth (resident)
            ],
            out_specs=pl.BlockSpec((1, 1, P), lambda n, t: (n, 0, t)),
        ),
        compiler_params=pltpu.CompilerParams(
            dimension_semantics=("parallel", "parallel"),
            vmem_limit_bytes=int(min(48 * 2**20,
                                     max(32 * 2**20, int(1.5 * est_bytes)))),
        ),
    )(w_flat, b_flat, mask_f, gc_flat, rc_flat, depth_rg)

    out = out[:, :, :HW].reshape(N, 1, H, W)
    if dkn_residual:
        out = out + depth.astype(f32)    # residual added in the wrapper (XLA fuses)
    return out.astype(depth.dtype)


def reference_post_process_deconv(depth, mask, offset, w, b, kernel_size, dkn_residual):
    """Pure-JAX reference of the torch forward (for verification)."""
    N, _, H, W = depth.shape
    K = kernel_size
    pad = (K - 1) // 2
    if dkn_residual:
        m = mask - jnp.mean(mask, axis=1, keepdims=True)
    else:
        m = mask / jnp.sum(mask, axis=1, keepdims=True)
    wf = w.reshape(-1)
    row = jnp.arange(H, dtype=jnp.float32)[:, None]
    col = jnp.arange(W, dtype=jnp.float32)[None, :]
    outs = []
    for n in range(N):
        d = depth[n, 0]
        acc = jnp.zeros((H, W), jnp.float32)
        for t in range(K * K):
            i, j = t // K, t % K
            y = row + (i - pad) + offset[n, 2 * t]
            x = col + (j - pad) + offset[n, 2 * t + 1]
            y0 = jnp.floor(y)
            x0 = jnp.floor(x)
            ly = y - y0
            lx = x - x0
            val = jnp.zeros((H, W), jnp.float32)
            for cy_off, cx_off, wgt in ((0, 0, (1 - ly) * (1 - lx)),
                                        (0, 1, (1 - ly) * lx),
                                        (1, 0, ly * (1 - lx)),
                                        (1, 1, ly * lx)):
                cy = y0 + cy_off
                cx = x0 + cx_off
                valid = (cy >= 0) & (cy <= H - 1) & (cx >= 0) & (cx <= W - 1)
                cyi = jnp.clip(cy, 0, H - 1).astype(jnp.int32)
                cxi = jnp.clip(cx, 0, W - 1).astype(jnp.int32)
                val = val + jnp.where(valid, wgt, 0.0) * d[cyi, cxi]
            acc = acc + m[n, t] * wf[t] * val
        acc = acc + b[0]
        outs.append(acc)
    out = jnp.stack(outs)[:, None]
    if dkn_residual:
        out = out + depth
    return out


if __name__ == "__main__":
    key = jax.random.PRNGKey(0)
    N, C, H, W = 2, 1, 16, 16
    K = 3  # args.kernel_size

    k1, k2, k3 = jax.random.split(key, 3)
    depth = jax.random.uniform(k1, (N, C, H, W), jnp.float32)
    mask = jax.random.uniform(k2, (N, K * K, H, W), jnp.float32,
                              minval=0.5, maxval=1.5)          # "weight" forward arg
    offset = jax.random.normal(k3, (N, 2 * K * K, H, W), jnp.float32) * 2.0

    # Frozen parameters from __init__ (deterministic, no checkpoint load):
    w_param = jnp.ones((1, 1, K, K), jnp.float32)   # self.w
    b_param = jnp.zeros((1,), jnp.float32)          # self.b

    for dkn_residual in (True, False):
        out = post_process_deconv(depth, mask, offset, w_param, b_param,
                                  kernel_size=K, dkn_residual=dkn_residual)
        out = jax.block_until_ready(out)
        ref = reference_post_process_deconv(depth, mask, offset, w_param, b_param,
                                            K, dkn_residual)
        assert out.shape == depth.shape
        if not jnp.allclose(out, ref, atol=1e-4, rtol=1e-4):
            raise SystemExit(f"mismatch (dkn_residual={dkn_residual}): "
                             f"max abs err {float(jnp.max(jnp.abs(out - ref)))}")

    print("KERNEL_OK")
</pallas_src>

<mosaic_0001>
module attributes {stable_mosaic.version = 11 : i64} {
  func.func @_mdcn_kernel(%arg0: i32, %arg1: i32, %arg2: memref<9xf32, #tpu.memory_space<smem>>, %arg3: memref<1xf32, #tpu.memory_space<smem>>, %arg4: memref<1x9x256xf32, #tpu.memory_space<vmem>>, %arg5: memref<1x1x2304xf32, #tpu.memory_space<vmem>>, %arg6: memref<1x1x2304xf32, #tpu.memory_space<vmem>>, %arg7: memref<1x16x16xf32, #tpu.memory_space<vmem>>, %arg8: memref<1x1x256xf32, #tpu.memory_space<vmem>>) attributes {dimension_semantics = [#tpu.dimension_semantics<parallel>, #tpu.dimension_semantics<parallel>], iteration_bounds = array<i64: 2, 1>, scalar_prefetch = 0 : i64, scratch_operands = 0 : i64, tpu.core_type = #tpu.core_type<tc>, window_params = [{transform_indices = @transform_0, window_bounds = array<i64: 9>}, {transform_indices = @transform_1, window_bounds = array<i64: 1>}, {transform_indices = @transform_2, window_bounds = array<i64: 1, 9, 256>}, {transform_indices = @transform_3, window_bounds = array<i64: 1, 1, 2304>}, {transform_indices = @transform_4, window_bounds = array<i64: 1, 1, 2304>}, {transform_indices = @transform_5, window_bounds = array<i64: 1, 16, 16>}, {transform_indices = @transform_6, window_bounds = array<i64: 1, 1, 256>}]} {
    %c0 = arith.constant 0 : index
    %c0_0 = arith.constant 0 : index
    %c0_1 = arith.constant 0 : index
    %0 = vector.load %arg4[%c0, %c0_0, %c0_1] : memref<1x9x256xf32, #tpu.memory_space<vmem>>, vector<1x9x256xf32>
    %1 = vector.shape_cast %0 : vector<1x9x256xf32> to vector<9x256xf32>
    %c0_2 = arith.constant 0 : index
    %c0_3 = arith.constant 0 : index
    %c0_4 = arith.constant 0 : index
    %2 = vector.load %arg5[%c0_2, %c0_3, %c0_4] : memref<1x1x2304xf32, #tpu.memory_space<vmem>>, vector<1x1x2304xf32>
    %3 = vector.shape_cast %2 : vector<1x1x2304xf32> to vector<1x2304xf32>
    %c0_5 = arith.constant 0 : index
    %c0_6 = arith.constant 0 : index
    %c0_7 = arith.constant 0 : index
    %4 = vector.load %arg6[%c0_5, %c0_6, %c0_7] : memref<1x1x2304xf32, #tpu.memory_space<vmem>>, vector<1x1x2304xf32>
    %5 = vector.shape_cast %4 : vector<1x1x2304xf32> to vector<1x2304xf32>
    %c0_8 = arith.constant 0 : index
    %c0_9 = arith.constant 0 : index
    %c0_10 = arith.constant 0 : index
    %6 = vector.load %arg7[%c0_8, %c0_9, %c0_10] : memref<1x16x16xf32, #tpu.memory_space<vmem>>, vector<1x16x16xf32>
    %7 = vector.shape_cast %6 : vector<1x16x16xf32> to vector<16x16xf32>
    %cst = arith.constant dense<0.000000e+00> : vector<256xf32>
    %8 = vector.multi_reduction <add>, %1, %cst [0] : vector<9x256xf32> to vector<256xf32>
    %9 = vector.shape_cast %8 : vector<256xf32> to vector<1x256xf32>
    %cst_11 = arith.constant 9.000000e+00 : f32
    %10 = vector.broadcast %cst_11 : f32 to vector<1x256xf32>
    %11 = arith.divf %9, %10 : vector<1x256xf32>
    %12 = vector.broadcast %11 : vector<1x256xf32> to vector<9x256xf32>
    %13 = arith.subf %1, %12 : vector<9x256xf32>
    %14 = tpu.iota {dimensions = array<i32: 0>} : vector<16x1xi32>
    %15 = arith.sitofp %14 : vector<16x1xi32> to vector<16x1xf32>
    %16 = vector.broadcast %15 : vector<16x1xf32> to vector<16x2304xf32>
    %17 = vector.broadcast %3 : vector<1x2304xf32> to vector<16x2304xf32>
    %18 = arith.subf %16, %17 : vector<16x2304xf32>
    %19 = math.absf %18 : vector<16x2304xf32>
    %cst_12 = arith.constant 1.000000e+00 : f32
    %20 = vector.broadcast %cst_12 : f32 to vector<16x2304xf32>
    %21 = arith.subf %20, %19 : vector<16x2304xf32>
    %cst_13 = arith.constant 0.000000e+00 : f32
    %22 = vector.broadcast %cst_13 : f32 to vector<16x2304xf32>
    %23 = arith.maximumf %22, %21 : vector<16x2304xf32>
    %cst_14 = arith.constant dense<0.000000e+00> : vector<16x2304xf32>
    %24 = tpu.matmul %7, %23, %cst_14 {dimension_numbers = #tpu.dot_dimension_numbers<[1], [0], [0], [1], [0, 0, 1, 1], [], []>, precision = #tpu.contract_precision<fp32>} : vector<16x16xf32>, vector<16x2304xf32>, vector<16x2304xf32> -> vector<16x2304xf32>
    %25 = tpu.iota {dimensions = array<i32: 0>} : vector<16x1xi32>
    %26 = arith.sitofp %25 : vector<16x1xi32> to vector<16x1xf32>
    %27 = vector.broadcast %26 : vector<16x1xf32> to vector<16x2304xf32>
    %28 = vector.broadcast %5 : vector<1x2304xf32> to vector<16x2304xf32>
    %29 = arith.subf %27, %28 : vector<16x2304xf32>
    %30 = math.absf %29 : vector<16x2304xf32>
    %cst_15 = arith.constant 1.000000e+00 : f32
    %31 = vector.broadcast %cst_15 : f32 to vector<16x2304xf32>
    %32 = arith.subf %31, %30 : vector<16x2304xf32>
    %cst_16 = arith.constant 0.000000e+00 : f32
    %33 = vector.broadcast %cst_16 : f32 to vector<16x2304xf32>
    %34 = arith.maximumf %33, %32 : vector<16x2304xf32>
    %35 = arith.mulf %34, %24 : vector<16x2304xf32>
    %cst_17 = arith.constant dense<0.000000e+00> : vector<2304xf32>
    %36 = vector.multi_reduction <add>, %35, %cst_17 [0] : vector<16x2304xf32> to vector<2304xf32>
    %37 = vector.shape_cast %36 : vector<2304xf32> to vector<1x2304xf32>
    %cst_18 = arith.constant 0.000000e+00 : f32
    %38 = vector.broadcast %cst_18 : f32 to vector<1x256xf32>
    %c0_19 = arith.constant 0 : index
    %39 = memref.load %arg2[%c0_19] : memref<9xf32, #tpu.memory_space<smem>>
    %40 = vector.extract_strided_slice %13 {offsets = [0, 0], sizes = [1, 256], strides = [1, 1]} : vector<9x256xf32> to vector<1x256xf32>
    %41 = vector.broadcast %39 : f32 to vector<1x256xf32>
    %42 = arith.mulf %41, %40 : vector<1x256xf32>
    %43 = vector.extract_strided_slice %37 {offsets = [0, 0], sizes = [1, 256], strides = [1, 1]} : vector<1x2304xf32> to vector<1x256xf32>
    %44 = arith.mulf %42, %43 : vector<1x256xf32>
    %45 = arith.addf %38, %44 : vector<1x256xf32>
    %c1 = arith.constant 1 : index
    %46 = memref.load %arg2[%c1] : memref<9xf32, #tpu.memory_space<smem>>
    %47 = vector.extract_strided_slice %13 {offsets = [1, 0], sizes = [1, 256], strides = [1, 1]} : vector<9x256xf32> to vector<1x256xf32>
    %48 = vector.broadcast %46 : f32 to vector<1x256xf32>
    %49 = arith.mulf %48, %47 : vector<1x256xf32>
    %50 = vector.extract_strided_slice %37 {offsets = [0, 256], sizes = [1, 256], strides = [1, 1]} : vector<1x2304xf32> to vector<1x256xf32>
    %51 = arith.mulf %49, %50 : vector<1x256xf32>
    %52 = arith.addf %45, %51 : vector<1x256xf32>
    %c2 = arith.constant 2 : index
    %53 = memref.load %arg2[%c2] : memref<9xf32, #tpu.memory_space<smem>>
    %54 = vector.extract_strided_slice %13 {offsets = [2, 0], sizes = [1, 256], strides = [1, 1]} : vector<9x256xf32> to vector<1x256xf32>
    %55 = vector.broadcast %53 : f32 to vector<1x256xf32>
    %56 = arith.mulf %55, %54 : vector<1x256xf32>
    %57 = vector.extract_strided_slice %37 {offsets = [0, 512], sizes = [1, 256], strides = [1, 1]} : vector<1x2304xf32> to vector<1x256xf32>
    %58 = arith.mulf %56, %57 : vector<1x256xf32>
    %59 = arith.addf %52, %58 : vector<1x256xf32>
    %c3 = arith.constant 3 : index
    %60 = memref.load %arg2[%c3] : memref<9xf32, #tpu.memory_space<smem>>
    %61 = vector.extract_strided_slice %13 {offsets = [3, 0], sizes = [1, 256], strides = [1, 1]} : vector<9x256xf32> to vector<1x256xf32>
    %62 = vector.broadcast %60 : f32 to vector<1x256xf32>
    %63 = arith.mulf %62, %61 : vector<1x256xf32>
    %64 = vector.extract_strided_slice %37 {offsets = [0, 768], sizes = [1, 256], strides = [1, 1]} : vector<1x2304xf32> to vector<1x256xf32>
    %65 = arith.mulf %63, %64 : vector<1x256xf32>
    %66 = arith.addf %59, %65 : vector<1x256xf32>
    %c4 = arith.constant 4 : index
    %67 = memref.load %arg2[%c4] : memref<9xf32, #tpu.memory_space<smem>>
    %68 = vector.extract_strided_slice %13 {offsets = [4, 0], sizes = [1, 256], strides = [1, 1]} : vector<9x256xf32> to vector<1x256xf32>
    %69 = vector.broadcast %67 : f32 to vector<1x256xf32>
    %70 = arith.mulf %69, %68 : vector<1x256xf32>
    %71 = vector.extract_strided_slice %37 {offsets = [0, 1024], sizes = [1, 256], strides = [1, 1]} : vector<1x2304xf32> to vector<1x256xf32>
    %72 = arith.mulf %70, %71 : vector<1x256xf32>
    %73 = arith.addf %66, %72 : vector<1x256xf32>
    %c5 = arith.constant 5 : index
    %74 = memref.load %arg2[%c5] : memref<9xf32, #tpu.memory_space<smem>>
    %75 = vector.extract_strided_slice %13 {offsets = [5, 0], sizes = [1, 256], strides = [1, 1]} : vector<9x256xf32> to vector<1x256xf32>
    %76 = vector.broadcast %74 : f32 to vector<1x256xf32>
    %77 = arith.mulf %76, %75 : vector<1x256xf32>
    %78 = vector.extract_strided_slice %37 {offsets = [0, 1280], sizes = [1, 256], strides = [1, 1]} : vector<1x2304xf32> to vector<1x256xf32>
    %79 = arith.mulf %77, %78 : vector<1x256xf32>
    %80 = arith.addf %73, %79 : vector<1x256xf32>
    %c6 = arith.constant 6 : index
    %81 = memref.load %arg2[%c6] : memref<9xf32, #tpu.memory_space<smem>>
    %82 = vector.extract_strided_slice %13 {offsets = [6, 0], sizes = [1, 256], strides = [1, 1]} : vector<9x256xf32> to vector<1x256xf32>
    %83 = vector.broadcast %81 : f32 to vector<1x256xf32>
    %84 = arith.mulf %83, %82 : vector<1x256xf32>
    %85 = vector.extract_strided_slice %37 {offsets = [0, 1536], sizes = [1, 256], strides = [1, 1]} : vector<1x2304xf32> to vector<1x256xf32>
    %86 = arith.mulf %84, %85 : vector<1x256xf32>
    %87 = arith.addf %80, %86 : vector<1x256xf32>
    %c7 = arith.constant 7 : index
    %88 = memref.load %arg2[%c7] : memref<9xf32, #tpu.memory_space<smem>>
    %89 = vector.extract_strided_slice %13 {offsets = [7, 0], sizes = [1, 256], strides = [1, 1]} : vector<9x256xf32> to vector<1x256xf32>
    %90 = vector.broadcast %88 : f32 to vector<1x256xf32>
    %91 = arith.mulf %90, %89 : vector<1x256xf32>
    %92 = vector.extract_strided_slice %37 {offsets = [0, 1792], sizes = [1, 256], strides = [1, 1]} : vector<1x2304xf32> to vector<1x256xf32>
    %93 = arith.mulf %91, %92 : vector<1x256xf32>
    %94 = arith.addf %87, %93 : vector<1x256xf32>
    %c8 = arith.constant 8 : index
    %95 = memref.load %arg2[%c8] : memref<9xf32, #tpu.memory_space<smem>>
    %96 = vector.extract_strided_slice %13 {offsets = [8, 0], sizes = [1, 256], strides = [1, 1]} : vector<9x256xf32> to vector<1x256xf32>
    %97 = vector.broadcast %95 : f32 to vector<1x256xf32>
    %98 = arith.mulf %97, %96 : vector<1x256xf32>
    %99 = vector.extract_strided_slice %37 {offsets = [0, 2048], sizes = [1, 256], strides = [1, 1]} : vector<1x2304xf32> to vector<1x256xf32>
    %100 = arith.mulf %98, %99 : vector<1x256xf32>
    %101 = arith.addf %94, %100 : vector<1x256xf32>
    %c0_20 = arith.constant 0 : index
    %102 = memref.load %arg3[%c0_20] : memref<1xf32, #tpu.memory_space<smem>>
    %103 = vector.broadcast %102 : f32 to vector<1x256xf32>
    %104 = arith.addf %101, %103 : vector<1x256xf32>
    %c0_21 = arith.constant 0 : index
    %c0_22 = arith.constant 0 : index
    %c0_23 = arith.constant 0 : index
    %105 = vector.load %arg8[%c0_21, %c0_22, %c0_23] : memref<1x1x256xf32, #tpu.memory_space<vmem>>, vector<1x1x256xf32>
    %106 = vector.shape_cast %105 : vector<1x1x256xf32> to vector<1x256xf32>
    %107 = vector.shape_cast %104 : vector<1x256xf32> to vector<1x1x256xf32>
    tpu.vector_store %arg8[%c0_21, %c0_22, %c0_23], %107 {strides = array<i32>} : memref<1x1x256xf32, #tpu.memory_space<vmem>>, vector<1x1x256xf32>,
    return
  }
  func.func @transform_0(%arg0: i32, %arg1: i32) -> i32 {
    %c0_i32 = arith.constant 0 : i32
    %c0_i32_0 = arith.constant 0 : i32
    return %c0_i32 : i32
  }
  func.func @transform_1(%arg0: i32, %arg1: i32) -> i32 {
    %c0_i32 = arith.constant 0 : i32
    %c0_i32_0 = arith.constant 0 : i32
    return %c0_i32 : i32
  }
  func.func @transform_2(%arg0: i32, %arg1: i32) -> (i32, i32, i32) {
    %c0_i32 = arith.constant 0 : i32
    %c0_i32_0 = arith.constant 0 : i32
    return %arg0, %c0_i32, %arg1 : i32, i32, i32
  }
  func.func @transform_3(%arg0: i32, %arg1: i32) -> (i32, i32, i32) {
    %c1_i32 = arith.constant 1 : i32
    %0 = arith.muli %arg0, %c1_i32 : i32
    %1 = arith.addi %0, %arg1 : i32
    %c0_i32 = arith.constant 0 : i32
    %c0_i32_0 = arith.constant 0 : i32
    %c0_i32_1 = arith.constant 0 : i32
    return %1, %c0_i32, %c0_i32_0 : i32, i32, i32
  }
  func.func @transform_4(%arg0: i32, %arg1: i32) -> (i32, i32, i32) {
    %c1_i32 = arith.constant 1 : i32
    %0 = arith.muli %arg0, %c1_i32 : i32
    %1 = arith.addi %0, %arg1 : i32
    %c0_i32 = arith.constant 0 : i32
    %c0_i32_0 = arith.constant 0 : i32
    %c0_i32_1 = arith.constant 0 : i32
    return %1, %c0_i32, %c0_i32_0 : i32, i32, i32
  }
  func.func @transform_5(%arg0: i32, %arg1: i32) -> (i32, i32, i32) {
    %c0_i32 = arith.constant 0 : i32
    %c0_i32_0 = arith.constant 0 : i32
    %c0_i32_1 = arith.constant 0 : i32
    return %arg0, %c0_i32, %c0_i32_0 : i32, i32, i32
  }
  func.func @transform_6(%arg0: i32, %arg1: i32) -> (i32, i32, i32) {
    %c0_i32 = arith.constant 0 : i32
    %c0_i32_0 = arith.constant 0 : i32
    return %arg0, %c0_i32, %arg1 : i32, i32, i32
  }
}

</mosaic_0001>

<llo_original>
// kernel: tpu_custom_call.1
$region0: #{tpu_custom_call.1}
  #allocation0 [shape = 'u32[]', space=smem, size = 0x4, offset = 0x4, fixed_abs, tag = 'smem constant byte address 0x4 - core index']
  #allocation1 [shape = 'u32[144,128]{1,0:T(1,128)}', space=vmem, size = 0x12000, scoped, tag = 'internal scratch']
  #allocation2 [shape = 'f32[1]{0:T(128)S(6)}', space=smem, size = 0x200, scoped, tag = 'scoped memory for tpu_custom_call.1']
  %s0 = inlined_call_operand.vmem [shape: f32[9], index: 0, kind: input, shape index: {}]
  %s1 = inlined_call_operand.<no memory space> [shape: f32[1], index: 1, kind: input, shape index: {}]
  %s2 = inlined_call_operand.vmem [shape: f32[2,9,256], index: 2, kind: input, shape index: {}]
  %s3 = inlined_call_operand.vmem [shape: f32[2,1,2304], index: 3, kind: input, shape index: {}]
  %s4 = inlined_call_operand.vmem [shape: f32[2,1,2304], index: 4, kind: input, shape index: {}]
  %s5 = inlined_call_operand.vmem [shape: f32[2,16,16], index: 5, kind: input, shape index: {}]
  %s6 = inlined_call_operand.hbm [shape: f32[2,1,256], index: 6, kind: output, shape index: {}]
  %s7 = sld [smem:[#allocation0]]
  $region61: #{tpu_custom_call.1} parent=0
    _
  %s9 = ssub.s32 1, %s7
  %s10 = scalar_select 0, %s9, %s7
  %11 = sst [smem:[#allocation2]] %s1
  $region1: #{tpu_custom_call.1} parent=0
    #allocation3 [shape = 'u8[512]{0}', space=smem, size = 0x200, scoped, tag = 'input window, operand 0, single buffered']
    #allocation4 [shape = 's32[2]{0}', space=sflag, size = 0x8, scoped, tag = 'scoped memory for tpu_custom_call.1']
    #allocation5 [shape = 's32[2]{0}', space=sflag, size = 0x8, scoped, tag = 'scoped memory for tpu_custom_call.1']
    #allocation6 [shape = 'u8[2048]{0}', space=vmem, size = 0x800, scoped, tag = 'output window, operand 0']
    %12 = vsyncpa [#allocation5], 0
    %13 = vsyncpa [#allocation4], 0
    %s14 = scalar_lea.sflag [#allocation4], 1
    %15 = vsyncpa %s14, 0
    loop: start=0, step=1, limit=4
    $region2: #{tpu_custom_call.1} parent=1 // loop_pre_header
      _
    $region3: #{tpu_custom_call.1} parent=1 // loop_header
      %s17 = sphi 0, %s21
      %p18 = scmp.ge.s32.totalorder %s17, 4
      %s24 = sphi 0, %s36
      %s25 = sphi 0, %s32
      %s26 = sphi 0, %s24
      %s27 = sphi 0, %s25
      %s28 = sphi 0, %s26
      %s29 = sphi 0, %s27
      %s37 = sphi 0, %s37
      %s39 = sphi 0, %s37
      %s40 = sphi 0, %s39
      %s54 = sphi 0, %s40
      %s58 = sphi 0, %s58
      %s60 = sphi 0, %s58
      %s61 = sphi 0, %s60
      %s75 = sphi 0, %s61
      %s83 = sphi 0, %s85
      %s86 = sphi 0, %s83
      %s87 = sphi 0, %s86
      %s103 = sphi 0, %s87
      %s111 = sphi 0, %s113
      %s114 = sphi 0, %s111
      %s115 = sphi 0, %s114
      %s131 = sphi 0, %s115
      %s139 = sphi 0, %s141
      %s142 = sphi 0, %s139
      %s143 = sphi 0, %s142
      %s159 = sphi 0, %s143
      %s165 = sphi 0, %s167
      %s168 = sphi 0, %s165
      %s169 = sphi 0, %s168
      %s185 = sphi 0, %s169
      %s193 = sphi 0, %s195
      %s196 = sphi 0, %s193
      %s197 = sphi 0, %s196
      %s213 = sphi 0, %s197
    $region4: #{tpu_custom_call.1} parent=1 // loop_header_branch
      %20 = sbr.rel (%p18) target = $region8
    $region5: #{tpu_custom_call.1} parent=1 // loop_body
      %s22 = ssub.s32 %s17, 1
      %s23 = ssub.s32 %s17, 2
      %s30 = sadd.s32 1, %s25
      %p31 = scmp.ge.s32.totalorder %s30, 1
      %s32 = scalar_select %p31, 0, %s30
      %s33 = sadd.s32 1, %s24
      %s34 = scalar_select %p31, %s33, %s24
      %p35 = scmp.ge.s32.totalorder %s34, 2
      %s36 = scalar_select %p35, 0, %s34
      %s38 = sadd.s32 %s37, 1
      %p41 = scmp.eq.s32.totalorder %s17, 1
      %p42 = scmp.ne.s32.totalorder %s37, %s39
      %p43 = scmp.eq.s32.totalorder %s17, 0
      %p44 = por %p42, %p43
      %p45 = scmp.ne.s32.totalorder %s37, %s39
      %p46 = scmp.eq.s32.totalorder %s22, 1
      %p47 = por %p45, %p46
      %p48 = scmp.ne.s32.totalorder %s39, %s40
      %p49 = scmp.eq.s32.totalorder %s22, 0
      %p50 = por %p48, %p49
      %p51 = scmp.ne.s32.totalorder %s39, %s40
      %p52 = scmp.eq.s32.totalorder %s23, 1
      %p53 = por %p51, %p52
      %p55 = scmp.ne.s32.totalorder %s40, %s54
      %p56 = scmp.eq.s32.totalorder %s23, 0
      %p57 = por %p55, %p56
      %s59 = sadd.s32 %s58, 1
      %p62 = scmp.eq.s32.totalorder %s17, 1
      %p63 = scmp.ne.s32.totalorder %s58, %s60
      %p64 = scmp.eq.s32.totalorder %s17, 0
      %p65 = por %p63, %p64
      %p66 = scmp.ne.s32.totalorder %s58, %s60
      %p67 = scmp.eq.s32.totalorder %s22, 1
      %p68 = por %p66, %p67
      %p69 = scmp.ne.s32.totalorder %s60, %s61
      %p70 = scmp.eq.s32.totalorder %s22, 0
      %p71 = por %p69, %p70
      %p72 = scmp.ne.s32.totalorder %s60, %s61
      %p73 = scmp.eq.s32.totalorder %s23, 1
      %p74 = por %p72, %p73
      %p76 = scmp.ne.s32.totalorder %s61, %s75
      %p77 = scmp.eq.s32.totalorder %s23, 0
      %p78 = por %p76, %p77
      %s79 = ssub.s32 %s24, %s36
      %s80 = ssub.s32 %s25, %s32
      %s81 = sor.u32 %s79, %s80
      %p82 = scmp.eq.s32.totalorder %s81, 0
      %s84 = sadd.s32 %s83, 1
      %s85 = scalar_select %p82, %s83, %s84
      %p88 = pneg %p82
      %p89 = scmp.eq.s32.totalorder %s17, 1
      %p90 = por %p88, %p89
      %p91 = scmp.ne.s32.totalorder %s83, %s86
      %p92 = scmp.eq.s32.totalorder %s17, 0
      %p93 = por %p91, %p92
      %p94 = scmp.ne.s32.totalorder %s83, %s86
      %p95 = scmp.eq.s32.totalorder %s22, 1
      %p96 = por %p94, %p95
      %p97 = scmp.ne.s32.totalorder %s86, %s87
      %p98 = scmp.eq.s32.totalorder %s22, 0
      %p99 = por %p97, %p98
      %p100 = scmp.ne.s32.totalorder %s86, %s87
      %p101 = scmp.eq.s32.totalorder %s23, 1
      %p102 = por %p100, %p101
      %p104 = scmp.ne.s32.totalorder %s87, %s103
      %p105 = scmp.eq.s32.totalorder %s23, 0
      %p106 = por %p104, %p105
      %s107 = sadd.s32 %s24, %s25
      %s108 = sadd.s32 %s36, %s32
      %s109 = ssub.s32 %s107, %s108
      %p110 = scmp.eq.s32.totalorder %s109, 0
      %s112 = sadd.s32 %s111, 1
      %s113 = scalar_select %p110, %s111, %s112
      %p116 = pneg %p110
      %p117 = scmp.eq.s32.totalorder %s17, 1
      %p118 = por %p116, %p117
      %p119 = scmp.ne.s32.totalorder %s111, %s114
      %p120 = scmp.eq.s32.totalorder %s17, 0
      %p121 = por %p119, %p120
      %p122 = scmp.ne.s32.totalorder %s111, %s114
      %p123 = scmp.eq.s32.totalorder %s22, 1
      %p124 = por %p122, %p123
      %p125 = scmp.ne.s32.totalorder %s114, %s115
      %p126 = scmp.eq.s32.totalorder %s22, 0
      %p127 = por %p125, %p126
      %p128 = scmp.ne.s32.totalorder %s114, %s115
      %p129 = scmp.eq.s32.totalorder %s23, 1
      %p130 = por %p128, %p129
      %p132 = scmp.ne.s32.totalorder %s115, %s131
      %p133 = scmp.eq.s32.totalorder %s23, 0
      %p134 = por %p132, %p133
      %s135 = sadd.s32 %s24, %s25
      %s136 = sadd.s32 %s36, %s32
      %s137 = ssub.s32 %s135, %s136
      %p138 = scmp.eq.s32.totalorder %s137, 0
      %s140 = sadd.s32 %s139, 1
      %s141 = scalar_select %p138, %s139, %s140
      %p144 = pneg %p138
      %p145 = scmp.eq.s32.totalorder %s17, 1
      %p146 = por %p144, %p145
      %p147 = scmp.ne.s32.totalorder %s139, %s142
      %p148 = scmp.eq.s32.totalorder %s17, 0
      %p149 = por %p147, %p148
      %p150 = scmp.ne.s32.totalorder %s139, %s142
      %p151 = scmp.eq.s32.totalorder %s22, 1
      %p152 = por %p150, %p151
      %p153 = scmp.ne.s32.totalorder %s142, %s143
      %p154 = scmp.eq.s32.totalorder %s22, 0
      %p155 = por %p153, %p154
      %p156 = scmp.ne.s32.totalorder %s142, %s143
      %p157 = scmp.eq.s32.totalorder %s23, 1
      %p158 = por %p156, %p157
      %p160 = scmp.ne.s32.totalorder %s143, %s159
      %p161 = scmp.eq.s32.totalorder %s23, 0
      %p162 = por %p160, %p161
      %s163 = ssub.s32 %s24, %s36
      %p164 = scmp.eq.s32.totalorder %s163, 0
      %s166 = sadd.s32 %s165, 1
      %s167 = scalar_select %p164, %s165, %s166
      %p170 = pneg %p164
      %p171 = scmp.eq.s32.totalorder %s17, 1
      %p172 = por %p170, %p171
      %p173 = scmp.ne.s32.totalorder %s165, %s168
      %p174 = scmp.eq.s32.totalorder %s17, 0
      %p175 = por %p173, %p174
      %p176 = scmp.ne.s32.totalorder %s165, %s168
      %p177 = scmp.eq.s32.totalorder %s22, 1
      %p178 = por %p176, %p177
      %p179 = scmp.ne.s32.totalorder %s168, %s169
      %p180 = scmp.eq.s32.totalorder %s22, 0
      %p181 = por %p179, %p180
      %p182 = scmp.ne.s32.totalorder %s168, %s169
      %p183 = scmp.eq.s32.totalorder %s23, 1
      %p184 = por %p182, %p183
      %p186 = scmp.ne.s32.totalorder %s169, %s185
      %p187 = scmp.eq.s32.totalorder %s23, 0
      %p188 = por %p186, %p187
      %s189 = ssub.s32 %s24, %s36
      %s190 = ssub.s32 %s25, %s32
      %s191 = sor.u32 %s189, %s190
      %p192 = scmp.eq.s32.totalorder %s191, 0
      %s194 = sadd.s32 %s193, 1
      %s195 = scalar_select %p192, %s193, %s194
      %p198 = pneg %p192
      %p199 = scmp.eq.s32.totalorder %s17, 1
      %p200 = por %p198, %p199
      %p201 = scmp.ne.s32.totalorder %s193, %s196
      %p202 = scmp.eq.s32.totalorder %s17, 0
      %p203 = por %p201, %p202
      %p204 = scmp.ne.s32.totalorder %s193, %s196
      %p205 = scmp.eq.s32.totalorder %s22, 1
      %p206 = por %p204, %p205
      %p207 = scmp.ne.s32.totalorder %s196, %s197
      %p208 = scmp.eq.s32.totalorder %s22, 0
      %p209 = por %p207, %p208
      %p210 = scmp.ne.s32.totalorder %s196, %s197
      %p211 = scmp.eq.s32.totalorder %s23, 1
      %p212 = por %p210, %p211
      %p214 = scmp.ne.s32.totalorder %s197, %s213
      %p215 = scmp.eq.s32.totalorder %s23, 0
      %p216 = por %p214, %p215
      %p217 = scmp.le.s32.totalorder 1, %s17
      %p218 = scmp.lt.s32.totalorder %s17, 3
      %p219 = pnand %p217, %p218
      %p220 = pneg %p219
      // Predicated region
      $region9: #{tpu_custom_call.1} parent=5 // pred_check
        _
      $region10: #{tpu_custom_call.1} parent=5 // pred_check_branch
        %222 = sbr.rel (%p219) target = $region12
      $region11: #{tpu_custom_call.1} parent=5 // pred_region
        %s223 = ssub.s32 %s17, 1
        // Predicated region
        $region13: #{tpu_custom_call.1} parent=11 // pred_check
          %p224 = pneg %p50
        $region14: #{tpu_custom_call.1} parent=11 // pred_check_branch
          %226 = sbr.rel (%p224) target = $region16
        $region15: #{tpu_custom_call.1} parent=11 // pred_region
          %s228 = ssub.s32 16, 16
          %229 = vsyncadd [#allocation5], %s228
          %s231 = sshll.u32 %s0, 4
          %s232 = int_to_ptr.vmem [resolvable:$true] %s231
          %234 = dma.vmem_to_smem %s232, 16, [#allocation3], [#allocation5]
        $region16: #{tpu_custom_call.1} parent=11 // pred_fallthru
          _
        // Predicated region
        $region17: #{tpu_custom_call.1} parent=11 // pred_check
          %p235 = pneg %p71
        $region18: #{tpu_custom_call.1} parent=11 // pred_check_branch
          %237 = sbr.rel (%p235) target = $region20
        $region19: #{tpu_custom_call.1} parent=11 // pred_region
          _
        $region20: #{tpu_custom_call.1} parent=11 // pred_fallthru
          _
      $region12: #{tpu_custom_call.1} parent=5 // pred_fallthru
        _
      %p238 = scmp.lt.s32.totalorder %s17, 2
      // Predicated region
      $region21: #{tpu_custom_call.1} parent=5 // pred_check
        %p239 = pneg %p238
      $region22: #{tpu_custom_call.1} parent=5 // pred_check_branch
        %241 = sbr.rel (%p239) target = $region24
      $region23: #{tpu_custom_call.1} parent=5 // pred_region
        // Predicated region
        $region25: #{tpu_custom_call.1} parent=23 // pred_check
          %p242 = pneg %p93
        $region26: #{tpu_custom_call.1} parent=23 // pred_check_branch
          %244 = sbr.rel (%p242) target = $region28
        $region27: #{tpu_custom_call.1} parent=23 // pred_region
          %s245 = smul.u32 2, %s25
          %p246 = scmp.lt.s32.totalorder %s24, 1
          %s247 = scalar_select %p246, %s24, 1
          %p248 = scmp.lt.s32.totalorder %s245, 1
          %s249 = scalar_select %p248, %s245, 1
          %s250 = smul.addr %s247, 4
          %s251 = sadd.s32 %s249, %s250
          %s252 = smul.addr %s251, 8
          %s253 = scalar_lea.vmem %s2, %s252
          %s254 = smul.u32 2, %s25
        $region28: #{tpu_custom_call.1} parent=23 // pred_fallthru
          _
        // Predicated region
        $region29: #{tpu_custom_call.1} parent=23 // pred_check
          %p255 = pneg %p121
        $region30: #{tpu_custom_call.1} parent=23 // pred_check_branch
          %257 = sbr.rel (%p255) target = $region32
        $region31: #{tpu_custom_call.1} parent=23 // pred_region
          %s258 = sadd.s32 %s24, %s25
          %p259 = scmp.lt.s32.totalorder %s258, 1
          %s260 = scalar_select %p259, %s258, 1
          %s261 = smul.addr %s260, 18
          %s262 = scalar_lea.vmem %s3, %s261
          %s263 = sadd.s32 %s24, %s25
        $region32: #{tpu_custom_call.1} parent=23 // pred_fallthru
          _
        // Predicated region
        $region33: #{tpu_custom_call.1} parent=23 // pred_check
          %p264 = pneg %p149
        $region34: #{tpu_custom_call.1} parent=23 // pred_check_branch
          %266 = sbr.rel (%p264) target = $region36
        $region35: #{tpu_custom_call.1} parent=23 // pred_region
          %s267 = sadd.s32 %s24, %s25
          %p268 = scmp.lt.s32.totalorder %s267, 1
          %s269 = scalar_select %p268, %s267, 1
          %s270 = smul.addr %s269, 18
          %s271 = scalar_lea.vmem %s4, %s270
          %s272 = sadd.s32 %s24, %s25
        $region36: #{tpu_custom_call.1} parent=23 // pred_fallthru
          _
        // Predicated region
        $region37: #{tpu_custom_call.1} parent=23 // pred_check
          %p273 = pneg %p175
        $region38: #{tpu_custom_call.1} parent=23 // pred_check_branch
          %275 = sbr.rel (%p273) target = $region40
        $region39: #{tpu_custom_call.1} parent=23 // pred_region
          %p276 = scmp.lt.s32.totalorder %s24, 1
          %s277 = scalar_select %p276, %s24, 1
          %s278 = smul.addr %s277, 2
          %s279 = smul.addr %s278, 8
          %s280 = scalar_lea.vmem %s5, %s279
        $region40: #{tpu_custom_call.1} parent=23 // pred_fallthru
          _
      $region24: #{tpu_custom_call.1} parent=5 // pred_fallthru
        _
      %p281 = scmp.le.s32.totalorder 1, %s17
      %p282 = scmp.lt.s32.totalorder %s17, 3
      %p283 = pnand %p281, %p282
      %p284 = pneg %p283
      // Predicated region
      $region41: #{tpu_custom_call.1} parent=5 // pred_check
        _
      $region42: #{tpu_custom_call.1} parent=5 // pred_check_branch
        %286 = sbr.rel (%p283) target = $region44
      $region43: #{tpu_custom_call.1} parent=5 // pred_region
        %s287 = ssub.s32 %s17, 1
        // Predicated region
        $region45: #{tpu_custom_call.1} parent=43 // pred_check
          %p288 = pneg %p50
        $region46: #{tpu_custom_call.1} parent=43 // pred_check_branch
          %290 = sbr.rel (%p288) target = $region48
        $region47: #{tpu_custom_call.1} parent=43 // pred_region
          %291 = dma.done [#allocation5], 16
        $region48: #{tpu_custom_call.1} parent=43 // pred_fallthru
          _
        %292 = sfence
        %p293 = pneg %p50
        %p294 = pneg %p47
        %p295 = pneg %p71
        %p296 = pneg %p68
        %s297 = smul.u32 2, %s27
        %p298 = scmp.lt.s32.totalorder %s26, 1
        %s299 = scalar_select %p298, %s26, 1
        %p300 = scmp.lt.s32.totalorder %s297, 1
        %s301 = scalar_select %p300, %s297, 1
        %s302 = smul.addr %s299, 4
        %s303 = sadd.s32 %s301, %s302
        %s304 = smul.addr %s303, 8
        %s305 = scalar_lea.vmem %s2, %s304
        %p306 = pneg %p99
        %p307 = pneg %p96
        %s308 = sadd.s32 %s26, %s27
        %p309 = scmp.lt.s32.totalorder %s308, 1
        %s310 = scalar_select %p309, %s308, 1
        %s311 = smul.addr %s310, 18
        %s312 = scalar_lea.vmem %s3, %s311
        %p313 = pneg %p127
        %p314 = pneg %p124
        %s315 = sadd.s32 %s26, %s27
        %p316 = scmp.lt.s32.totalorder %s315, 1
        %s317 = scalar_select %p316, %s315, 1
        %s318 = smul.addr %s317, 18
        %s319 = scalar_lea.vmem %s4, %s318
        %p320 = pneg %p155
        %p321 = pneg %p152
        %p322 = scmp.lt.s32.totalorder %s26, 1
        %s323 = scalar_select %p322, %s26, 1
        %s324 = smul.addr %s323, 2
        %s325 = smul.addr %s324, 8
        %s326 = scalar_lea.vmem %s5, %s325
        %p327 = pneg %p181
        %p328 = pneg %p178
        %p329 = pneg %p209
        %p330 = pneg %p206
        %s331 = sand.u32 %s196, 1
        %s332 = scalar_lea.sflag [#allocation4], %s331
        %s333 = sand.u32 %s196, 1
        %s334 = smul.addr %s333, 2
        %s335 = scalar_lea.vmem [#allocation6], %s334
        %s336 = smul.u32 2, %s27
        %p337 = scmp.lt.s32.totalorder %s26, 1
        %s338 = scalar_select %p337, %s26, 1
        %p339 = scmp.lt.s32.totalorder %s336, 1
        %s340 = scalar_select %p339, %s336, 1
        %s341 = smul.addr %s338, 4
        %s342 = sadd.s32 %s340, %s341
        %s343 = smul.addr %s342, 8
        %s344 = scalar_lea.vmem %s2, %s343
        %s345 = smul.u32 2, %s27
        %s346 = sadd.s32 %s26, %s27
        %p347 = scmp.lt.s32.totalorder %s346, 1
        %s348 = scalar_select %p347, %s346, 1
        %s349 = smul.addr %s348, 18
        %s350 = scalar_lea.vmem %s3, %s349
        %s351 = sadd.s32 %s26, %s27
        %s352 = sadd.s32 %s26, %s27
        %p353 = scmp.lt.s32.totalorder %s352, 1
        %s354 = scalar_select %p353, %s352, 1
        %s355 = smul.addr %s354, 18
        %s356 = scalar_lea.vmem %s4, %s355
        %s357 = sadd.s32 %s26, %s27
        %p358 = scmp.lt.s32.totalorder %s26, 1
        %s359 = scalar_select %p358, %s26, 1
        %s360 = smul.addr %s359, 2
        %s361 = smul.addr %s360, 8
        %s362 = scalar_lea.vmem %s5, %s361
        %s363 = smul.u32 2, %s27
        %v364 = vld [vmem:[%s344] sm:$0xff]
        %v365 = vld [vmem:[%s344 + $0x8] sm:$0xff]
        %v366 = vld [vmem:[%s344 + $0x10] sm:$0x1]
        %v367 = vld [vmem:[%s344 + $0x18] sm:$0x1]
        %v368 = vld [vmem:[%s350] sm:$0xff]
        %v369 = vld [vmem:[%s350 + $0x8] sm:$0xff]
        %v370 = vld [vmem:[%s350 + $0x10] sm:$0x3]
        %v371 = vld [vmem:[%s356] sm:$0xff]
        %v372 = vld [vmem:[%s356 + $0x8] sm:$0xff]
        %v373 = vld [vmem:[%s356 + $0x10] sm:$0x3]
        %v374 = vld [vmem:[%s362] sm:$0xff]
        %v375 = vld [vmem:[%s362 + $0x8] sm:$0xff]
        %vm376 = vcmask 1040384
        %v377 = vsel %vm376, %v366, 0.0
        %v378 = vadd.f32 %v364, %v377
        %v379 = vrot.slane %v378, 4
        %v380 = vadd.f32 %v378, %v379
        %v381 = vrot.slane %v380, 2
        %v382 = vadd.f32 %v380, %v381
        %v383 = vrot.slane %v382, 1
        %v384 = vadd.f32 %v382, %v383
        %v385 = vsel %vm376, %v367, 0.0
        %v386 = vadd.f32 %v365, %v385
        %v387 = vrot.slane %v386, 4
        %v388 = vadd.f32 %v386, %v387
        %v389 = vrot.slane %v388, 2
        %v390 = vadd.f32 %v388, %v389
        %v391 = vrot.slane %v390, 1
        %v392 = vadd.f32 %v390, %v391
        %v393 = vrcp.pop 9.0
        %v394 = vmul.f32 %v384, %v393
        %v395 = vmul.f32 %v392, %v393
        %v396 = vsub.f32 %v364, %v394
        %v397 = vsub.f32 %v365, %v395
        %v398 = vsub.f32 %v366, %v394
        %v399 = vsub.f32 %v367, %v395
        %v400 = vlaneseq
        %v401 = vshrl.u32 %v400, 7
        %v402 = vadd.s32 %v401, 8
        %v403 = vcvt.s32.f32 %v401
        %v404 = vcvt.s32.f32 %v402
        %v408 = vlaneseq
        %v409 = vshrl.u32 %v408, 7
        %v410 = vsub.s32 0, %v409
        %v411 = vrot.slane %v368, %v410
        %v412 = vlaneseq
        %v413 = vshrl.u32 %v412, 7
        %v414 = vsub.s32 1, %v413
        %v415 = vrot.slane %v368, %v414
        %v416 = vlaneseq
        %v417 = vshrl.u32 %v416, 7
        %v418 = vsub.s32 2, %v417
        %v419 = vrot.slane %v368, %v418
        %v420 = vlaneseq
        %v421 = vshrl.u32 %v420, 7
        %v422 = vsub.s32 3, %v421
        %v423 = vrot.slane %v368, %v422
        %v424 = vlaneseq
        %v425 = vshrl.u32 %v424, 7
        %v426 = vsub.s32 4, %v425
        %v427 = vrot.slane %v368, %v426
        %v428 = vlaneseq
        %v429 = vshrl.u32 %v428, 7
        %v430 = vsub.s32 5, %v429
        %v431 = vrot.slane %v368, %v430
        %v432 = vlaneseq
        %v433 = vshrl.u32 %v432, 7
        %v434 = vsub.s32 6, %v433
        %v435 = vrot.slane %v368, %v434
        %v436 = vlaneseq
        %v437 = vshrl.u32 %v436, 7
        %v438 = vsub.s32 7, %v437
        %v439 = vrot.slane %v368, %v438
        %v440 = vlaneseq
        %v441 = vshrl.u32 %v440, 7
        %v442 = vsub.s32 0, %v441
        %v443 = vrot.slane %v369, %v442
        %v444 = vlaneseq
        %v445 = vshrl.u32 %v444, 7
        %v446 = vsub.s32 1, %v445
        %v447 = vrot.slane %v369, %v446
        %v448 = vlaneseq
        %v449 = vshrl.u32 %v448, 7
        %v450 = vsub.s32 2, %v449
        %v451 = vrot.slane %v369, %v450
        %v452 = vlaneseq
        %v453 = vshrl.u32 %v452, 7
        %v454 = vsub.s32 3, %v453
        %v455 = vrot.slane %v369, %v454
        %v456 = vlaneseq
        %v457 = vshrl.u32 %v456, 7
        %v458 = vsub.s32 4, %v457
        %v459 = vrot.slane %v369, %v458
        %v460 = vlaneseq
        %v461 = vshrl.u32 %v460, 7
        %v462 = vsub.s32 5, %v461
        %v463 = vrot.slane %v369, %v462
        %v464 = vlaneseq
        %v465 = vshrl.u32 %v464, 7
        %v466 = vsub.s32 6, %v465
        %v467 = vrot.slane %v369, %v466
        %v468 = vlaneseq
        %v469 = vshrl.u32 %v468, 7
        %v470 = vsub.s32 7, %v469
        %v471 = vrot.slane %v369, %v470
        %v472 = vlaneseq
        %v473 = vshrl.u32 %v472, 7
        %v474 = vsub.s32 0, %v473
        %v475 = vrot.slane %v370, %v474
        %v476 = vlaneseq
        %v477 = vshrl.u32 %v476, 7
        %v478 = vsub.s32 1, %v477
        %v479 = vrot.slane %v370, %v478
        %v498 = vsub.f32 %v403, %v411
        %v499 = vsub.f32 %v403, %v415
        %v500 = vsub.f32 %v403, %v419
        %v501 = vsub.f32 %v403, %v423
        %v502 = vsub.f32 %v403, %v427
        %v503 = vsub.f32 %v403, %v431
        %v504 = vsub.f32 %v403, %v435
        %v505 = vsub.f32 %v403, %v439
        %v506 = vsub.f32 %v403, %v443
        %v507 = vsub.f32 %v403, %v447
        %v508 = vsub.f32 %v403, %v451
        %v509 = vsub.f32 %v403, %v455
        %v510 = vsub.f32 %v403, %v459
        %v511 = vsub.f32 %v403, %v463
        %v512 = vsub.f32 %v403, %v467
        %v513 = vsub.f32 %v403, %v471
        %v514 = vsub.f32 %v403, %v475
        %v515 = vsub.f32 %v403, %v479
        %v516 = vsub.f32 %v404, %v411
        %v517 = vsub.f32 %v404, %v415
        %v518 = vsub.f32 %v404, %v419
        %v519 = vsub.f32 %v404, %v423
        %v520 = vsub.f32 %v404, %v427
        %v521 = vsub.f32 %v404, %v431
        %v522 = vsub.f32 %v404, %v435
        %v523 = vsub.f32 %v404, %v439
        %v524 = vsub.f32 %v404, %v443
        %v525 = vsub.f32 %v404, %v447
        %v526 = vsub.f32 %v404, %v451
        %v527 = vsub.f32 %v404, %v455
        %v528 = vsub.f32 %v404, %v459
        %v529 = vsub.f32 %v404, %v463
        %v530 = vsub.f32 %v404, %v467
        %v531 = vsub.f32 %v404, %v471
        %v532 = vsub.f32 %v404, %v475
        %v533 = vsub.f32 %v404, %v479
        %v534 = vand.u32 2147483647, %v498
        %v535 = vand.u32 2147483647, %v499
        %v536 = vand.u32 2147483647, %v500
        %v537 = vand.u32 2147483647, %v501
        %v538 = vand.u32 2147483647, %v502
        %v539 = vand.u32 2147483647, %v503
        %v540 = vand.u32 2147483647, %v504
        %v541 = vand.u32 2147483647, %v505
        %v542 = vand.u32 2147483647, %v506
        %v543 = vand.u32 2147483647, %v507
        %v544 = vand.u32 2147483647, %v508
        %v545 = vand.u32 2147483647, %v509
        %v546 = vand.u32 2147483647, %v510
        %v547 = vand.u32 2147483647, %v511
        %v548 = vand.u32 2147483647, %v512
        %v549 = vand.u32 2147483647, %v513
        %v550 = vand.u32 2147483647, %v514
        %v551 = vand.u32 2147483647, %v515
        %v552 = vand.u32 2147483647, %v516
        %v553 = vand.u32 2147483647, %v517
        %v554 = vand.u32 2147483647, %v518
        %v555 = vand.u32 2147483647, %v519
        %v556 = vand.u32 2147483647, %v520
        %v557 = vand.u32 2147483647, %v521
        %v558 = vand.u32 2147483647, %v522
        %v559 = vand.u32 2147483647, %v523
        %v560 = vand.u32 2147483647, %v524
        %v561 = vand.u32 2147483647, %v525
        %v562 = vand.u32 2147483647, %v526
        %v563 = vand.u32 2147483647, %v527
        %v564 = vand.u32 2147483647, %v528
        %v565 = vand.u32 2147483647, %v529
        %v566 = vand.u32 2147483647, %v530
        %v567 = vand.u32 2147483647, %v531
        %v568 = vand.u32 2147483647, %v532
        %v569 = vand.u32 2147483647, %v533
        %v570 = vsub.f32 1.0, %v534
        %v571 = vsub.f32 1.0, %v535
        %v572 = vsub.f32 1.0, %v536
        %v573 = vsub.f32 1.0, %v537
        %v574 = vsub.f32 1.0, %v538
        %v575 = vsub.f32 1.0, %v539
        %v576 = vsub.f32 1.0, %v540
        %v577 = vsub.f32 1.0, %v541
        %v578 = vsub.f32 1.0, %v542
        %v579 = vsub.f32 1.0, %v543
        %v580 = vsub.f32 1.0, %v544
        %v581 = vsub.f32 1.0, %v545
        %v582 = vsub.f32 1.0, %v546
        %v583 = vsub.f32 1.0, %v547
        %v584 = vsub.f32 1.0, %v548
        %v585 = vsub.f32 1.0, %v549
        %v586 = vsub.f32 1.0, %v550
        %v587 = vsub.f32 1.0, %v551
        %v588 = vsub.f32 1.0, %v552
        %v589 = vsub.f32 1.0, %v553
        %v590 = vsub.f32 1.0, %v554
        %v591 = vsub.f32 1.0, %v555
        %v592 = vsub.f32 1.0, %v556
        %v593 = vsub.f32 1.0, %v557
        %v594 = vsub.f32 1.0, %v558
        %v595 = vsub.f32 1.0, %v559
        %v596 = vsub.f32 1.0, %v560
        %v597 = vsub.f32 1.0, %v561
        %v598 = vsub.f32 1.0, %v562
        %v599 = vsub.f32 1.0, %v563
        %v600 = vsub.f32 1.0, %v564
        %v601 = vsub.f32 1.0, %v565
        %v602 = vsub.f32 1.0, %v566
        %v603 = vsub.f32 1.0, %v567
        %v604 = vsub.f32 1.0, %v568
        %v605 = vsub.f32 1.0, %v569
        %v606 = vmax.f32 %v570, 0.0
        %v607 = vmax.f32 %v571, 0.0
        %v608 = vmax.f32 %v572, 0.0
        %v609 = vmax.f32 %v573, 0.0
        %v610 = vmax.f32 %v574, 0.0
        %v611 = vmax.f32 %v575, 0.0
        %v612 = vmax.f32 %v576, 0.0
        %v613 = vmax.f32 %v577, 0.0
        %v614 = vmax.f32 %v578, 0.0
        %v615 = vmax.f32 %v579, 0.0
        %v616 = vmax.f32 %v580, 0.0
        %v617 = vmax.f32 %v581, 0.0
        %v618 = vmax.f32 %v582, 0.0
        %v619 = vmax.f32 %v583, 0.0
        %v620 = vmax.f32 %v584, 0.0
        %v621 = vmax.f32 %v585, 0.0
        %v622 = vmax.f32 %v586, 0.0
        %v623 = vmax.f32 %v587, 0.0
        %v624 = vmax.f32 %v588, 0.0
        %v625 = vmax.f32 %v589, 0.0
        %v626 = vmax.f32 %v590, 0.0
        %v627 = vmax.f32 %v591, 0.0
        %v628 = vmax.f32 %v592, 0.0
        %v629 = vmax.f32 %v593, 0.0
        %v630 = vmax.f32 %v594, 0.0
        %v631 = vmax.f32 %v595, 0.0
        %v632 = vmax.f32 %v596, 0.0
        %v633 = vmax.f32 %v597, 0.0
        %v634 = vmax.f32 %v598, 0.0
        %v635 = vmax.f32 %v599, 0.0
        %v636 = vmax.f32 %v600, 0.0
        %v637 = vmax.f32 %v601, 0.0
        %v638 = vmax.f32 %v602, 0.0
        %v639 = vmax.f32 %v603, 0.0
        %v640 = vmax.f32 %v604, 0.0
        %v641 = vmax.f32 %v605, 0.0
        %vm642 = vcmask 130048
        %v644 = vsel %vm642, %v374, 0
        %v647 = vsel %vm642, %v375, 0
        %v649 = vand.u32 %v607, 4294901760
        %650 = vmatprep.subr.mxu0 %v649
        %v651 = vand.u32 %v606, 4294901760
        %652 = vmatpush1.msra.mxu0 %v651
        %v653 = vand.u32 %v625, 4294901760
        %654 = vmatprep.subr.mxu0 %v653
        %v655 = vand.u32 %v624, 4294901760
        %656 = vmatpush1.msra.mxu0 %v655
        %657 = vmatprep.subr.mxu0 0.0
        %658 = vmatpush1.msra.mxu0 0.0
        %659 = vmatprep.subr.mxu0 0.0
        %660 = vmatpush1.msra.mxu0 0.0
        %661 = vmatprep.subr.mxu0 0.0
        %662 = vmatpush1.msra.mxu0 0.0
        %663 = vmatprep.subr.mxu0 0.0
        %664 = vmatpush1.msra.mxu0 0.0
        %665 = vmatprep.subr.mxu0 0.0
        %666 = vmatpush1.msra.mxu0 0.0
        %667 = vmatprep.subr.mxu0 0.0
        %668 = vmatpush1.msra.mxu0 0.0
        %669 = vmatprep.subr.mxu0 0.0
        %670 = vmatpush1.msra.mxu0 0.0
        %671 = vmatprep.subr.mxu0 0.0
        %672 = vmatpush1.msra.mxu0 0.0
        %673 = vmatprep.subr.mxu0 0.0
        %674 = vmatpush1.msra.mxu0 0.0
        %675 = vmatprep.subr.mxu0 0.0
        %676 = vmatpush1.msra.mxu0 0.0
        %677 = vmatprep.subr.mxu0 0.0
        %678 = vmatpush1.msra.mxu0 0.0
        %679 = vmatprep.subr.mxu0 0.0
        %680 = vmatpush1.msra.mxu0 0.0
        %681 = vmatprep.subr.mxu0 0.0
        %682 = vmatpush1.msra.mxu0 0.0
        %683 = vmatprep.subr.mxu0 0.0
        %684 = vmatpush1.msra.mxu0 0.0
        %685 = vmatprep.subr.mxu0 0.0
        %686 = vmatpush1.msra.mxu0 0.0
        %687 = vmatprep.subr.mxu0 0.0
        %688 = vmatpush1.msra.mxu0 0.0
        %689 = vmatprep.subr.mxu0 0.0
        %690 = vmatpush1.msra.mxu0 0.0
        %691 = vmatprep.subr.mxu0 0.0
        %692 = vmatpush1.msra.mxu0 0.0
        %693 = vmatprep.subr.mxu0 0.0
        %694 = vmatpush1.msra.mxu0 0.0
        %695 = vmatprep.subr.mxu0 0.0
        %696 = vmatpush1.msra.mxu0 0.0
        %697 = vmatprep.subr.mxu0 0.0
        %698 = vmatpush1.msra.mxu0 0.0
        %699 = vmatprep.subr.mxu0 0.0
        %700 = vmatpush1.msra.mxu0 0.0
        %701 = vmatprep.subr.mxu0 0.0
        %702 = vmatpush1.msra.mxu0 0.0
        %703 = vmatprep.subr.mxu0 0.0
        %704 = vmatpush1.msra.mxu0 0.0
        %705 = vmatprep.subr.mxu0 0.0
        %706 = vmatpush1.msra.mxu0 0.0
        %707 = vmatprep.subr.mxu0 0.0
        %708 = vmatpush1.msra.mxu0 0.0
        %709 = vmatprep.subr.mxu0 0.0
        %710 = vmatpush1.msra.mxu0 0.0
        %711 = vmatprep.subr.mxu0 0.0
        %712 = vmatpush1.msra.mxu0 0.0
        %713 = vmatprep.subr.mxu0 0.0
        %714 = vmatpush1.msra.mxu0 0.0
        %715 = vmatprep.subr.mxu0 0.0
        %716 = vmatpush1.msra.mxu0 0.0
        %717 = vmatprep.mubr.f32.mxu0 0.0
        %v718 = vand.u32 %v644, 4294901760
        %v719 = vsub.f32 %v644, %v718
        %v720 = vand.u32 %v719, 4294901760
        %v721 = vsub.f32 %v719, %v720
        %v722 = vand.u32 %v721, 4294901760
        %723 = vmatmul.mubr.f32.gmra.mrb[0].mxu0 %v722
        %v724 = vpop.f32.mrb[0].mxu0
        %v725 = vadd.f32 0.0, %v724
        %v726 = vpop.f32.mrb[0].mxu0
        %v727 = vadd.f32 0.0, %v726
        %728 = vmatprep.mubr.f32.mxu0 0.0
        %v729 = vand.u32 %v647, 4294901760
        %v730 = vsub.f32 %v647, %v729
        %v731 = vand.u32 %v730, 4294901760
        %v732 = vsub.f32 %v730, %v731
        %v733 = vand.u32 %v732, 4294901760
        %734 = vmatmul.mubr.f32.gmra.mrb[0].mxu0 %v733
        %v735 = vpop.f32.mrb[0].mxu0
        %v736 = vadd.f32 0.0, %v735
        %v737 = vpop.f32.mrb[0].mxu0
        %v738 = vadd.f32 0.0, %v737
        %739 = vdwg.mxu0
        %v740 = vand.u32 %v607, 4294901760
        %v741 = vsub.f32 %v607, %v740
        %v742 = vand.u32 %v741, 4294901760
        %v743 = vsub.f32 %v741, %v742
        %v744 = vand.u32 %v743, 4294901760
        %745 = vmatprep.subr.mxu0 %v744
        %v746 = vand.u32 %v606, 4294901760
        %v747 = vsub.f32 %v606, %v746
        %v748 = vand.u32 %v747, 4294901760
        %v749 = vsub.f32 %v747, %v748
        %v750 = vand.u32 %v749, 4294901760
        %751 = vmatpush1.msra.mxu0 %v750
        %v752 = vand.u32 %v625, 4294901760
        %v753 = vsub.f32 %v625, %v752
        %v754 = vand.u32 %v753, 4294901760
        %v755 = vsub.f32 %v753, %v754
        %v756 = vand.u32 %v755, 4294901760
        %757 = vmatprep.subr.mxu0 %v756
        %v758 = vand.u32 %v624, 4294901760
        %v759 = vsub.f32 %v624, %v758
        %v760 = vand.u32 %v759, 4294901760
        %v761 = vsub.f32 %v759, %v760
        %v762 = vand.u32 %v761, 4294901760
        %763 = vmatpush1.msra.mxu0 %v762
        %764 = vmatprep.subr.mxu0 0.0
        %765 = vmatpush1.msra.mxu0 0.0
        %766 = vmatprep.subr.mxu0 0.0
        %767 = vmatpush1.msra.mxu0 0.0
        %768 = vmatprep.subr.mxu0 0.0
        %769 = vmatpush1.msra.mxu0 0.0
        %770 = vmatprep.subr.mxu0 0.0
        %771 = vmatpush1.msra.mxu0 0.0
        %772 = vmatprep.subr.mxu0 0.0
        %773 = vmatpush1.msra.mxu0 0.0
        %774 = vmatprep.subr.mxu0 0.0
        %775 = vmatpush1.msra.mxu0 0.0
        %776 = vmatprep.subr.mxu0 0.0
        %777 = vmatpush1.msra.mxu0 0.0
        %778 = vmatprep.subr.mxu0 0.0
        %779 = vmatpush1.msra.mxu0 0.0
        %780 = vmatprep.subr.mxu0 0.0
        %781 = vmatpush1.msra.mxu0 0.0
        %782 = vmatprep.subr.mxu0 0.0
        %783 = vmatpush1.msra.mxu0 0.0
        %784 = vmatprep.subr.mxu0 0.0
        %785 = vmatpush1.msra.mxu0 0.0
        %786 = vmatprep.subr.mxu0 0.0
        %787 = vmatpush1.msra.mxu0 0.0
        %788 = vmatprep.subr.mxu0 0.0
        %789 = vmatpush1.msra.mxu0 0.0
        %790 = vmatprep.subr.mxu0 0.0
        %791 = vmatpush1.msra.mxu0 0.0
        %792 = vmatprep.subr.mxu0 0.0
        %793 = vmatpush1.msra.mxu0 0.0
        %794 = vmatprep.subr.mxu0 0.0
        %795 = vmatpush1.msra.mxu0 0.0
        %796 = vmatprep.subr.mxu0 0.0
        %797 = vmatpush1.msra.mxu0 0.0
        %798 = vmatprep.subr.mxu0 0.0
        %799 = vmatpush1.msra.mxu0 0.0
        %800 = vmatprep.subr.mxu0 0.0
        %801 = vmatpush1.msra.mxu0 0.0
        %802 = vmatprep.subr.mxu0 0.0
        %803 = vmatpush1.msra.mxu0 0.0
        %804 = vmatprep.subr.mxu0 0.0
        %805 = vmatpush1.msra.mxu0 0.0
        %806 = vmatprep.subr.mxu0 0.0
        %807 = vmatpush1.msra.mxu0 0.0
        %808 = vmatprep.subr.mxu0 0.0
        %809 = vmatpush1.msra.mxu0 0.0
        %810 = vmatprep.subr.mxu0 0.0
        %811 = vmatpush1.msra.mxu0 0.0
        %812 = vmatprep.subr.mxu0 0.0
        %813 = vmatpush1.msra.mxu0 0.0
        %814 = vmatprep.subr.mxu0 0.0
        %815 = vmatpush1.msra.mxu0 0.0
        %816 = vmatprep.subr.mxu0 0.0
        %817 = vmatpush1.msra.mxu0 0.0
        %818 = vmatprep.subr.mxu0 0.0
        %819 = vmatpush1.msra.mxu0 0.0
        %820 = vmatprep.subr.mxu0 0.0
        %821 = vmatpush1.msra.mxu0 0.0
        %822 = vmatprep.subr.mxu0 0.0
        %823 = vmatpush1.msra.mxu0 0.0
        %824 = vmatprep.mubr.f32.mxu0 0.0
        %v825 = vand.u32 %v644, 4294901760
        %826 = vmatmul.mubr.f32.gmra.mrb[0].mxu0 %v825
        %v827 = vpop.f32.mrb[0].mxu0
        %v828 = vadd.f32 %v725, %v827
        %v829 = vpop.f32.mrb[0].mxu0
        %v830 = vadd.f32 %v727, %v829
        %831 = vmatprep.mubr.f32.mxu0 0.0
        %v832 = vand.u32 %v647, 4294901760
        %833 = vmatmul.mubr.f32.gmra.mrb[0].mxu0 %v832
        %v834 = vpop.f32.mrb[0].mxu0
        %v835 = vadd.f32 %v736, %v834
        %v836 = vpop.f32.mrb[0].mxu0
        %v837 = vadd.f32 %v738, %v836
        %838 = vdwg.mxu0
        %v839 = vand.u32 %v607, 4294901760
        %v840 = vsub.f32 %v607, %v839
        %841 = vmatprep.subr.mxu0 %v840
        %v842 = vand.u32 %v606, 4294901760
        %v843 = vsub.f32 %v606, %v842
        %844 = vmatpush1.msra.mxu0 %v843
        %v845 = vand.u32 %v625, 4294901760
        %v846 = vsub.f32 %v625, %v845
        %847 = vmatprep.subr.mxu0 %v846
        %v848 = vand.u32 %v624, 4294901760
        %v849 = vsub.f32 %v624, %v848
        %850 = vmatpush1.msra.mxu0 %v849
        %851 = vmatprep.subr.mxu0 0.0
        %852 = vmatpush1.msra.mxu0 0.0
        %853 = vmatprep.subr.mxu0 0.0
        %854 = vmatpush1.msra.mxu0 0.0
        %855 = vmatprep.subr.mxu0 0.0
        %856 = vmatpush1.msra.mxu0 0.0
        %857 = vmatprep.subr.mxu0 0.0
        %858 = vmatpush1.msra.mxu0 0.0
        %859 = vmatprep.subr.mxu0 0.0
        %860 = vmatpush1.msra.mxu0 0.0
        %861 = vmatprep.subr.mxu0 0.0
        %862 = vmatpush1.msra.mxu0 0.0
        %863 = vmatprep.subr.mxu0 0.0
        %864 = vmatpush1.msra.mxu0 0.0
        %865 = vmatprep.subr.mxu0 0.0
        %866 = vmatpush1.msra.mxu0 0.0
        %867 = vmatprep.subr.mxu0 0.0
        %868 = vmatpush1.msra.mxu0 0.0
        %869 = vmatprep.subr.mxu0 0.0
        %870 = vmatpush1.msra.mxu0 0.0
        %871 = vmatprep.subr.mxu0 0.0
        %872 = vmatpush1.msra.mxu0 0.0
        %873 = vmatprep.subr.mxu0 0.0
        %874 = vmatpush1.msra.mxu0 0.0
        %875 = vmatprep.subr.mxu0 0.0
        %876 = vmatpush1.msra.mxu0 0.0
        %877 = vmatprep.subr.mxu0 0.0
        %878 = vmatpush1.msra.mxu0 0.0
        %879 = vmatprep.subr.mxu0 0.0
        %880 = vmatpush1.msra.mxu0 0.0
        %881 = vmatprep.subr.mxu0 0.0
        %882 = vmatpush1.msra.mxu0 0.0
        %883 = vmatprep.subr.mxu0 0.0
        %884 = vmatpush1.msra.mxu0 0.0
        %885 = vmatprep.subr.mxu0 0.0
        %886 = vmatpush1.msra.mxu0 0.0
        %887 = vmatprep.subr.mxu0 0.0
        %888 = vmatpush1.msra.mxu0 0.0
        %889 = vmatprep.subr.mxu0 0.0
        %890 = vmatpush1.msra.mxu0 0.0
        %891 = vmatprep.subr.mxu0 0.0
        %892 = vmatpush1.msra.mxu0 0.0
        %893 = vmatprep.subr.mxu0 0.0
        %894 = vmatpush1.msra.mxu0 0.0
        %895 = vmatprep.subr.mxu0 0.0
        %896 = vmatpush1.msra.mxu0 0.0
        %897 = vmatprep.subr.mxu0 0.0
        %898 = vmatpush1.msra.mxu0 0.0
        %899 = vmatprep.subr.mxu0 0.0
        %900 = vmatpush1.msra.mxu0 0.0
        %901 = vmatprep.subr.mxu0 0.0
        %902 = vmatpush1.msra.mxu0 0.0
        %903 = vmatprep.subr.mxu0 0.0
        %904 = vmatpush1.msra.mxu0 0.0
        %905 = vmatprep.subr.mxu0 0.0
        %906 = vmatpush1.msra.mxu0 0.0
        %907 = vmatprep.subr.mxu0 0.0
        %908 = vmatpush1.msra.mxu0 0.0
        %909 = vmatprep.subr.mxu0 0.0
        %910 = vmatpush1.msra.mxu0 0.0
        %911 = vmatprep.mubr.f32.mxu0 0.0
        %v912 = vand.u32 %v644, 4294901760
        %v913 = vsub.f32 %v644, %v912
        %914 = vmatmul.mubr.f32.gmra.mrb[0].mxu0 %v913
        %v915 = vpop.f32.mrb[0].mxu0
        %v916 = vadd.f32 %v828, %v915
        %v917 = vpop.f32.mrb[0].mxu0
        %v918 = vadd.f32 %v830, %v917
        %919 = vmatprep.mubr.f32.mxu0 0.0
        %v920 = vand.u32 %v647, 4294901760
        %v921 = vsub.f32 %v647, %v920
        %922 = vmatmul.mubr.f32.gmra.mrb[0].mxu0 %v921
        %v923 = vpop.f32.mrb[0].mxu0
        %v924 = vadd.f32 %v835, %v923
        %v925 = vpop.f32.mrb[0].mxu0
        %v926 = vadd.f32 %v837, %v925
        %927 = vdwg.mxu0
        %v928 = vand.u32 %v607, 4294901760
        %929 = vmatprep.subr.mxu0 %v928
        %v930 = vand.u32 %v606, 4294901760
        %931 = vmatpush1.msra.mxu0 %v930
        %v932 = vand.u32 %v625, 4294901760
        %933 = vmatprep.subr.mxu0 %v932
        %v934 = vand.u32 %v624, 4294901760
        %935 = vmatpush1.msra.mxu0 %v934
        %936 = vmatprep.subr.mxu0 0.0
        %937 = vmatpush1.msra.mxu0 0.0
        %938 = vmatprep.subr.mxu0 0.0
        %939 = vmatpush1.msra.mxu0 0.0
        %940 = vmatprep.subr.mxu0 0.0
        %941 = vmatpush1.msra.mxu0 0.0
        %942 = vmatprep.subr.mxu0 0.0
        %943 = vmatpush1.msra.mxu0 0.0
        %944 = vmatprep.subr.mxu0 0.0
        %945 = vmatpush1.msra.mxu0 0.0
        %946 = vmatprep.subr.mxu0 0.0
        %947 = vmatpush1.msra.mxu0 0.0
        %948 = vmatprep.subr.mxu0 0.0
        %949 = vmatpush1.msra.mxu0 0.0
        %950 = vmatprep.subr.mxu0 0.0
        %951 = vmatpush1.msra.mxu0 0.0
        %952 = vmatprep.subr.mxu0 0.0
        %953 = vmatpush1.msra.mxu0 0.0
        %954 = vmatprep.subr.mxu0 0.0
        %955 = vmatpush1.msra.mxu0 0.0
        %956 = vmatprep.subr.mxu0 0.0
        %957 = vmatpush1.msra.mxu0 0.0
        %958 = vmatprep.subr.mxu0 0.0
        %959 = vmatpush1.msra.mxu0 0.0
        %960 = vmatprep.subr.mxu0 0.0
        %961 = vmatpush1.msra.mxu0 0.0
        %962 = vmatprep.subr.mxu0 0.0
        %963 = vmatpush1.msra.mxu0 0.0
        %964 = vmatprep.subr.mxu0 0.0
        %965 = vmatpush1.msra.mxu0 0.0
        %966 = vmatprep.subr.mxu0 0.0
        %967 = vmatpush1.msra.mxu0 0.0
        %968 = vmatprep.subr.mxu0 0.0
        %969 = vmatpush1.msra.mxu0 0.0
        %970 = vmatprep.subr.mxu0 0.0
        %971 = vmatpush1.msra.mxu0 0.0
        %972 = vmatprep.subr.mxu0 0.0
        %973 = vmatpush1.msra.mxu0 0.0
        %974 = vmatprep.subr.mxu0 0.0
        %975 = vmatpush1.msra.mxu0 0.0
        %976 = vmatprep.subr.mxu0 0.0
        %977 = vmatpush1.msra.mxu0 0.0
        %978 = vmatprep.subr.mxu0 0.0
        %979 = vmatpush1.msra.mxu0 0.0
        %980 = vmatprep.subr.mxu0 0.0
        %981 = vmatpush1.msra.mxu0 0.0
        %982 = vmatprep.subr.mxu0 0.0
        %983 = vmatpush1.msra.mxu0 0.0
        %984 = vmatprep.subr.mxu0 0.0
        %985 = vmatpush1.msra.mxu0 0.0
        %986 = vmatprep.subr.mxu0 0.0
        %987 = vmatpush1.msra.mxu0 0.0
        %988 = vmatprep.subr.mxu0 0.0
        %989 = vmatpush1.msra.mxu0 0.0
        %990 = vmatprep.subr.mxu0 0.0
        %991 = vmatpush1.msra.mxu0 0.0
        %992 = vmatprep.subr.mxu0 0.0
        %993 = vmatpush1.msra.mxu0 0.0
        %994 = vmatprep.subr.mxu0 0.0
        %995 = vmatpush1.msra.mxu0 0.0
        %996 = vmatprep.mubr.f32.mxu0 0.0
        %v997 = vand.u32 %v644, 4294901760
        %v998 = vsub.f32 %v644, %v997
        %v999 = vand.u32 %v998, 4294901760
        %1000 = vmatmul.mubr.f32.gmra.mrb[0].mxu0 %v999
        %v1001 = vpop.f32.mrb[0].mxu0
        %v1002 = vadd.f32 %v916, %v1001
        %v1003 = vpop.f32.mrb[0].mxu0
        %v1004 = vadd.f32 %v918, %v1003
        %1005 = vmatprep.mubr.f32.mxu0 0.0
        %v1006 = vand.u32 %v647, 4294901760
        %v1007 = vsub.f32 %v647, %v1006
        %v1008 = vand.u32 %v1007, 4294901760
        %1009 = vmatmul.mubr.f32.gmra.mrb[0].mxu0 %v1008
        %v1010 = vpop.f32.mrb[0].mxu0
        %v1011 = vadd.f32 %v924, %v1010
        %v1012 = vpop.f32.mrb[0].mxu0
        %v1013 = vadd.f32 %v926, %v1012
        %1014 = vdwg.mxu0
        %v1015 = vand.u32 %v607, 4294901760
        %v1016 = vsub.f32 %v607, %v1015
        %v1017 = vand.u32 %v1016, 4294901760
        %1018 = vmatprep.subr.mxu0 %v1017
        %v1019 = vand.u32 %v606, 4294901760
        %v1020 = vsub.f32 %v606, %v1019
        %v1021 = vand.u32 %v1020, 4294901760
        %1022 = vmatpush1.msra.mxu0 %v1021
        %v1023 = vand.u32 %v625, 4294901760
        %v1024 = vsub.f32 %v625, %v1023
        %v1025 = vand.u32 %v1024, 4294901760
        %1026 = vmatprep.subr.mxu0 %v1025
        %v1027 = vand.u32 %v624, 4294901760
        %v1028 = vsub.f32 %v624, %v1027
        %v1029 = vand.u32 %v1028, 4294901760
        %1030 = vmatpush1.msra.mxu0 %v1029
        %1031 = vmatprep.subr.mxu0 0.0
        %1032 = vmatpush1.msra.mxu0 0.0
        %1033 = vmatprep.subr.mxu0 0.0
        %1034 = vmatpush1.msra.mxu0 0.0
        %1035 = vmatprep.subr.mxu0 0.0
        %1036 = vmatpush1.msra.mxu0 0.0
        %1037 = vmatprep.subr.mxu0 0.0
        %1038 = vmatpush1.msra.mxu0 0.0
        %1039 = vmatprep.subr.mxu0 0.0
        %1040 = vmatpush1.msra.mxu0 0.0
        %1041 = vmatprep.subr.mxu0 0.0
        %1042 = vmatpush1.msra.mxu0 0.0
        %1043 = vmatprep.subr.mxu0 0.0
        %1044 = vmatpush1.msra.mxu0 0.0
        %1045 = vmatprep.subr.mxu0 0.0
        %1046 = vmatpush1.msra.mxu0 0.0
        %1047 = vmatprep.subr.mxu0 0.0
        %1048 = vmatpush1.msra.mxu0 0.0
        %1049 = vmatprep.subr.mxu0 0.0
        %1050 = vmatpush1.msra.mxu0 0.0
        %1051 = vmatprep.subr.mxu0 0.0
        %1052 = vmatpush1.msra.mxu0 0.0
        %1053 = vmatprep.subr.mxu0 0.0
        %1054 = vmatpush1.msra.mxu0 0.0
        %1055 = vmatprep.subr.mxu0 0.0
        %1056 = vmatpush1.msra.mxu0 0.0
        %1057 = vmatprep.subr.mxu0 0.0
        %1058 = vmatpush1.msra.mxu0 0.0
        %1059 = vmatprep.subr.mxu0 0.0
        %1060 = vmatpush1.msra.mxu0 0.0
        %1061 = vmatprep.subr.mxu0 0.0
        %1062 = vmatpush1.msra.mxu0 0.0
        %1063 = vmatprep.subr.mxu0 0.0
        %1064 = vmatpush1.msra.mxu0 0.0
        %1065 = vmatprep.subr.mxu0 0.0
        %1066 = vmatpush1.msra.mxu0 0.0
        %1067 = vmatprep.subr.mxu0 0.0
        %1068 = vmatpush1.msra.mxu0 0.0
        %1069 = vmatprep.subr.mxu0 0.0
        %1070 = vmatpush1.msra.mxu0 0.0
        %1071 = vmatprep.subr.mxu0 0.0
        %1072 = vmatpush1.msra.mxu0 0.0
        %1073 = vmatprep.subr.mxu0 0.0
        %1074 = vmatpush1.msra.mxu0 0.0
        %1075 = vmatprep.subr.mxu0 0.0
        %1076 = vmatpush1.msra.mxu0 0.0
        %1077 = vmatprep.subr.mxu0 0.0
        %1078 = vmatpush1.msra.mxu0 0.0
        %1079 = vmatprep.subr.mxu0 0.0
        %1080 = vmatpush1.msra.mxu0 0.0
        %1081 = vmatprep.subr.mxu0 0.0
        %1082 = vmatpush1.msra.mxu0 0.0
        %1083 = vmatprep.subr.mxu0 0.0
        %1084 = vmatpush1.msra.mxu0 0.0
        %1085 = vmatprep.subr.mxu0 0.0
        %1086 = vmatpush1.msra.mxu0 0.0
        %1087 = vmatprep.subr.mxu0 0.0
        %1088 = vmatpush1.msra.mxu0 0.0
        %1089 = vmatprep.subr.mxu0 0.0
        %1090 = vmatpush1.msra.mxu0 0.0
        %1091 = vmatprep.mubr.f32.mxu0 0.0
        %v1092 = vand.u32 %v644, 4294901760
        %1093 = vmatmul.mubr.f32.gmra.mrb[0].mxu0 %v1092
        %v1094 = vpop.f32.mrb[0].mxu0
        %v1095 = vadd.f32 %v1002, %v1094
        %v1096 = vpop.f32.mrb[0].mxu0
        %v1097 = vadd.f32 %v1004, %v1096
        %1098 = vmatprep.mubr.f32.mxu0 0.0
        %v1099 = vand.u32 %v647, 4294901760
        %1100 = vmatmul.mubr.f32.gmra.mrb[0].mxu0 %v1099
        %v1101 = vpop.f32.mrb[0].mxu0
        %v1102 = vadd.f32 %v1011, %v1101
        %v1103 = vpop.f32.mrb[0].mxu0
        %v1104 = vadd.f32 %v1013, %v1103
        %1105 = vdwg.mxu0
        %v1106 = vand.u32 %v607, 4294901760
        %1107 = vmatprep.subr.mxu0 %v1106
        %v1108 = vand.u32 %v606, 4294901760
        %1109 = vmatpush1.msra.mxu0 %v1108
        %v1110 = vand.u32 %v625, 4294901760
        %1111 = vmatprep.subr.mxu0 %v1110
        %v1112 = vand.u32 %v624, 4294901760
        %1113 = vmatpush1.msra.mxu0 %v1112
        %1114 = vmatprep.subr.mxu0 0.0
        %1115 = vmatpush1.msra.mxu0 0.0
        %1116 = vmatprep.subr.mxu0 0.0
        %1117 = vmatpush1.msra.mxu0 0.0
        %1118 = vmatprep.subr.mxu0 0.0
        %1119 = vmatpush1.msra.mxu0 0.0
        %1120 = vmatprep.subr.mxu0 0.0
        %1121 = vmatpush1.msra.mxu0 0.0
        %1122 = vmatprep.subr.mxu0 0.0
        %1123 = vmatpush1.msra.mxu0 0.0
        %1124 = vmatprep.subr.mxu0 0.0
        %1125 = vmatpush1.msra.mxu0 0.0
        %1126 = vmatprep.subr.mxu0 0.0
        %1127 = vmatpush1.msra.mxu0 0.0
        %1128 = vmatprep.subr.mxu0 0.0
        %1129 = vmatpush1.msra.mxu0 0.0
        %1130 = vmatprep.subr.mxu0 0.0
        %1131 = vmatpush1.msra.mxu0 0.0
        %1132 = vmatprep.subr.mxu0 0.0
        %1133 = vmatpush1.msra.mxu0 0.0
        %1134 = vmatprep.subr.mxu0 0.0
        %1135 = vmatpush1.msra.mxu0 0.0
        %1136 = vmatprep.subr.mxu0 0.0
        %1137 = vmatpush1.msra.mxu0 0.0
        %1138 = vmatprep.subr.mxu0 0.0
        %1139 = vmatpush1.msra.mxu0 0.0
        %1140 = vmatprep.subr.mxu0 0.0
        %1141 = vmatpush1.msra.mxu0 0.0
        %1142 = vmatprep.subr.mxu0 0.0
        %1143 = vmatpush1.msra.mxu0 0.0
        %1144 = vmatprep.subr.mxu0 0.0
        %1145 = vmatpush1.msra.mxu0 0.0
        %1146 = vmatprep.subr.mxu0 0.0
        %1147 = vmatpush1.msra.mxu0 0.0
        %1148 = vmatprep.subr.mxu0 0.0
        %1149 = vmatpush1.msra.mxu0 0.0
        %1150 = vmatprep.subr.mxu0 0.0
        %1151 = vmatpush1.msra.mxu0 0.0
        %1152 = vmatprep.subr.mxu0 0.0
        %1153 = vmatpush1.msra.mxu0 0.0
        %1154 = vmatprep.subr.mxu0 0.0
        %1155 = vmatpush1.msra.mxu0 0.0
        %1156 = vmatprep.subr.mxu0 0.0
        %1157 = vmatpush1.msra.mxu0 0.0
        %1158 = vmatprep.subr.mxu0 0.0
        %1159 = vmatpush1.msra.mxu0 0.0
        %1160 = vmatprep.subr.mxu0 0.0
        %1161 = vmatpush1.msra.mxu0 0.0
        %1162 = vmatprep.subr.mxu0 0.0
        %1163 = vmatpush1.msra.mxu0 0.0
        %1164 = vmatprep.subr.mxu0 0.0
        %1165 = vmatpush1.msra.mxu0 0.0
        %1166 = vmatprep.subr.mxu0 0.0
        %1167 = vmatpush1.msra.mxu0 0.0
        %1168 = vmatprep.subr.mxu0 0.0
        %1169 = vmatpush1.msra.mxu0 0.0
        %1170 = vmatprep.subr.mxu0 0.0
        %1171 = vmatpush1.msra.mxu0 0.0
        %1172 = vmatprep.subr.mxu0 0.0
        %1173 = vmatpush1.msra.mxu0 0.0
        %1174 = vmatprep.mubr.f32.mxu0 0.0
        %v1175 = vand.u32 %v644, 4294901760
        %1176 = vmatmul.mubr.f32.gmra.mrb[0].mxu0 %v1175
        %v1177 = vpop.f32.mrb[0].mxu0
        %v1178 = vadd.f32 %v1095, %v1177
        %v1179 = vpop.f32.mrb[0].mxu0
        %v1180 = vadd.f32 %v1097, %v1179
        %1181 = vmatprep.mubr.f32.mxu0 0.0
        %v1182 = vand.u32 %v647, 4294901760
        %1183 = vmatmul.mubr.f32.gmra.mrb[0].mxu0 %v1182
        %v1184 = vpop.f32.mrb[0].mxu0
        %v1185 = vadd.f32 %v1102, %v1184
        %v1186 = vpop.f32.mrb[0].mxu0
        %v1187 = vadd.f32 %v1104, %v1186
        %1188 = vdwg.mxu0
        %v1189 = vand.u32 %v609, 4294901760
        %1190 = vmatprep.subr.mxu0 %v1189
        %v1191 = vand.u32 %v608, 4294901760
        %1192 = vmatpush1.msra.mxu0 %v1191
        %v1193 = vand.u32 %v627, 4294901760
        %1194 = vmatprep.subr.mxu0 %v1193
        %v1195 = vand.u32 %v626, 4294901760
        %1196 = vmatpush1.msra.mxu0 %v1195
        %1197 = vmatprep.subr.mxu0 0.0
        %1198 = vmatpush1.msra.mxu0 0.0
        %1199 = vmatprep.subr.mxu0 0.0
        %1200 = vmatpush1.msra.mxu0 0.0
        %1201 = vmatprep.subr.mxu0 0.0
        %1202 = vmatpush1.msra.mxu0 0.0
        %1203 = vmatprep.subr.mxu0 0.0
        %1204 = vmatpush1.msra.mxu0 0.0
        %1205 = vmatprep.subr.mxu0 0.0
        %1206 = vmatpush1.msra.mxu0 0.0
        %1207 = vmatprep.subr.mxu0 0.0
        %1208 = vmatpush1.msra.mxu0 0.0
        %1209 = vmatprep.subr.mxu0 0.0
        %1210 = vmatpush1.msra.mxu0 0.0
        %1211 = vmatprep.subr.mxu0 0.0
        %1212 = vmatpush1.msra.mxu0 0.0
        %1213 = vmatprep.subr.mxu0 0.0
        %1214 = vmatpush1.msra.mxu0 0.0
        %1215 = vmatprep.subr.mxu0 0.0
        %1216 = vmatpush1.msra.mxu0 0.0
        %1217 = vmatprep.subr.mxu0 0.0
        %1218 = vmatpush1.msra.mxu0 0.0
        %1219 = vmatprep.subr.mxu0 0.0
        %1220 = vmatpush1.msra.mxu0 0.0
        %1221 = vmatprep.subr.mxu0 0.0
        %1222 = vmatpush1.msra.mxu0 0.0
        %1223 = vmatprep.subr.mxu0 0.0
        %1224 = vmatpush1.msra.mxu0 0.0
        %1225 = vmatprep.subr.mxu0 0.0
        %1226 = vmatpush1.msra.mxu0 0.0
        %1227 = vmatprep.subr.mxu0 0.0
        %1228 = vmatpush1.msra.mxu0 0.0
        %1229 = vmatprep.subr.mxu0 0.0
        %1230 = vmatpush1.msra.mxu0 0.0
        %1231 = vmatprep.subr.mxu0 0.0
        %1232 = vmatpush1.msra.mxu0 0.0
        %1233 = vmatprep.subr.mxu0 0.0
        %1234 = vmatpush1.msra.mxu0 0.0
        %1235 = vmatprep.subr.mxu0 0.0
        %1236 = vmatpush1.msra.mxu0 0.0
        %1237 = vmatprep.subr.mxu0 0.0
        %1238 = vmatpush1.msra.mxu0 0.0
        %1239 = vmatprep.subr.mxu0 0.0
        %1240 = vmatpush1.msra.mxu0 0.0
        %1241 = vmatprep.subr.mxu0 0.0
        %1242 = vmatpush1.msra.mxu0 0.0
        %1243 = vmatprep.subr.mxu0 0.0
        %1244 = vmatpush1.msra.mxu0 0.0
        %1245 = vmatprep.subr.mxu0 0.0
        %1246 = vmatpush1.msra.mxu0 0.0
        %1247 = vmatprep.subr.mxu0 0.0
        %1248 = vmatpush1.msra.mxu0 0.0
        %1249 = vmatprep.subr.mxu0 0.0
        %1250 = vmatpush1.msra.mxu0 0.0
        %1251 = vmatprep.subr.mxu0 0.0
        %1252 = vmatpush1.msra.mxu0 0.0
        %1253 = vmatprep.subr.mxu0 0.0
        %1254 = vmatpush1.msra.mxu0 0.0
        %1255 = vmatprep.subr.mxu0 0.0
        %1256 = vmatpush1.msra.mxu0 0.0
        %1257 = vmatprep.mubr.f32.mxu0 0.0
        %v1258 = vand.u32 %v644, 4294901760
        %v1259 = vsub.f32 %v644, %v1258
        %v1260 = vand.u32 %v1259, 4294901760
        %v1261 = vsub.f32 %v1259, %v1260
        %v1262 = vand.u32 %v1261, 4294901760
        %1263 = vmatmul.mubr.f32.gmra.mrb[0].mxu0 %v1262
        %v1264 = vpop.f32.mrb[0].mxu0
        %v1265 = vadd.f32 0.0, %v1264
        %v1266 = vpop.f32.mrb[0].mxu0
        %v1267 = vadd.f32 0.0, %v1266
        %1268 = vmatprep.mubr.f32.mxu0 0.0
        %v1269 = vand.u32 %v647, 4294901760
        %v1270 = vsub.f32 %v647, %v1269
        %v1271 = vand.u32 %v1270, 4294901760
        %v1272 = vsub.f32 %v1270, %v1271
        %v1273 = vand.u32 %v1272, 4294901760
        %1274 = vmatmul.mubr.f32.gmra.mrb[0].mxu0 %v1273
        %v1275 = vpop.f32.mrb[0].mxu0
        %v1276 = vadd.f32 0.0, %v1275
        %v1277 = vpop.f32.mrb[0].mxu0
        %v1278 = vadd.f32 0.0, %v1277
        %1279 = vdwg.mxu0
        %v1280 = vand.u32 %v609, 4294901760
        %v1281 = vsub.f32 %v609, %v1280
        %v1282 = vand.u32 %v1281, 4294901760
        %v1283 = vsub.f32 %v1281, %v1282
        %v1284 = vand.u32 %v1283, 4294901760
        %1285 = vmatprep.subr.mxu0 %v1284
        %v1286 = vand.u32 %v608, 4294901760
        %v1287 = vsub.f32 %v608, %v1286
        %v1288 = vand.u32 %v1287, 4294901760
        %v1289 = vsub.f32 %v1287, %v1288
        %v1290 = vand.u32 %v1289, 4294901760
        %1291 = vmatpush1.msra.mxu0 %v1290
        %v1292 = vand.u32 %v627, 4294901760
        %v1293 = vsub.f32 %v627, %v1292
        %v1294 = vand.u32 %v1293, 4294901760
        %v1295 = vsub.f32 %v1293, %v1294
        %v1296 = vand.u32 %v1295, 4294901760
        %1297 = vmatprep.subr.mxu0 %v1296
        %v1298 = vand.u32 %v626, 4294901760
        %v1299 = vsub.f32 %v626, %v1298
        %v1300 = vand.u32 %v1299, 4294901760
        %v1301 = vsub.f32 %v1299, %v1300
        %v1302 = vand.u32 %v1301, 4294901760
        %1303 = vmatpush1.msra.mxu0 %v1302
        %1304 = vmatprep.subr.mxu0 0.0
        %1305 = vmatpush1.msra.mxu0 0.0
        %1306 = vmatprep.subr.mxu0 0.0
        %1307 = vmatpush1.msra.mxu0 0.0
        %1308 = vmatprep.subr.mxu0 0.0
        %1309 = vmatpush1.msra.mxu0 0.0
        %1310 = vmatprep.subr.mxu0 0.0
        %1311 = vmatpush1.msra.mxu0 0.0
        %1312 = vmatprep.subr.mxu0 0.0
        %1313 = vmatpush1.msra.mxu0 0.0
        %1314 = vmatprep.subr.mxu0 0.0
        %1315 = vmatpush1.msra.mxu0 0.0
        %1316 = vmatprep.subr.mxu0 0.0
        %1317 = vmatpush1.msra.mxu0 0.0
        %1318 = vmatprep.subr.mxu0 0.0
        %1319 = vmatpush1.msra.mxu0 0.0
        %1320 = vmatprep.subr.mxu0 0.0
        %1321 = vmatpush1.msra.mxu0 0.0
        %1322 = vmatprep.subr.mxu0 0.0
        %1323 = vmatpush1.msra.mxu0 0.0
        %1324 = vmatprep.subr.mxu0 0.0
        %1325 = vmatpush1.msra.mxu0 0.0
        %1326 = vmatprep.subr.mxu0 0.0
        %1327 = vmatpush1.msra.mxu0 0.0
        %1328 = vmatprep.subr.mxu0 0.0
        %1329 = vmatpush1.msra.mxu0 0.0
        %1330 = vmatprep.subr.mxu0 0.0
        %1331 = vmatpush1.msra.mxu0 0.0
        %1332 = vmatprep.subr.mxu0 0.0
        %1333 = vmatpush1.msra.mxu0 0.0
        %1334 = vmatprep.subr.mxu0 0.0
        %1335 = vmatpush1.msra.mxu0 0.0
        %1336 = vmatprep.subr.mxu0 0.0
        %1337 = vmatpush1.msra.mxu0 0.0
        %1338 = vmatprep.subr.mxu0 0.0
        %1339 = vmatpush1.msra.mxu0 0.0
        %1340 = vmatprep.subr.mxu0 0.0
        %1341 = vmatpush1.msra.mxu0 0.0
        %1342 = vmatprep.subr.mxu0 0.0
        %1343 = vmatpush1.msra.mxu0 0.0
        %1344 = vmatprep.subr.mxu0 0.0
        %1345 = vmatpush1.msra.mxu0 0.0
        %1346 = vmatprep.subr.mxu0 0.0
        %1347 = vmatpush1.msra.mxu0 0.0
        %1348 = vmatprep.subr.mxu0 0.0
        %1349 = vmatpush1.msra.mxu0 0.0
        %1350 = vmatprep.subr.mxu0 0.0
        %1351 = vmatpush1.msra.mxu0 0.0
        %1352 = vmatprep.subr.mxu0 0.0
        %1353 = vmatpush1.msra.mxu0 0.0
        %1354 = vmatprep.subr.mxu0 0.0
        %1355 = vmatpush1.msra.mxu0 0.0
        %1356 = vmatprep.subr.mxu0 0.0
        %1357 = vmatpush1.msra.mxu0 0.0
        %1358 = vmatprep.subr.mxu0 0.0
        %1359 = vmatpush1.msra.mxu0 0.0
        %1360 = vmatprep.subr.mxu0 0.0
        %1361 = vmatpush1.msra.mxu0 0.0
        %1362 = vmatprep.subr.mxu0 0.0
        %1363 = vmatpush1.msra.mxu0 0.0
        %1364 = vmatprep.mubr.f32.mxu0 0.0
        %v1365 = vand.u32 %v644, 4294901760
        %1366 = vmatmul.mubr.f32.gmra.mrb[0].mxu0 %v1365
        %v1367 = vpop.f32.mrb[0].mxu0
        %v1368 = vadd.f32 %v1265, %v1367
        %v1369 = vpop.f32.mrb[0].mxu0
        %v1370 = vadd.f32 %v1267, %v1369
        %1371 = vmatprep.mubr.f32.mxu0 0.0
        %v1372 = vand.u32 %v647, 4294901760
        %1373 = vmatmul.mubr.f32.gmra.mrb[0].mxu0 %v1372
        %v1374 = vpop.f32.mrb[0].mxu0
        %v1375 = vadd.f32 %v1276, %v1374
        %v1376 = vpop.f32.mrb[0].mxu0
        %v1377 = vadd.f32 %v1278, %v1376
        %1378 = vdwg.mxu0
        %v1379 = vand.u32 %v609, 4294901760
        %v1380 = vsub.f32 %v609, %v1379
        %1381 = vmatprep.subr.mxu0 %v1380
        %v1382 = vand.u32 %v608, 4294901760
        %v1383 = vsub.f32 %v608, %v1382
        %1384 = vmatpush1.msra.mxu0 %v1383
        %v1385 = vand.u32 %v627, 4294901760
        %v1386 = vsub.f32 %v627, %v1385
        %1387 = vmatprep.subr.mxu0 %v1386
        %v1388 = vand.u32 %v626, 4294901760
        %v1389 = vsub.f32 %v626, %v1388
        %1390 = vmatpush1.msra.mxu0 %v1389
        %1391 = vmatprep.subr.mxu0 0.0
        %1392 = vmatpush1.msra.mxu0 0.0
        %1393 = vmatprep.subr.mxu0 0.0
        %1394 = vmatpush1.msra.mxu0 0.0
        %1395 = vmatprep.subr.mxu0 0.0
        %1396 = vmatpush1.msra.mxu0 0.0
        %1397 = vmatprep.subr.mxu0 0.0
        %1398 = vmatpush1.msra.mxu0 0.0
        %1399 = vmatprep.subr.mxu0 0.0
        %1400 = vmatpush1.msra.mxu0 0.0
        %1401 = vmatprep.subr.mxu0 0.0
        %1402 = vmatpush1.msra.mxu0 0.0
        %1403 = vmatprep.subr.mxu0 0.0
        %1404 = vmatpush1.msra.mxu0 0.0
        %1405 = vmatprep.subr.mxu0 0.0
        %1406 = vmatpush1.msra.mxu0 0.0
        %1407 = vmatprep.subr.mxu0 0.0
        %1408 = vmatpush1.msra.mxu0 0.0
        %1409 = vmatprep.subr.mxu0 0.0
        %1410 = vmatpush1.msra.mxu0 0.0
        %1411 = vmatprep.subr.mxu0 0.0
        %1412 = vmatpush1.msra.mxu0 0.0
        %1413 = vmatprep.subr.mxu0 0.0
        %1414 = vmatpush1.msra.mxu0 0.0
        %1415 = vmatprep.subr.mxu0 0.0
        %1416 = vmatpush1.msra.mxu0 0.0
        %1417 = vmatprep.subr.mxu0 0.0
        %1418 = vmatpush1.msra.mxu0 0.0
        %1419 = vmatprep.subr.mxu0 0.0
        %1420 = vmatpush1.msra.mxu0 0.0
        %1421 = vmatprep.subr.mxu0 0.0
        %1422 = vmatpush1.msra.mxu0 0.0
        %1423 = vmatprep.subr.mxu0 0.0
        %1424 = vmatpush1.msra.mxu0 0.0
        %1425 = vmatprep.subr.mxu0 0.0
        %1426 = vmatpush1.msra.mxu0 0.0
        %1427 = vmatprep.subr.mxu0 0.0
        %1428 = vmatpush1.msra.mxu0 0.0
        %1429 = vmatprep.subr.mxu0 0.0
        %1430 = vmatpush1.msra.mxu0 0.0
        %1431 = vmatprep.subr.mxu0 0.0
        %1432 = vmatpush1.msra.mxu0 0.0
        %1433 = vmatprep.subr.mxu0 0.0
        %1434 = vmatpush1.msra.mxu0 0.0
        %1435 = vmatprep.subr.mxu0 0.0
        %1436 = vmatpush1.msra.mxu0 0.0
        %1437 = vmatprep.subr.mxu0 0.0
        %1438 = vmatpush1.msra.mxu0 0.0
        %1439 = vmatprep.subr.mxu0 0.0
        %1440 = vmatpush1.msra.mxu0 0.0
        %1441 = vmatprep.subr.mxu0 0.0
        %1442 = vmatpush1.msra.mxu0 0.0
        %1443 = vmatprep.subr.mxu0 0.0
        %1444 = vmatpush1.msra.mxu0 0.0
        %1445 = vmatprep.subr.mxu0 0.0
        %1446 = vmatpush1.msra.mxu0 0.0
        %1447 = vmatprep.subr.mxu0 0.0
        %1448 = vmatpush1.msra.mxu0 0.0
        %1449 = vmatprep.subr.mxu0 0.0
        %1450 = vmatpush1.msra.mxu0 0.0
        %1451 = vmatprep.mubr.f32.mxu0 0.0
        %v1452 = vand.u32 %v644, 4294901760
        %v1453 = vsub.f32 %v644, %v1452
        %1454 = vmatmul.mubr.f32.gmra.mrb[0].mxu0 %v1453
        %v1455 = vpop.f32.mrb[0].mxu0
        %v1456 = vadd.f32 %v1368, %v1455
        %v1457 = vpop.f32.mrb[0].mxu0
        %v1458 = vadd.f32 %v1370, %v1457
        %1459 = vmatprep.mubr.f32.mxu0 0.0
        %v1460 = vand.u32 %v647, 4294901760
        %v1461 = vsub.f32 %v647, %v1460
        %1462 = vmatmul.mubr.f32.gmra.mrb[0].mxu0 %v1461
        %v1463 = vpop.f32.mrb[0].mxu0
        %v1464 = vadd.f32 %v1375, %v1463
        %v1465 = vpop.f32.mrb[0].mxu0
        %v1466 = vadd.f32 %v1377, %v1465
        %1467 = vdwg.mxu0
        %v1468 = vand.u32 %v609, 4294901760
        %1469 = vmatprep.subr.mxu0 %v1468
        %v1470 = vand.u32 %v608, 4294901760
        %1471 = vmatpush1.msra.mxu0 %v1470
        %v1472 = vand.u32 %v627, 4294901760
        %1473 = vmatprep.subr.mxu0 %v1472
        %v1474 = vand.u32 %v626, 4294901760
        %1475 = vmatpush1.msra.mxu0 %v1474
        %1476 = vmatprep.subr.mxu0 0.0
        %1477 = vmatpush1.msra.mxu0 0.0
        %1478 = vmatprep.subr.mxu0 0.0
        %1479 = vmatpush1.msra.mxu0 0.0
        %1480 = vmatprep.subr.mxu0 0.0
        %1481 = vmatpush1.msra.mxu0 0.0
        %1482 = vmatprep.subr.mxu0 0.0
        %1483 = vmatpush1.msra.mxu0 0.0
        %1484 = vmatprep.subr.mxu0 0.0
        %1485 = vmatpush1.msra.mxu0 0.0
        %1486 = vmatprep.subr.mxu0 0.0
        %1487 = vmatpush1.msra.mxu0 0.0
        %1488 = vmatprep.subr.mxu0 0.0
        %1489 = vmatpush1.msra.mxu0 0.0
        %1490 = vmatprep.subr.mxu0 0.0
        %1491 = vmatpush1.msra.mxu0 0.0
        %1492 = vmatprep.subr.mxu0 0.0
        %1493 = vmatpush1.msra.mxu0 0.0
        %1494 = vmatprep.subr.mxu0 0.0
        %1495 = vmatpush1.msra.mxu0 0.0
        %1496 = vmatprep.subr.mxu0 0.0
        %1497 = vmatpush1.msra.mxu0 0.0
        %1498 = vmatprep.subr.mxu0 0.0
        %1499 = vmatpush1.msra.mxu0 0.0
        %1500 = vmatprep.subr.mxu0 0.0
        %1501 = vmatpush1.msra.mxu0 0.0
        %1502 = vmatprep.subr.mxu0 0.0
        %1503 = vmatpush1.msra.mxu0 0.0
        %1504 = vmatprep.subr.mxu0 0.0
        %1505 = vmatpush1.msra.mxu0 0.0
        %1506 = vmatprep.subr.mxu0 0.0
        %1507 = vmatpush1.msra.mxu0 0.0
        %1508 = vmatprep.subr.mxu0 0.0
        %1509 = vmatpush1.msra.mxu0 0.0
        %1510 = vmatprep.subr.mxu0 0.0
        %1511 = vmatpush1.msra.mxu0 0.0
        %1512 = vmatprep.subr.mxu0 0.0
        %1513 = vmatpush1.msra.mxu0 0.0
        %1514 = vmatprep.subr.mxu0 0.0
        %1515 = vmatpush1.msra.mxu0 0.0
        %1516 = vmatprep.subr.mxu0 0.0
        %1517 = vmatpush1.msra.mxu0 0.0
        %1518 = vmatprep.subr.mxu0 0.0
        %1519 = vmatpush1.msra.mxu0 0.0
        %1520 = vmatprep.subr.mxu0 0.0
        %1521 = vmatpush1.msra.mxu0 0.0
        %1522 = vmatprep.subr.mxu0 0.0
        %1523 = vmatpush1.msra.mxu0 0.0
        %1524 = vmatprep.subr.mxu0 0.0
        %1525 = vmatpush1.msra.mxu0 0.0
        %1526 = vmatprep.subr.mxu0 0.0
        %1527 = vmatpush1.msra.mxu0 0.0
        %1528 = vmatprep.subr.mxu0 0.0
        %1529 = vmatpush1.msra.mxu0 0.0
        %1530 = vmatprep.subr.mxu0 0.0
        %1531 = vmatpush1.msra.mxu0 0.0
        %1532 = vmatprep.subr.mxu0 0.0
        %1533 = vmatpush1.msra.mxu0 0.0
        %1534 = vmatprep.subr.mxu0 0.0
        %1535 = vmatpush1.msra.mxu0 0.0
        %1536 = vmatprep.mubr.f32.mxu0 0.0
        %v1537 = vand.u32 %v644, 4294901760
        %v1538 = vsub.f32 %v644, %v1537
        %v1539 = vand.u32 %v1538, 4294901760
        %1540 = vmatmul.mubr.f32.gmra.mrb[0].mxu0 %v1539
        %v1541 = vpop.f32.mrb[0].mxu0
        %v1542 = vadd.f32 %v1456, %v1541
        %v1543 = vpop.f32.mrb[0].mxu0
        %v1544 = vadd.f32 %v1458, %v1543
        %1545 = vmatprep.mubr.f32.mxu0 0.0
        %v1546 = vand.u32 %v647, 4294901760
        %v1547 = vsub.f32 %v647, %v1546
        %v1548 = vand.u32 %v1547, 4294901760
        %1549 = vmatmul.mubr.f32.gmra.mrb[0].mxu0 %v1548
        %v1550 = vpop.f32.mrb[0].mxu0
        %v1551 = vadd.f32 %v1464, %v1550
        %v1552 = vpop.f32.mrb[0].mxu0
        %v1553 = vadd.f32 %v1466, %v1552
        %1554 = vdwg.mxu0
        %v1555 = vand.u32 %v609, 4294901760
        %v1556 = vsub.f32 %v609, %v1555
        %v1557 = vand.u32 %v1556, 4294901760
        %1558 = vmatprep.subr.mxu0 %v1557
        %v1559 = vand.u32 %v608, 4294901760
        %v1560 = vsub.f32 %v608, %v1559
        %v1561 = vand.u32 %v1560, 4294901760
        %1562 = vmatpush1.msra.mxu0 %v1561
        %v1563 = vand.u32 %v627, 4294901760
        %v1564 = vsub.f32 %v627, %v1563
        %v1565 = vand.u32 %v1564, 4294901760
        %1566 = vmatprep.subr.mxu0 %v1565
        %v1567 = vand.u32 %v626, 4294901760
        %v1568 = vsub.f32 %v626, %v1567
        %v1569 = vand.u32 %v1568, 4294901760
        %1570 = vmatpush1.msra.mxu0 %v1569
        %1571 = vmatprep.subr.mxu0 0.0
        %1572 = vmatpush1.msra.mxu0 0.0
        %1573 = vmatprep.subr.mxu0 0.0
        %1574 = vmatpush1.msra.mxu0 0.0
        %1575 = vmatprep.subr.mxu0 0.0
        %1576 = vmatpush1.msra.mxu0 0.0
        %1577 = vmatprep.subr.mxu0 0.0
        %1578 = vmatpush1.msra.mxu0 0.0
        %1579 = vmatprep.subr.mxu0 0.0
        %1580 = vmatpush1.msra.mxu0 0.0
        %1581 = vmatprep.subr.mxu0 0.0
        %1582 = vmatpush1.msra.mxu0 0.0
        %1583 = vmatprep.subr.mxu0 0.0
        %1584 = vmatpush1.msra.mxu0 0.0
        %1585 = vmatprep.subr.mxu0 0.0
        %1586 = vmatpush1.msra.mxu0 0.0
        %1587 = vmatprep.subr.mxu0 0.0
        %1588 = vmatpush1.msra.mxu0 0.0
        %1589 = vmatprep.subr.mxu0 0.0
        %1590 = vmatpush1.msra.mxu0 0.0
        %1591 = vmatprep.subr.mxu0 0.0
        %1592 = vmatpush1.msra.mxu0 0.0
        %1593 = vmatprep.subr.mxu0 0.0
        %1594 = vmatpush1.msra.mxu0 0.0
        %1595 = vmatprep.subr.mxu0 0.0
        %1596 = vmatpush1.msra.mxu0 0.0
        %1597 = vmatprep.subr.mxu0 0.0
        %1598 = vmatpush1.msra.mxu0 0.0
        %1599 = vmatprep.subr.mxu0 0.0
        %1600 = vmatpush1.msra.mxu0 0.0
        %1601 = vmatprep.subr.mxu0 0.0
        %1602 = vmatpush1.msra.mxu0 0.0
        %1603 = vmatprep.subr.mxu0 0.0
        %1604 = vmatpush1.msra.mxu0 0.0
        %1605 = vmatprep.subr.mxu0 0.0
        %1606 = vmatpush1.msra.mxu0 0.0
        %1607 = vmatprep.subr.mxu0 0.0
        %1608 = vmatpush1.msra.mxu0 0.0
        %1609 = vmatprep.subr.mxu0 0.0
        %1610 = vmatpush1.msra.mxu0 0.0
        %1611 = vmatprep.subr.mxu0 0.0
        %1612 = vmatpush1.msra.mxu0 0.0
        %1613 = vmatprep.subr.mxu0 0.0
        %1614 = vmatpush1.msra.mxu0 0.0
        %1615 = vmatprep.subr.mxu0 0.0
        %1616 = vmatpush1.msra.mxu0 0.0
        %1617 = vmatprep.subr.mxu0 0.0
        %1618 = vmatpush1.msra.mxu0 0.0
        %1619 = vmatprep.subr.mxu0 0.0
        %1620 = vmatpush1.msra.mxu0 0.0
        %1621 = vmatprep.subr.mxu0 0.0
        %1622 = vmatpush1.msra.mxu0 0.0
        %1623 = vmatprep.subr.mxu0 0.0
        %1624 = vmatpush1.msra.mxu0 0.0
        %1625 = vmatprep.subr.mxu0 0.0
        %1626 = vmatpush1.msra.mxu0 0.0
        %1627 = vmatprep.subr.mxu0 0.0
        %1628 = vmatpush1.msra.mxu0 0.0
        %1629 = vmatprep.subr.mxu0 0.0
        %1630 = vmatpush1.msra.mxu0 0.0
        %1631 = vmatprep.mubr.f32.mxu0 0.0
        %v1632 = vand.u32 %v644, 4294901760
        %1633 = vmatmul.mubr.f32.gmra.mrb[0].mxu0 %v1632
        %v1634 = vpop.f32.mrb[0].mxu0
        %v1635 = vadd.f32 %v1542, %v1634
        %v1636 = vpop.f32.mrb[0].mxu0
        %v1637 = vadd.f32 %v1544, %v1636
        %1638 = vmatprep.mubr.f32.mxu0 0.0
        %v1639 = vand.u32 %v647, 4294901760
        %1640 = vmatmul.mubr.f32.gmra.mrb[0].mxu0 %v1639
        %v1641 = vpop.f32.mrb[0].mxu0
        %v1642 = vadd.f32 %v1551, %v1641
        %v1643 = vpop.f32.mrb[0].mxu0
        %v1644 = vadd.f32 %v1553, %v1643
        %1645 = vdwg.mxu0
        %v1646 = vand.u32 %v609, 4294901760
        %1647 = vmatprep.subr.mxu0 %v1646
        %v1648 = vand.u32 %v608, 4294901760
        %1649 = vmatpush1.msra.mxu0 %v1648
        %v1650 = vand.u32 %v627, 4294901760
        %1651 = vmatprep.subr.mxu0 %v1650
        %v1652 = vand.u32 %v626, 4294901760
        %1653 = vmatpush1.msra.mxu0 %v1652
        %1654 = vmatprep.subr.mxu0 0.0
        %1655 = vmatpush1.msra.mxu0 0.0
        %1656 = vmatprep.subr.mxu0 0.0
        %1657 = vmatpush1.msra.mxu0 0.0
        %1658 = vmatprep.subr.mxu0 0.0
        %1659 = vmatpush1.msra.mxu0 0.0
        %1660 = vmatprep.subr.mxu0 0.0
        %1661 = vmatpush1.msra.mxu0 0.0
        %1662 = vmatprep.subr.mxu0 0.0
        %1663 = vmatpush1.msra.mxu0 0.0
        %1664 = vmatprep.subr.mxu0 0.0
        %1665 = vmatpush1.msra.mxu0 0.0
        %1666 = vmatprep.subr.mxu0 0.0
        %1667 = vmatpush1.msra.mxu0 0.0
        %1668 = vmatprep.subr.mxu0 0.0
        %1669 = vmatpush1.msra.mxu0 0.0
        %1670 = vmatprep.subr.mxu0 0.0
        %1671 = vmatpush1.msra.mxu0 0.0
        %1672 = vmatprep.subr.mxu0 0.0
        %1673 = vmatpush1.msra.mxu0 0.0
        %1674 = vmatprep.subr.mxu0 0.0
        %1675 = vmatpush1.msra.mxu0 0.0
        %1676 = vmatprep.subr.mxu0 0.0
        %1677 = vmatpush1.msra.mxu0 0.0
        %1678 = vmatprep.subr.mxu0 0.0
        %1679 = vmatpush1.msra.mxu0 0.0
        %1680 = vmatprep.subr.mxu0 0.0
        %1681 = vmatpush1.msra.mxu0 0.0
        %1682 = vmatprep.subr.mxu0 0.0
        %1683 = vmatpush1.msra.mxu0 0.0
        %1684 = vmatprep.subr.mxu0 0.0
        %1685 = vmatpush1.msra.mxu0 0.0
        %1686 = vmatprep.subr.mxu0 0.0
        %1687 = vmatpush1.msra.mxu0 0.0
        %1688 = vmatprep.subr.mxu0 0.0
        %1689 = vmatpush1.msra.mxu0 0.0
        %1690 = vmatprep.subr.mxu0 0.0
        %1691 = vmatpush1.msra.mxu0 0.0
        %1692 = vmatprep.subr.mxu0 0.0
        %1693 = vmatpush1.msra.mxu0 0.0
        %1694 = vmatprep.subr.mxu0 0.0
        %1695 = vmatpush1.msra.mxu0 0.0
        %1696 = vmatprep.subr.mxu0 0.0
        %1697 = vmatpush1.msra.mxu0 0.0
        %1698 = vmatprep.subr.mxu0 0.0
        %1699 = vmatpush1.msra.mxu0 0.0
        %1700 = vmatprep.subr.mxu0 0.0
        %1701 = vmatpush1.msra.mxu0 0.0
        %1702 = vmatprep.subr.mxu0 0.0
        %1703 = vmatpush1.msra.mxu0 0.0
        %1704 = vmatprep.subr.mxu0 0.0
        %1705 = vmatpush1.msra.mxu0 0.0
        %1706 = vmatprep.subr.mxu0 0.0
        %1707 = vmatpush1.msra.mxu0 0.0
        %1708 = vmatprep.subr.mxu0 0.0
        %1709 = vmatpush1.msra.mxu0 0.0
        %1710 = vmatprep.subr.mxu0 0.0
        %1711 = vmatpush1.msra.mxu0 0.0
        %1712 = vmatprep.subr.mxu0 0.0
        %1713 = vmatpush1.msra.mxu0 0.0
        %1714 = vmatprep.mubr.f32.mxu0 0.0
        %v1715 = vand.u32 %v644, 4294901760
        %1716 = vmatmul.mubr.f32.gmra.mrb[0].mxu0 %v1715
        %v1717 = vpop.f32.mrb[0].mxu0
        %v1718 = vadd.f32 %v1635, %v1717
        %v1719 = vpop.f32.mrb[0].mxu0
        %v1720 = vadd.f32 %v1637, %v1719
        %1721 = vmatprep.mubr.f32.mxu0 0.0
        %v1722 = vand.u32 %v647, 4294901760
        %1723 = vmatmul.mubr.f32.gmra.mrb[0].mxu0 %v1722
        %v1724 = vpop.f32.mrb[0].mxu0
        %v1725 = vadd.f32 %v1642, %v1724
        %v1726 = vpop.f32.mrb[0].mxu0
        %v1727 = vadd.f32 %v1644, %v1726
        %1728 = vdwg.mxu0
        %v1729 = vand.u32 %v611, 4294901760
        %1730 = vmatprep.subr.mxu0 %v1729
        %v1731 = vand.u32 %v610, 4294901760
        %1732 = vmatpush1.msra.mxu0 %v1731
        %v1733 = vand.u32 %v629, 4294901760
        %1734 = vmatprep.subr.mxu0 %v1733
        %v1735 = vand.u32 %v628, 4294901760
        %1736 = vmatpush1.msra.mxu0 %v1735
        %1737 = vmatprep.subr.mxu0 0.0
        %1738 = vmatpush1.msra.mxu0 0.0
        %1739 = vmatprep.subr.mxu0 0.0
        %1740 = vmatpush1.msra.mxu0 0.0
        %1741 = vmatprep.subr.mxu0 0.0
        %1742 = vmatpush1.msra.mxu0 0.0
        %1743 = vmatprep.subr.mxu0 0.0
        %1744 = vmatpush1.msra.mxu0 0.0
        %1745 = vmatprep.subr.mxu0 0.0
        %1746 = vmatpush1.msra.mxu0 0.0
        %1747 = vmatprep.subr.mxu0 0.0
        %1748 = vmatpush1.msra.mxu0 0.0
        %1749 = vmatprep.subr.mxu0 0.0
        %1750 = vmatpush1.msra.mxu0 0.0
        %1751 = vmatprep.subr.mxu0 0.0
        %1752 = vmatpush1.msra.mxu0 0.0
        %1753 = vmatprep.subr.mxu0 0.0
        %1754 = vmatpush1.msra.mxu0 0.0
        %1755 = vmatprep.subr.mxu0 0.0
        %1756 = vmatpush1.msra.mxu0 0.0
        %1757 = vmatprep.subr.mxu0 0.0
        %1758 = vmatpush1.msra.mxu0 0.0
        %1759 = vmatprep.subr.mxu0 0.0
        %1760 = vmatpush1.msra.mxu0 0.0
        %1761 = vmatprep.subr.mxu0 0.0
        %1762 = vmatpush1.msra.mxu0 0.0
        %1763 = vmatprep.subr.mxu0 0.0
        %1764 = vmatpush1.msra.mxu0 0.0
        %1765 = vmatprep.subr.mxu0 0.0
        %1766 = vmatpush1.msra.mxu0 0.0
        %1767 = vmatprep.subr.mxu0 0.0
        %1768 = vmatpush1.msra.mxu0 0.0
        %1769 = vmatprep.subr.mxu0 0.0
        %1770 = vmatpush1.msra.mxu0 0.0
        %1771 = vmatprep.subr.mxu0 0.0
        %1772 = vmatpush1.msra.mxu0 0.0
        %1773 = vmatprep.subr.mxu0 0.0
        %1774 = vmatpush1.msra.mxu0 0.0
        %1775 = vmatprep.subr.mxu0 0.0
        %1776 = vmatpush1.msra.mxu0 0.0
        %1777 = vmatprep.subr.mxu0 0.0
        %1778 = vmatpush1.msra.mxu0 0.0
        %1779 = vmatprep.subr.mxu0 0.0
        %1780 = vmatpush1.msra.mxu0 0.0
        %1781 = vmatprep.subr.mxu0 0.0
        %1782 = vmatpush1.msra.mxu0 0.0
        %1783 = vmatprep.subr.mxu0 0.0
        %1784 = vmatpush1.msra.mxu0 0.0
        %1785 = vmatprep.subr.mxu0 0.0
        %1786 = vmatpush1.msra.mxu0 0.0
        %1787 = vmatprep.subr.mxu0 0.0
        %1788 = vmatpush1.msra.mxu0 0.0
        %1789 = vmatprep.subr.mxu0 0.0
        %1790 = vmatpush1.msra.mxu0 0.0
        %1791 = vmatprep.subr.mxu0 0.0
        %1792 = vmatpush1.msra.mxu0 0.0
        %1793 = vmatprep.subr.mxu0 0.0
        %1794 = vmatpush1.msra.mxu0 0.0
        %1795 = vmatprep.subr.mxu0 0.0
        %1796 = vmatpush1.msra.mxu0 0.0
        %1797 = vmatprep.mubr.f32.mxu0 0.0
        %v1798 = vand.u32 %v644, 4294901760
        %v1799 = vsub.f32 %v644, %v1798
        %v1800 = vand.u32 %v1799, 4294901760
        %v1801 = vsub.f32 %v1799, %v1800
        %v1802 = vand.u32 %v1801, 4294901760
        %1803 = vmatmul.mubr.f32.gmra.mrb[0].mxu0 %v1802
        %v1804 = vpop.f32.mrb[0].mxu0
        %v1805 = vadd.f32 0.0, %v1804
        %v1806 = vpop.f32.mrb[0].mxu0
        %v1807 = vadd.f32 0.0, %v1806
        %1808 = vmatprep.mubr.f32.mxu0 0.0
        %v1809 = vand.u32 %v647, 4294901760
        %v1810 = vsub.f32 %v647, %v1809
        %v1811 = vand.u32 %v1810, 4294901760
        %v1812 = vsub.f32 %v1810, %v1811
        %v1813 = vand.u32 %v1812, 4294901760
        %1814 = vmatmul.mubr.f32.gmra.mrb[0].mxu0 %v1813
        %v1815 = vpop.f32.mrb[0].mxu0
        %v1816 = vadd.f32 0.0, %v1815
        %v1817 = vpop.f32.mrb[0].mxu0
        %v1818 = vadd.f32 0.0, %v1817
        %1819 = vdwg.mxu0
        %v1820 = vand.u32 %v611, 4294901760
        %v1821 = vsub.f32 %v611, %v1820
        %v1822 = vand.u32 %v1821, 4294901760
        %v1823 = vsub.f32 %v1821, %v1822
        %v1824 = vand.u32 %v1823, 4294901760
        %1825 = vmatprep.subr.mxu0 %v1824
        %v1826 = vand.u32 %v610, 4294901760
        %v1827 = vsub.f32 %v610, %v1826
        %v1828 = vand.u32 %v1827, 4294901760
        %v1829 = vsub.f32 %v1827, %v1828
        %v1830 = vand.u32 %v1829, 4294901760
        %1831 = vmatpush1.msra.mxu0 %v1830
        %v1832 = vand.u32 %v629, 4294901760
        %v1833 = vsub.f32 %v629, %v1832
        %v1834 = vand.u32 %v1833, 4294901760
        %v1835 = vsub.f32 %v1833, %v1834
        %v1836 = vand.u32 %v1835, 4294901760
        %1837 = vmatprep.subr.mxu0 %v1836
        %v1838 = vand.u32 %v628, 4294901760
        %v1839 = vsub.f32 %v628, %v1838
        %v1840 = vand.u32 %v1839, 4294901760
        %v1841 = vsub.f32 %v1839, %v1840
        %v1842 = vand.u32 %v1841, 4294901760
        %1843 = vmatpush1.msra.mxu0 %v1842
        %1844 = vmatprep.subr.mxu0 0.0
        %1845 = vmatpush1.msra.mxu0 0.0
        %1846 = vmatprep.subr.mxu0 0.0
        %1847 = vmatpush1.msra.mxu0 0.0
        %1848 = vmatprep.subr.mxu0 0.0
        %1849 = vmatpush1.msra.mxu0 0.0
        %1850 = vmatprep.subr.mxu0 0.0
        %1851 = vmatpush1.msra.mxu0 0.0
        %1852 = vmatprep.subr.mxu0 0.0
        %1853 = vmatpush1.msra.mxu0 0.0
        %1854 = vmatprep.subr.mxu0 0.0
        %1855 = vmatpush1.msra.mxu0 0.0
        %1856 = vmatprep.subr.mxu0 0.0
        %1857 = vmatpush1.msra.mxu0 0.0
        %1858 = vmatprep.subr.mxu0 0.0
        %1859 = vmatpush1.msra.mxu0 0.0
        %1860 = vmatprep.subr.mxu0 0.0
        %1861 = vmatpush1.msra.mxu0 0.0
        %1862 = vmatprep.subr.mxu0 0.0
        %1863 = vmatpush1.msra.mxu0 0.0
        %1864 = vmatprep.subr.mxu0 0.0
        %1865 = vmatpush1.msra.mxu0 0.0
        %1866 = vmatprep.subr.mxu0 0.0
        %1867 = vmatpush1.msra.mxu0 0.0
        %1868 = vmatprep.subr.mxu0 0.0
        %1869 = vmatpush1.msra.mxu0 0.0
        %1870 = vmatprep.subr.mxu0 0.0
        %1871 = vmatpush1.msra.mxu0 0.0
        %1872 = vmatprep.subr.mxu0 0.0
        %1873 = vmatpush1.msra.mxu0 0.0
        %1874 = vmatprep.subr.mxu0 0.0
        %1875 = vmatpush1.msra.mxu0 0.0
        %1876 = vmatprep.subr.mxu0 0.0
        %1877 = vmatpush1.msra.mxu0 0.0
        %1878 = vmatprep.subr.mxu0 0.0
        %1879 = vmatpush1.msra.mxu0 0.0
        %1880 = vmatprep.subr.mxu0 0.0
        %1881 = vmatpush1.msra.mxu0 0.0
        %1882 = vmatprep.subr.mxu0 0.0
        %1883 = vmatpush1.msra.mxu0 0.0
        %1884 = vmatprep.subr.mxu0 0.0
        %1885 = vmatpush1.msra.mxu0 0.0
        %1886 = vmatprep.subr.mxu0 0.0
        %1887 = vmatpush1.msra.mxu0 0.0
        %1888 = vmatprep.subr.mxu0 0.0
        %1889 = vmatpush1.msra.mxu0 0.0
        %1890 = vmatprep.subr.mxu0 0.0
        %1891 = vmatpush1.msra.mxu0 0.0
        %1892 = vmatprep.subr.mxu0 0.0
        %1893 = vmatpush1.msra.mxu0 0.0
        %1894 = vmatprep.subr.mxu0 0.0
        %1895 = vmatpush1.msra.mxu0 0.0
        %1896 = vmatprep.subr.mxu0 0.0
        %1897 = vmatpush1.msra.mxu0 0.0
        %1898 = vmatprep.subr.mxu0 0.0
        %1899 = vmatpush1.msra.mxu0 0.0
        %1900 = vmatprep.subr.mxu0 0.0
        %1901 = vmatpush1.msra.mxu0 0.0
        %1902 = vmatprep.subr.mxu0 0.0
        %1903 = vmatpush1.msra.mxu0 0.0
        %1904 = vmatprep.mubr.f32.mxu0 0.0
        %v1905 = vand.u32 %v644, 4294901760
        %1906 = vmatmul.mubr.f32.gmra.mrb[0].mxu0 %v1905
        %v1907 = vpop.f32.mrb[0].mxu0
        %v1908 = vadd.f32 %v1805, %v1907
        %v1909 = vpop.f32.mrb[0].mxu0
        %v1910 = vadd.f32 %v1807, %v1909
        %1911 = vmatprep.mubr.f32.mxu0 0.0
        %v1912 = vand.u32 %v647, 4294901760
        %1913 = vmatmul.mubr.f32.gmra.mrb[0].mxu0 %v1912
        %v1914 = vpop.f32.mrb[0].mxu0
        %v1915 = vadd.f32 %v1816, %v1914
        %v1916 = vpop.f32.mrb[0].mxu0
        %v1917 = vadd.f32 %v1818, %v1916
        %1918 = vdwg.mxu0
        %v1919 = vand.u32 %v611, 4294901760
        %v1920 = vsub.f32 %v611, %v1919
        %1921 = vmatprep.subr.mxu0 %v1920
        %v1922 = vand.u32 %v610, 4294901760
        %v1923 = vsub.f32 %v610, %v1922
        %1924 = vmatpush1.msra.mxu0 %v1923
        %v1925 = vand.u32 %v629, 4294901760
        %v1926 = vsub.f32 %v629, %v1925
        %1927 = vmatprep.subr.mxu0 %v1926
        %v1928 = vand.u32 %v628, 4294901760
        %v1929 = vsub.f32 %v628, %v1928
        %1930 = vmatpush1.msra.mxu0 %v1929
        %1931 = vmatprep.subr.mxu0 0.0
        %1932 = vmatpush1.msra.mxu0 0.0
        %1933 = vmatprep.subr.mxu0 0.0
        %1934 = vmatpush1.msra.mxu0 0.0
        %1935 = vmatprep.subr.mxu0 0.0
        %1936 = vmatpush1.msra.mxu0 0.0
        %1937 = vmatprep.subr.mxu0 0.0
        %1938 = vmatpush1.msra.mxu0 0.0
        %1939 = vmatprep.subr.mxu0 0.0
        %1940 = vmatpush1.msra.mxu0 0.0
        %1941 = vmatprep.subr.mxu0 0.0
        %1942 = vmatpush1.msra.mxu0 0.0
        %1943 = vmatprep.subr.mxu0 0.0
        %1944 = vmatpush1.msra.mxu0 0.0
        %1945 = vmatprep.subr.mxu0 0.0
        %1946 = vmatpush1.msra.mxu0 0.0
        %1947 = vmatprep.subr.mxu0 0.0
        %1948 = vmatpush1.msra.mxu0 0.0
        %1949 = vmatprep.subr.mxu0 0.0
        %1950 = vmatpush1.msra.mxu0 0.0
        %1951 = vmatprep.subr.mxu0 0.0
        %1952 = vmatpush1.msra.mxu0 0.0
        %1953 = vmatprep.subr.mxu0 0.0
        %1954 = vmatpush1.msra.mxu0 0.0
        %1955 = vmatprep.subr.mxu0 0.0
        %1956 = vmatpush1.msra.mxu0 0.0
        %1957 = vmatprep.subr.mxu0 0.0
        %1958 = vmatpush1.msra.mxu0 0.0
        %1959 = vmatprep.subr.mxu0 0.0
        %1960 = vmatpush1.msra.mxu0 0.0
        %1961 = vmatprep.subr.mxu0 0.0
        %1962 = vmatpush1.msra.mxu0 0.0
        %1963 = vmatprep.subr.mxu0 0.0
        %1964 = vmatpush1.msra.mxu0 0.0
        %1965 = vmatprep.subr.mxu0 0.0
        %1966 = vmatpush1.msra.mxu0 0.0
        %1967 = vmatprep.subr.mxu0 0.0
        %1968 = vmatpush1.msra.mxu0 0.0
        %1969 = vmatprep.subr.mxu0 0.0
        %1970 = vmatpush1.msra.mxu0 0.0
        %1971 = vmatprep.subr.mxu0 0.0
        %1972 = vmatpush1.msra.mxu0 0.0
        %1973 = vmatprep.subr.mxu0 0.0
        %1974 = vmatpush1.msra.mxu0 0.0
        %1975 = vmatprep.subr.mxu0 0.0
        %1976 = vmatpush1.msra.mxu0 0.0
        %1977 = vmatprep.subr.mxu0 0.0
        %1978 = vmatpush1.msra.mxu0 0.0
        %1979 = vmatprep.subr.mxu0 0.0
        %1980 = vmatpush1.msra.mxu0 0.0
        %1981 = vmatprep.subr.mxu0 0.0
        %1982 = vmatpush1.msra.mxu0 0.0
        %1983 = vmatprep.subr.mxu0 0.0
        %1984 = vmatpush1.msra.mxu0 0.0
        %1985 = vmatprep.subr.mxu0 0.0
        %1986 = vmatpush1.msra.mxu0 0.0
        %1987 = vmatprep.subr.mxu0 0.0
        %1988 = vmatpush1.msra.mxu0 0.0
        %1989 = vmatprep.subr.mxu0 0.0
        %1990 = vmatpush1.msra.mxu0 0.0
        %1991 = vmatprep.mubr.f32.mxu0 0.0
        %v1992 = vand.u32 %v644, 4294901760
        %v1993 = vsub.f32 %v644, %v1992
        %1994 = vmatmul.mubr.f32.gmra.mrb[0].mxu0 %v1993
        %v1995 = vpop.f32.mrb[0].mxu0
        %v1996 = vadd.f32 %v1908, %v1995
        %v1997 = vpop.f32.mrb[0].mxu0
        %v1998 = vadd.f32 %v1910, %v1997
        %1999 = vmatprep.mubr.f32.mxu0 0.0
        %v2000 = vand.u32 %v647, 4294901760
        %v2001 = vsub.f32 %v647, %v2000
        %2002 = vmatmul.mubr.f32.gmra.mrb[0].mxu0 %v2001
        %v2003 = vpop.f32.mrb[0].mxu0
        %v2004 = vadd.f32 %v1915, %v2003
        %v2005 = vpop.f32.mrb[0].mxu0
        %v2006 = vadd.f32 %v1917, %v2005
        %2007 = vdwg.mxu0
        %v2008 = vand.u32 %v611, 4294901760
        %2009 = vmatprep.subr.mxu0 %v2008
        %v2010 = vand.u32 %v610, 4294901760
        %2011 = vmatpush1.msra.mxu0 %v2010
        %v2012 = vand.u32 %v629, 4294901760
        %2013 = vmatprep.subr.mxu0 %v2012
        %v2014 = vand.u32 %v628, 4294901760
        %2015 = vmatpush1.msra.mxu0 %v2014
        %2016 = vmatprep.subr.mxu0 0.0
        %2017 = vmatpush1.msra.mxu0 0.0
        %2018 = vmatprep.subr.mxu0 0.0
        %2019 = vmatpush1.msra.mxu0 0.0
        %2020 = vmatprep.subr.mxu0 0.0
        %2021 = vmatpush1.msra.mxu0 0.0
        %2022 = vmatprep.subr.mxu0 0.0
        %2023 = vmatpush1.msra.mxu0 0.0
        %2024 = vmatprep.subr.mxu0 0.0
        %2025 = vmatpush1.msra.mxu0 0.0
        %2026 = vmatprep.subr.mxu0 0.0
        %2027 = vmatpush1.msra.mxu0 0.0
        %2028 = vmatprep.subr.mxu0 0.0
        %2029 = vmatpush1.msra.mxu0 0.0
        %2030 = vmatprep.subr.mxu0 0.0
        %2031 = vmatpush1.msra.mxu0 0.0
        %2032 = vmatprep.subr.mxu0 0.0
        %2033 = vmatpush1.msra.mxu0 0.0
        %2034 = vmatprep.subr.mxu0 0.0
        %2035 = vmatpush1.msra.mxu0 0.0
        %2036 = vmatprep.subr.mxu0 0.0
        %2037 = vmatpush1.msra.mxu0 0.0
        %2038 = vmatprep.subr.mxu0 0.0
        %2039 = vmatpush1.msra.mxu0 0.0
        %2040 = vmatprep.subr.mxu0 0.0
        %2041 = vmatpush1.msra.mxu0 0.0
        %2042 = vmatprep.subr.mxu0 0.0
        %2043 = vmatpush1.msra.mxu0 0.0
        %2044 = vmatprep.subr.mxu0 0.0
        %2045 = vmatpush1.msra.mxu0 0.0
        %2046 = vmatprep.subr.mxu0 0.0
        %2047 = vmatpush1.msra.mxu0 0.0
        %2048 = vmatprep.subr.mxu0 0.0
        %2049 = vmatpush1.msra.mxu0 0.0
        %2050 = vmatprep.subr.mxu0 0.0
        %2051 = vmatpush1.msra.mxu0 0.0
        %2052 = vmatprep.subr.mxu0 0.0
        %2053 = vmatpush1.msra.mxu0 0.0
        %2054 = vmatprep.subr.mxu0 0.0
        %2055 = vmatpush1.msra.mxu0 0.0
        %2056 = vmatprep.subr.mxu0 0.0
        %2057 = vmatpush1.msra.mxu0 0.0
        %2058 = vmatprep.subr.mxu0 0.0
        %2059 = vmatpush1.msra.mxu0 0.0
        %2060 = vmatprep.subr.mxu0 0.0
        %2061 = vmatpush1.msra.mxu0 0.0
        %2062 = vmatprep.subr.mxu0 0.0
        %2063 = vmatpush1.msra.mxu0 0.0
        %2064 = vmatprep.subr.mxu0 0.0
        %2065 = vmatpush1.msra.mxu0 0.0
        %2066 = vmatprep.subr.mxu0 0.0
        %2067 = vmatpush1.msra.mxu0 0.0
        %2068 = vmatprep.subr.mxu0 0.0
        %2069 = vmatpush1.msra.mxu0 0.0
        %2070 = vmatprep.subr.mxu0 0.0
        %2071 = vmatpush1.msra.mxu0 0.0
        %2072 = vmatprep.subr.mxu0 0.0
        %2073 = vmatpush1.msra.mxu0 0.0
        %2074 = vmatprep.subr.mxu0 0.0
        %2075 = vmatpush1.msra.mxu0 0.0
        %2076 = vmatprep.mubr.f32.mxu0 0.0
        %v2077 = vand.u32 %v644, 4294901760
        %v2078 = vsub.f32 %v644, %v2077
        %v2079 = vand.u32 %v2078, 4294901760
        %2080 = vmatmul.mubr.f32.gmra.mrb[0].mxu0 %v2079
        %v2081 = vpop.f32.mrb[0].mxu0
        %v2082 = vadd.f32 %v1996, %v2081
        %v2083 = vpop.f32.mrb[0].mxu0
        %v2084 = vadd.f32 %v1998, %v2083
        %2085 = vmatprep.mubr.f32.mxu0 0.0
        %v2086 = vand.u32 %v647, 4294901760
        %v2087 = vsub.f32 %v647, %v2086
        %v2088 = vand.u32 %v2087, 4294901760
        %2089 = vmatmul.mubr.f32.gmra.mrb[0].mxu0 %v2088
        %v2090 = vpop.f32.mrb[0].mxu0
        %v2091 = vadd.f32 %v2004, %v2090
        %v2092 = vpop.f32.mrb[0].mxu0
        %v2093 = vadd.f32 %v2006, %v2092
        %2094 = vdwg.mxu0
        %v2095 = vand.u32 %v611, 4294901760
        %v2096 = vsub.f32 %v611, %v2095
        %v2097 = vand.u32 %v2096, 4294901760
        %2098 = vmatprep.subr.mxu0 %v2097
        %v2099 = vand.u32 %v610, 4294901760
        %v2100 = vsub.f32 %v610, %v2099
        %v2101 = vand.u32 %v2100, 4294901760
        %2102 = vmatpush1.msra.mxu0 %v2101
        %v2103 = vand.u32 %v629, 4294901760
        %v2104 = vsub.f32 %v629, %v2103
        %v2105 = vand.u32 %v2104, 4294901760
        %2106 = vmatprep.subr.mxu0 %v2105
        %v2107 = vand.u32 %v628, 4294901760
        %v2108 = vsub.f32 %v628, %v2107
        %v2109 = vand.u32 %v2108, 4294901760
        %2110 = vmatpush1.msra.mxu0 %v2109
        %2111 = vmatprep.subr.mxu0 0.0
        %2112 = vmatpush1.msra.mxu0 0.0
        %2113 = vmatprep.subr.mxu0 0.0
        %2114 = vmatpush1.msra.mxu0 0.0
        %2115 = vmatprep.subr.mxu0 0.0
        %2116 = vmatpush1.msra.mxu0 0.0
        %2117 = vmatprep.subr.mxu0 0.0
        %2118 = vmatpush1.msra.mxu0 0.0
        %2119 = vmatprep.subr.mxu0 0.0
        %2120 = vmatpush1.msra.mxu0 0.0
        %2121 = vmatprep.subr.mxu0 0.0
        %2122 = vmatpush1.msra.mxu0 0.0
        %2123 = vmatprep.subr.mxu0 0.0
        %2124 = vmatpush1.msra.mxu0 0.0
        %2125 = vmatprep.subr.mxu0 0.0
        %2126 = vmatpush1.msra.mxu0 0.0
        %2127 = vmatprep.subr.mxu0 0.0
        %2128 = vmatpush1.msra.mxu0 0.0
        %2129 = vmatprep.subr.mxu0 0.0
        %2130 = vmatpush1.msra.mxu0 0.0
        %2131 = vmatprep.subr.mxu0 0.0
        %2132 = vmatpush1.msra.mxu0 0.0
        %2133 = vmatprep.subr.mxu0 0.0
        %2134 = vmatpush1.msra.mxu0 0.0
        %2135 = vmatprep.subr.mxu0 0.0
        %2136 = vmatpush1.msra.mxu0 0.0
        %2137 = vmatprep.subr.mxu0 0.0
        %2138 = vmatpush1.msra.mxu0 0.0
        %2139 = vmatprep.subr.mxu0 0.0
        %2140 = vmatpush1.msra.mxu0 0.0
        %2141 = vmatprep.subr.mxu0 0.0
        %2142 = vmatpush1.msra.mxu0 0.0
        %2143 = vmatprep.subr.mxu0 0.0
        %2144 = vmatpush1.msra.mxu0 0.0
        %2145 = vmatprep.subr.mxu0 0.0
        %2146 = vmatpush1.msra.mxu0 0.0
        %2147 = vmatprep.subr.mxu0 0.0
        %2148 = vmatpush1.msra.mxu0 0.0
        %2149 = vmatprep.subr.mxu0 0.0
        %2150 = vmatpush1.msra.mxu0 0.0
        %2151 = vmatprep.subr.mxu0 0.0
        %2152 = vmatpush1.msra.mxu0 0.0
        %2153 = vmatprep.subr.mxu0 0.0
        %2154 = vmatpush1.msra.mxu0 0.0
        %2155 = vmatprep.subr.mxu0 0.0
        %2156 = vmatpush1.msra.mxu0 0.0
        %2157 = vmatprep.subr.mxu0 0.0
        %2158 = vmatpush1.msra.mxu0 0.0
        %2159 = vmatprep.subr.mxu0 0.0
        %2160 = vmatpush1.msra.mxu0 0.0
        %2161 = vmatprep.subr.mxu0 0.0
        %2162 = vmatpush1.msra.mxu0 0.0
        %2163 = vmatprep.subr.mxu0 0.0
        %2164 = vmatpush1.msra.mxu0 0.0
        %2165 = vmatprep.subr.mxu0 0.0
        %2166 = vmatpush1.msra.mxu0 0.0
        %2167 = vmatprep.subr.mxu0 0.0
        %2168 = vmatpush1.msra.mxu0 0.0
        %2169 = vmatprep.subr.mxu0 0.0
        %2170 = vmatpush1.msra.mxu0 0.0
        %2171 = vmatprep.mubr.f32.mxu0 0.0
        %v2172 = vand.u32 %v644, 4294901760
        %2173 = vmatmul.mubr.f32.gmra.mrb[0].mxu0 %v2172
        %v2174 = vpop.f32.mrb[0].mxu0
        %v2175 = vadd.f32 %v2082, %v2174
        %v2176 = vpop.f32.mrb[0].mxu0
        %v2177 = vadd.f32 %v2084, %v2176
        %2178 = vmatprep.mubr.f32.mxu0 0.0
        %v2179 = vand.u32 %v647, 4294901760
        %2180 = vmatmul.mubr.f32.gmra.mrb[0].mxu0 %v2179
        %v2181 = vpop.f32.mrb[0].mxu0
        %v2182 = vadd.f32 %v2091, %v2181
        %v2183 = vpop.f32.mrb[0].mxu0
        %v2184 = vadd.f32 %v2093, %v2183
        %2185 = vdwg.mxu0
        %v2186 = vand.u32 %v611, 4294901760
        %2187 = vmatprep.subr.mxu0 %v2186
        %v2188 = vand.u32 %v610, 4294901760
        %2189 = vmatpush1.msra.mxu0 %v2188
        %v2190 = vand.u32 %v629, 4294901760
        %2191 = vmatprep.subr.mxu0 %v2190
        %v2192 = vand.u32 %v628, 4294901760
        %2193 = vmatpush1.msra.mxu0 %v2192
        %2194 = vmatprep.subr.mxu0 0.0
        %2195 = vmatpush1.msra.mxu0 0.0
        %2196 = vmatprep.subr.mxu0 0.0
        %2197 = vmatpush1.msra.mxu0 0.0
        %2198 = vmatprep.subr.mxu0 0.0
        %2199 = vmatpush1.msra.mxu0 0.0
        %2200 = vmatprep.subr.mxu0 0.0
        %2201 = vmatpush1.msra.mxu0 0.0
        %2202 = vmatprep.subr.mxu0 0.0
        %2203 = vmatpush1.msra.mxu0 0.0
        %2204 = vmatprep.subr.mxu0 0.0
        %2205 = vmatpush1.msra.mxu0 0.0
        %2206 = vmatprep.subr.mxu0 0.0
        %2207 = vmatpush1.msra.mxu0 0.0
        %2208 = vmatprep.subr.mxu0 0.0
        %2209 = vmatpush1.msra.mxu0 0.0
        %2210 = vmatprep.subr.mxu0 0.0
        %2211 = vmatpush1.msra.mxu0 0.0
        %2212 = vmatprep.subr.mxu0 0.0
        %2213 = vmatpush1.msra.mxu0 0.0
        %2214 = vmatprep.subr.mxu0 0.0
        %2215 = vmatpush1.msra.mxu0 0.0
        %2216 = vmatprep.subr.mxu0 0.0
        %2217 = vmatpush1.msra.mxu0 0.0
        %2218 = vmatprep.subr.mxu0 0.0
        %2219 = vmatpush1.msra.mxu0 0.0
        %2220 = vmatprep.subr.mxu0 0.0
        %2221 = vmatpush1.msra.mxu0 0.0
        %2222 = vmatprep.subr.mxu0 0.0
        %2223 = vmatpush1.msra.mxu0 0.0
        %2224 = vmatprep.subr.mxu0 0.0
        %2225 = vmatpush1.msra.mxu0 0.0
        %2226 = vmatprep.subr.mxu0 0.0
        %2227 = vmatpush1.msra.mxu0 0.0
        %2228 = vmatprep.subr.mxu0 0.0
        %2229 = vmatpush1.msra.mxu0 0.0
        %2230 = vmatprep.subr.mxu0 0.0
        %2231 = vmatpush1.msra.mxu0 0.0
        %2232 = vmatprep.subr.mxu0 0.0
        %2233 = vmatpush1.msra.mxu0 0.0
        %2234 = vmatprep.subr.mxu0 0.0
        %2235 = vmatpush1.msra.mxu0 0.0
        %2236 = vmatprep.subr.mxu0 0.0
        %2237 = vmatpush1.msra.mxu0 0.0
        %2238 = vmatprep.subr.mxu0 0.0
        %2239 = vmatpush1.msra.mxu0 0.0
        %2240 = vmatprep.subr.mxu0 0.0
        %2241 = vmatpush1.msra.mxu0 0.0
        %2242 = vmatprep.subr.mxu0 0.0
        %2243 = vmatpush1.msra.mxu0 0.0
        %2244 = vmatprep.subr.mxu0 0.0
        %2245 = vmatpush1.msra.mxu0 0.0
        %2246 = vmatprep.subr.mxu0 0.0
        %2247 = vmatpush1.msra.mxu0 0.0
        %2248 = vmatprep.subr.mxu0 0.0
        %2249 = vmatpush1.msra.mxu0 0.0
        %2250 = vmatprep.subr.mxu0 0.0
        %2251 = vmatpush1.msra.mxu0 0.0
        %2252 = vmatprep.subr.mxu0 0.0
        %2253 = vmatpush1.msra.mxu0 0.0
        %2254 = vmatprep.mubr.f32.mxu0 0.0
        %v2255 = vand.u32 %v644, 4294901760
        %2256 = vmatmul.mubr.f32.gmra.mrb[0].mxu0 %v2255
        %v2257 = vpop.f32.mrb[0].mxu0
        %v2258 = vadd.f32 %v2175, %v2257
        %v2259 = vpop.f32.mrb[0].mxu0
        %v2260 = vadd.f32 %v2177, %v2259
        %2261 = vmatprep.mubr.f32.mxu0 0.0
        %v2262 = vand.u32 %v647, 4294901760
        %2263 = vmatmul.mubr.f32.gmra.mrb[0].mxu0 %v2262
        %v2264 = vpop.f32.mrb[0].mxu0
        %v2265 = vadd.f32 %v2182, %v2264
        %v2266 = vpop.f32.mrb[0].mxu0
        %v2267 = vadd.f32 %v2184, %v2266
        %2268 = vdwg.mxu0
        %v2269 = vand.u32 %v613, 4294901760
        %2270 = vmatprep.subr.mxu0 %v2269
        %v2271 = vand.u32 %v612, 4294901760
        %2272 = vmatpush1.msra.mxu0 %v2271
        %v2273 = vand.u32 %v631, 4294901760
        %2274 = vmatprep.subr.mxu0 %v2273
        %v2275 = vand.u32 %v630, 4294901760
        %2276 = vmatpush1.msra.mxu0 %v2275
        %2277 = vmatprep.subr.mxu0 0.0
        %2278 = vmatpush1.msra.mxu0 0.0
        %2279 = vmatprep.subr.mxu0 0.0
        %2280 = vmatpush1.msra.mxu0 0.0
        %2281 = vmatprep.subr.mxu0 0.0
        %2282 = vmatpush1.msra.mxu0 0.0
        %2283 = vmatprep.subr.mxu0 0.0
        %2284 = vmatpush1.msra.mxu0 0.0
        %2285 = vmatprep.subr.mxu0 0.0
        %2286 = vmatpush1.msra.mxu0 0.0
        %2287 = vmatprep.subr.mxu0 0.0
        %2288 = vmatpush1.msra.mxu0 0.0
        %2289 = vmatprep.subr.mxu0 0.0
        %2290 = vmatpush1.msra.mxu0 0.0
        %2291 = vmatprep.subr.mxu0 0.0
        %2292 = vmatpush1.msra.mxu0 0.0
        %2293 = vmatprep.subr.mxu0 0.0
        %2294 = vmatpush1.msra.mxu0 0.0
        %2295 = vmatprep.subr.mxu0 0.0
        %2296 = vmatpush1.msra.mxu0 0.0
        %2297 = vmatprep.subr.mxu0 0.0
        %2298 = vmatpush1.msra.mxu0 0.0
        %2299 = vmatprep.subr.mxu0 0.0
        %2300 = vmatpush1.msra.mxu0 0.0
        %2301 = vmatprep.subr.mxu0 0.0
        %2302 = vmatpush1.msra.mxu0 0.0
        %2303 = vmatprep.subr.mxu0 0.0
        %2304 = vmatpush1.msra.mxu0 0.0
        %2305 = vmatprep.subr.mxu0 0.0
        %2306 = vmatpush1.msra.mxu0 0.0
        %2307 = vmatprep.subr.mxu0 0.0
        %2308 = vmatpush1.msra.mxu0 0.0
        %2309 = vmatprep.subr.mxu0 0.0
        %2310 = vmatpush1.msra.mxu0 0.0
        %2311 = vmatprep.subr.mxu0 0.0
        %2312 = vmatpush1.msra.mxu0 0.0
        %2313 = vmatprep.subr.mxu0 0.0
        %2314 = vmatpush1.msra.mxu0 0.0
        %2315 = vmatprep.subr.mxu0 0.0
        %2316 = vmatpush1.msra.mxu0 0.0
        %2317 = vmatprep.subr.mxu0 0.0
        %2318 = vmatpush1.msra.mxu0 0.0
        %2319 = vmatprep.subr.mxu0 0.0
        %2320 = vmatpush1.msra.mxu0 0.0
        %2321 = vmatprep.subr.mxu0 0.0
        %2322 = vmatpush1.msra.mxu0 0.0
        %2323 = vmatprep.subr.mxu0 0.0
        %2324 = vmatpush1.msra.mxu0 0.0
        %2325 = vmatprep.subr.mxu0 0.0
        %2326 = vmatpush1.msra.mxu0 0.0
        %2327 = vmatprep.subr.mxu0 0.0
        %2328 = vmatpush1.msra.mxu0 0.0
        %2329 = vmatprep.subr.mxu0 0.0
        %2330 = vmatpush1.msra.mxu0 0.0
        %2331 = vmatprep.subr.mxu0 0.0
        %2332 = vmatpush1.msra.mxu0 0.0
        %2333 = vmatprep.subr.mxu0 0.0
        %2334 = vmatpush1.msra.mxu0 0.0
        %2335 = vmatprep.subr.mxu0 0.0
        %2336 = vmatpush1.msra.mxu0 0.0
        %2337 = vmatprep.mubr.f32.mxu0 0.0
        %v2338 = vand.u32 %v644, 4294901760
        %v2339 = vsub.f32 %v644, %v2338
        %v2340 = vand.u32 %v2339, 4294901760
        %v2341 = vsub.f32 %v2339, %v2340
        %v2342 = vand.u32 %v2341, 4294901760
        %2343 = vmatmul.mubr.f32.gmra.mrb[0].mxu0 %v2342
        %v2344 = vpop.f32.mrb[0].mxu0
        %v2345 = vadd.f32 0.0, %v2344
        %v2346 = vpop.f32.mrb[0].mxu0
        %v2347 = vadd.f32 0.0, %v2346
        %2348 = vmatprep.mubr.f32.mxu0 0.0
        %v2349 = vand.u32 %v647, 4294901760
        %v2350 = vsub.f32 %v647, %v2349
        %v2351 = vand.u32 %v2350, 4294901760
        %v2352 = vsub.f32 %v2350, %v2351
        %v2353 = vand.u32 %v2352, 4294901760
        %2354 = vmatmul.mubr.f32.gmra.mrb[0].mxu0 %v2353
        %v2355 = vpop.f32.mrb[0].mxu0
        %v2356 = vadd.f32 0.0, %v2355
        %v2357 = vpop.f32.mrb[0].mxu0
        %v2358 = vadd.f32 0.0, %v2357
        %2359 = vdwg.mxu0
        %v2360 = vand.u32 %v613, 4294901760
        %v2361 = vsub.f32 %v613, %v2360
        %v2362 = vand.u32 %v2361, 4294901760
        %v2363 = vsub.f32 %v2361, %v2362
        %v2364 = vand.u32 %v2363, 4294901760
        %2365 = vmatprep.subr.mxu0 %v2364
        %v2366 = vand.u32 %v612, 4294901760
        %v2367 = vsub.f32 %v612, %v2366
        %v2368 = vand.u32 %v2367, 4294901760
        %v2369 = vsub.f32 %v2367, %v2368
        %v2370 = vand.u32 %v2369, 4294901760
        %2371 = vmatpush1.msra.mxu0 %v2370
        %v2372 = vand.u32 %v631, 4294901760
        %v2373 = vsub.f32 %v631, %v2372
        %v2374 = vand.u32 %v2373, 4294901760
        %v2375 = vsub.f32 %v2373, %v2374
        %v2376 = vand.u32 %v2375, 4294901760
        %2377 = vmatprep.subr.mxu0 %v2376
        %v2378 = vand.u32 %v630, 4294901760
        %v2379 = vsub.f32 %v630, %v2378
        %v2380 = vand.u32 %v2379, 4294901760
        %v2381 = vsub.f32 %v2379, %v2380
        %v2382 = vand.u32 %v2381, 4294901760
        %2383 = vmatpush1.msra.mxu0 %v2382
        %2384 = vmatprep.subr.mxu0 0.0
        %2385 = vmatpush1.msra.mxu0 0.0
        %2386 = vmatprep.subr.mxu0 0.0
        %2387 = vmatpush1.msra.mxu0 0.0
        %2388 = vmatprep.subr.mxu0 0.0
        %2389 = vmatpush1.msra.mxu0 0.0
        %2390 = vmatprep.subr.mxu0 0.0
        %2391 = vmatpush1.msra.mxu0 0.0
        %2392 = vmatprep.subr.mxu0 0.0
        %2393 = vmatpush1.msra.mxu0 0.0
        %2394 = vmatprep.subr.mxu0 0.0
        %2395 = vmatpush1.msra.mxu0 0.0
        %2396 = vmatprep.subr.mxu0 0.0
        %2397 = vmatpush1.msra.mxu0 0.0
        %2398 = vmatprep.subr.mxu0 0.0
        %2399 = vmatpush1.msra.mxu0 0.0
        %2400 = vmatprep.subr.mxu0 0.0
        %2401 = vmatpush1.msra.mxu0 0.0
        %2402 = vmatprep.subr.mxu0 0.0
        %2403 = vmatpush1.msra.mxu0 0.0
        %2404 = vmatprep.subr.mxu0 0.0
        %2405 = vmatpush1.msra.mxu0 0.0
        %2406 = vmatprep.subr.mxu0 0.0
        %2407 = vmatpush1.msra.mxu0 0.0
        %2408 = vmatprep.subr.mxu0 0.0
        %2409 = vmatpush1.msra.mxu0 0.0
        %2410 = vmatprep.subr.mxu0 0.0
        %2411 = vmatpush1.msra.mxu0 0.0
        %2412 = vmatprep.subr.mxu0 0.0
        %2413 = vmatpush1.msra.mxu0 0.0
        %2414 = vmatprep.subr.mxu0 0.0
        %2415 = vmatpush1.msra.mxu0 0.0
        %2416 = vmatprep.subr.mxu0 0.0
        %2417 = vmatpush1.msra.mxu0 0.0
        %2418 = vmatprep.subr.mxu0 0.0
        %2419 = vmatpush1.msra.mxu0 0.0
        %2420 = vmatprep.subr.mxu0 0.0
        %2421 = vmatpush1.msra.mxu0 0.0
        %2422 = vmatprep.subr.mxu0 0.0
        %2423 = vmatpush1.msra.mxu0 0.0
        %2424 = vmatprep.subr.mxu0 0.0
        %2425 = vmatpush1.msra.mxu0 0.0
        %2426 = vmatprep.subr.mxu0 0.0
        %2427 = vmatpush1.msra.mxu0 0.0
        %2428 = vmatprep.subr.mxu0 0.0
        %2429 = vmatpush1.msra.mxu0 0.0
        %2430 = vmatprep.subr.mxu0 0.0
        %2431 = vmatpush1.msra.mxu0 0.0
        %2432 = vmatprep.subr.mxu0 0.0
        %2433 = vmatpush1.msra.mxu0 0.0
        %2434 = vmatprep.subr.mxu0 0.0
        %2435 = vmatpush1.msra.mxu0 0.0
        %2436 = vmatprep.subr.mxu0 0.0
        %2437 = vmatpush1.msra.mxu0 0.0
        %2438 = vmatprep.subr.mxu0 0.0
        %2439 = vmatpush1.msra.mxu0 0.0
        %2440 = vmatprep.subr.mxu0 0.0
        %2441 = vmatpush1.msra.mxu0 0.0
        %2442 = vmatprep.subr.mxu0 0.0
        %2443 = vmatpush1.msra.mxu0 0.0
        %2444 = vmatprep.mubr.f32.mxu0 0.0
        %v2445 = vand.u32 %v644, 4294901760
        %2446 = vmatmul.mubr.f32.gmra.mrb[0].mxu0 %v2445
        %v2447 = vpop.f32.mrb[0].mxu0
        %v2448 = vadd.f32 %v2345, %v2447
        %v2449 = vpop.f32.mrb[0].mxu0
        %v2450 = vadd.f32 %v2347, %v2449
        %2451 = vmatprep.mubr.f32.mxu0 0.0
        %v2452 = vand.u32 %v647, 4294901760
        %2453 = vmatmul.mubr.f32.gmra.mrb[0].mxu0 %v2452
        %v2454 = vpop.f32.mrb[0].mxu0
        %v2455 = vadd.f32 %v2356, %v2454
        %v2456 = vpop.f32.mrb[0].mxu0
        %v2457 = vadd.f32 %v2358, %v2456
        %2458 = vdwg.mxu0
        %v2459 = vand.u32 %v613, 4294901760
        %v2460 = vsub.f32 %v613, %v2459
        %2461 = vmatprep.subr.mxu0 %v2460
        %v2462 = vand.u32 %v612, 4294901760
        %v2463 = vsub.f32 %v612, %v2462
        %2464 = vmatpush1.msra.mxu0 %v2463
        %v2465 = vand.u32 %v631, 4294901760
        %v2466 = vsub.f32 %v631, %v2465
        %2467 = vmatprep.subr.mxu0 %v2466
        %v2468 = vand.u32 %v630, 4294901760
        %v2469 = vsub.f32 %v630, %v2468
        %2470 = vmatpush1.msra.mxu0 %v2469
        %2471 = vmatprep.subr.mxu0 0.0
        %2472 = vmatpush1.msra.mxu0 0.0
        %2473 = vmatprep.subr.mxu0 0.0
        %2474 = vmatpush1.msra.mxu0 0.0
        %2475 = vmatprep.subr.mxu0 0.0
        %2476 = vmatpush1.msra.mxu0 0.0
        %2477 = vmatprep.subr.mxu0 0.0
        %2478 = vmatpush1.msra.mxu0 0.0
        %2479 = vmatprep.subr.mxu0 0.0
        %2480 = vmatpush1.msra.mxu0 0.0
        %2481 = vmatprep.subr.mxu0 0.0
        %2482 = vmatpush1.msra.mxu0 0.0
        %2483 = vmatprep.subr.mxu0 0.0
        %2484 = vmatpush1.msra.mxu0 0.0
        %2485 = vmatprep.subr.mxu0 0.0
        %2486 = vmatpush1.msra.mxu0 0.0
        %2487 = vmatprep.subr.mxu0 0.0
        %2488 = vmatpush1.msra.mxu0 0.0
        %2489 = vmatprep.subr.mxu0 0.0
        %2490 = vmatpush1.msra.mxu0 0.0
        %2491 = vmatprep.subr.mxu0 0.0
        %2492 = vmatpush1.msra.mxu0 0.0
        %2493 = vmatprep.subr.mxu0 0.0
        %2494 = vmatpush1.msra.mxu0 0.0
        %2495 = vmatprep.subr.mxu0 0.0
        %2496 = vmatpush1.msra.mxu0 0.0
        %2497 = vmatprep.subr.mxu0 0.0
        %2498 = vmatpush1.msra.mxu0 0.0
        %2499 = vmatprep.subr.mxu0 0.0
        %2500 = vmatpush1.msra.mxu0 0.0
        %2501 = vmatprep.subr.mxu0 0.0
        %2502 = vmatpush1.msra.mxu0 0.0
        %2503 = vmatprep.subr.mxu0 0.0
        %2504 = vmatpush1.msra.mxu0 0.0
        %2505 = vmatprep.subr.mxu0 0.0
        %2506 = vmatpush1.msra.mxu0 0.0
        %2507 = vmatprep.subr.mxu0 0.0
        %2508 = vmatpush1.msra.mxu0 0.0
        %2509 = vmatprep.subr.mxu0 0.0
        %2510 = vmatpush1.msra.mxu0 0.0
        %2511 = vmatprep.subr.mxu0 0.0
        %2512 = vmatpush1.msra.mxu0 0.0
        %2513 = vmatprep.subr.mxu0 0.0
        %2514 = vmatpush1.msra.mxu0 0.0
        %2515 = vmatprep.subr.mxu0 0.0
        %2516 = vmatpush1.msra.mxu0 0.0
        %2517 = vmatprep.subr.mxu0 0.0
        %2518 = vmatpush1.msra.mxu0 0.0
        %2519 = vmatprep.subr.mxu0 0.0
        %2520 = vmatpush1.msra.mxu0 0.0
        %2521 = vmatprep.subr.mxu0 0.0
        %2522 = vmatpush1.msra.mxu0 0.0
        %2523 = vmatprep.subr.mxu0 0.0
        %2524 = vmatpush1.msra.mxu0 0.0
        %2525 = vmatprep.subr.mxu0 0.0
        %2526 = vmatpush1.msra.mxu0 0.0
        %2527 = vmatprep.subr.mxu0 0.0
        %2528 = vmatpush1.msra.mxu0 0.0
        %2529 = vmatprep.subr.mxu0 0.0
        %2530 = vmatpush1.msra.mxu0 0.0
        %2531 = vmatprep.mubr.f32.mxu0 0.0
        %v2532 = vand.u32 %v644, 4294901760
        %v2533 = vsub.f32 %v644, %v2532
        %2534 = vmatmul.mubr.f32.gmra.mrb[0].mxu0 %v2533
        %v2535 = vpop.f32.mrb[0].mxu0
        %v2536 = vadd.f32 %v2448, %v2535
        %v2537 = vpop.f32.mrb[0].mxu0
        %v2538 = vadd.f32 %v2450, %v2537
        %2539 = vmatprep.mubr.f32.mxu0 0.0
        %v2540 = vand.u32 %v647, 4294901760
        %v2541 = vsub.f32 %v647, %v2540
        %2542 = vmatmul.mubr.f32.gmra.mrb[0].mxu0 %v2541
        %v2543 = vpop.f32.mrb[0].mxu0
        %v2544 = vadd.f32 %v2455, %v2543
        %v2545 = vpop.f32.mrb[0].mxu0
        %v2546 = vadd.f32 %v2457, %v2545
        %2547 = vdwg.mxu0
        %v2548 = vand.u32 %v613, 4294901760
        %2549 = vmatprep.subr.mxu0 %v2548
        %v2550 = vand.u32 %v612, 4294901760
        %2551 = vmatpush1.msra.mxu0 %v2550
        %v2552 = vand.u32 %v631, 4294901760
        %2553 = vmatprep.subr.mxu0 %v2552
        %v2554 = vand.u32 %v630, 4294901760
        %2555 = vmatpush1.msra.mxu0 %v2554
        %2556 = vmatprep.subr.mxu0 0.0
        %2557 = vmatpush1.msra.mxu0 0.0
        %2558 = vmatprep.subr.mxu0 0.0
        %2559 = vmatpush1.msra.mxu0 0.0
        %2560 = vmatprep.subr.mxu0 0.0
        %2561 = vmatpush1.msra.mxu0 0.0
        %2562 = vmatprep.subr.mxu0 0.0
        %2563 = vmatpush1.msra.mxu0 0.0
        %2564 = vmatprep.subr.mxu0 0.0
        %2565 = vmatpush1.msra.mxu0 0.0
        %2566 = vmatprep.subr.mxu0 0.0
        %2567 = vmatpush1.msra.mxu0 0.0
        %2568 = vmatprep.subr.mxu0 0.0
        %2569 = vmatpush1.msra.mxu0 0.0
        %2570 = vmatprep.subr.mxu0 0.0
        %2571 = vmatpush1.msra.mxu0 0.0
        %2572 = vmatprep.subr.mxu0 0.0
        %2573 = vmatpush1.msra.mxu0 0.0
        %2574 = vmatprep.subr.mxu0 0.0
        %2575 = vmatpush1.msra.mxu0 0.0
        %2576 = vmatprep.subr.mxu0 0.0
        %2577 = vmatpush1.msra.mxu0 0.0
        %2578 = vmatprep.subr.mxu0 0.0
        %2579 = vmatpush1.msra.mxu0 0.0
        %2580 = vmatprep.subr.mxu0 0.0
        %2581 = vmatpush1.msra.mxu0 0.0
        %2582 = vmatprep.subr.mxu0 0.0
        %2583 = vmatpush1.msra.mxu0 0.0
        %2584 = vmatprep.subr.mxu0 0.0
        %2585 = vmatpush1.msra.mxu0 0.0
        %2586 = vmatprep.subr.mxu0 0.0
        %2587 = vmatpush1.msra.mxu0 0.0
        %2588 = vmatprep.subr.mxu0 0.0
        %2589 = vmatpush1.msra.mxu0 0.0
        %2590 = vmatprep.subr.mxu0 0.0
        %2591 = vmatpush1.msra.mxu0 0.0
        %2592 = vmatprep.subr.mxu0 0.0
        %2593 = vmatpush1.msra.mxu0 0.0
        %2594 = vmatprep.subr.mxu0 0.0
        %2595 = vmatpush1.msra.mxu0 0.0
        %2596 = vmatprep.subr.mxu0 0.0
        %2597 = vmatpush1.msra.mxu0 0.0
        %2598 = vmatprep.subr.mxu0 0.0
        %2599 = vmatpush1.msra.mxu0 0.0
        %2600 = vmatprep.subr.mxu0 0.0
        %2601 = vmatpush1.msra.mxu0 0.0
        %2602 = vmatprep.subr.mxu0 0.0
        %2603 = vmatpush1.msra.mxu0 0.0
        %2604 = vmatprep.subr.mxu0 0.0
        %2605 = vmatpush1.msra.mxu0 0.0
        %2606 = vmatprep.subr.mxu0 0.0
        %2607 = vmatpush1.msra.mxu0 0.0
        %2608 = vmatprep.subr.mxu0 0.0
        %2609 = vmatpush1.msra.mxu0 0.0
        %2610 = vmatprep.subr.mxu0 0.0
        %2611 = vmatpush1.msra.mxu0 0.0
        %2612 = vmatprep.subr.mxu0 0.0
        %2613 = vmatpush1.msra.mxu0 0.0
        %2614 = vmatprep.subr.mxu0 0.0
        %2615 = vmatpush1.msra.mxu0 0.0
        %2616 = vmatprep.mubr.f32.mxu0 0.0
        %v2617 = vand.u32 %v644, 4294901760
        %v2618 = vsub.f32 %v644, %v2617
        %v2619 = vand.u32 %v2618, 4294901760
        %2620 = vmatmul.mubr.f32.gmra.mrb[0].mxu0 %v2619
        %v2621 = vpop.f32.mrb[0].mxu0
        %v2622 = vadd.f32 %v2536, %v2621
        %v2623 = vpop.f32.mrb[0].mxu0
        %v2624 = vadd.f32 %v2538, %v2623
        %2625 = vmatprep.mubr.f32.mxu0 0.0
        %v2626 = vand.u32 %v647, 4294901760
        %v2627 = vsub.f32 %v647, %v2626
        %v2628 = vand.u32 %v2627, 4294901760
        %2629 = vmatmul.mubr.f32.gmra.mrb[0].mxu0 %v2628
        %v2630 = vpop.f32.mrb[0].mxu0
        %v2631 = vadd.f32 %v2544, %v2630
        %v2632 = vpop.f32.mrb[0].mxu0
        %v2633 = vadd.f32 %v2546, %v2632
        %2634 = vdwg.mxu0
        %v2635 = vand.u32 %v613, 4294901760
        %v2636 = vsub.f32 %v613, %v2635
        %v2637 = vand.u32 %v2636, 4294901760
        %2638 = vmatprep.subr.mxu0 %v2637
        %v2639 = vand.u32 %v612, 4294901760
        %v2640 = vsub.f32 %v612, %v2639
        %v2641 = vand.u32 %v2640, 4294901760
        %2642 = vmatpush1.msra.mxu0 %v2641
        %v2643 = vand.u32 %v631, 4294901760
        %v2644 = vsub.f32 %v631, %v2643
        %v2645 = vand.u32 %v2644, 4294901760
        %2646 = vmatprep.subr.mxu0 %v2645
        %v2647 = vand.u32 %v630, 4294901760
        %v2648 = vsub.f32 %v630, %v2647
        %v2649 = vand.u32 %v2648, 4294901760
        %2650 = vmatpush1.msra.mxu0 %v2649
        %2651 = vmatprep.subr.mxu0 0.0
        %2652 = vmatpush1.msra.mxu0 0.0
        %2653 = vmatprep.subr.mxu0 0.0
        %2654 = vmatpush1.msra.mxu0 0.0
        %2655 = vmatprep.subr.mxu0 0.0
        %2656 = vmatpush1.msra.mxu0 0.0
        %2657 = vmatprep.subr.mxu0 0.0
        %2658 = vmatpush1.msra.mxu0 0.0
        %2659 = vmatprep.subr.mxu0 0.0
        %2660 = vmatpush1.msra.mxu0 0.0
        %2661 = vmatprep.subr.mxu0 0.0
        %2662 = vmatpush1.msra.mxu0 0.0
        %2663 = vmatprep.subr.mxu0 0.0
        %2664 = vmatpush1.msra.mxu0 0.0
        %2665 = vmatprep.subr.mxu0 0.0
        %2666 = vmatpush1.msra.mxu0 0.0
        %2667 = vmatprep.subr.mxu0 0.0
        %2668 = vmatpush1.msra.mxu0 0.0
        %2669 = vmatprep.subr.mxu0 0.0
        %2670 = vmatpush1.msra.mxu0 0.0
        %2671 = vmatprep.subr.mxu0 0.0
        %2672 = vmatpush1.msra.mxu0 0.0
        %2673 = vmatprep.subr.mxu0 0.0
        %2674 = vmatpush1.msra.mxu0 0.0
        %2675 = vmatprep.subr.mxu0 0.0
        %2676 = vmatpush1.msra.mxu0 0.0
        %2677 = vmatprep.subr.mxu0 0.0
        %2678 = vmatpush1.msra.mxu0 0.0
        %2679 = vmatprep.subr.mxu0 0.0
        %2680 = vmatpush1.msra.mxu0 0.0
        %2681 = vmatprep.subr.mxu0 0.0
        %2682 = vmatpush1.msra.mxu0 0.0
        %2683 = vmatprep.subr.mxu0 0.0
        %2684 = vmatpush1.msra.mxu0 0.0
        %2685 = vmatprep.subr.mxu0 0.0
        %2686 = vmatpush1.msra.mxu0 0.0
        %2687 = vmatprep.subr.mxu0 0.0
        %2688 = vmatpush1.msra.mxu0 0.0
        %2689 = vmatprep.subr.mxu0 0.0
        %2690 = vmatpush1.msra.mxu0 0.0
        %2691 = vmatprep.subr.mxu0 0.0
        %2692 = vmatpush1.msra.mxu0 0.0
        %2693 = vmatprep.subr.mxu0 0.0
        %2694 = vmatpush1.msra.mxu0 0.0
        %2695 = vmatprep.subr.mxu0 0.0
        %2696 = vmatpush1.msra.mxu0 0.0
        %2697 = vmatprep.subr.mxu0 0.0
        %2698 = vmatpush1.msra.mxu0 0.0
        %2699 = vmatprep.subr.mxu0 0.0
        %2700 = vmatpush1.msra.mxu0 0.0
        %2701 = vmatprep.subr.mxu0 0.0
        %2702 = vmatpush1.msra.mxu0 0.0
        %2703 = vmatprep.subr.mxu0 0.0
        %2704 = vmatpush1.msra.mxu0 0.0
        %2705 = vmatprep.subr.mxu0 0.0
        %2706 = vmatpush1.msra.mxu0 0.0
        %2707 = vmatprep.subr.mxu0 0.0
        %2708 = vmatpush1.msra.mxu0 0.0
        %2709 = vmatprep.subr.mxu0 0.0
        %2710 = vmatpush1.msra.mxu0 0.0
        %2711 = vmatprep.mubr.f32.mxu0 0.0
        %v2712 = vand.u32 %v644, 4294901760
        %2713 = vmatmul.mubr.f32.gmra.mrb[0].mxu0 %v2712
        %v2714 = vpop.f32.mrb[0].mxu0
        %v2715 = vadd.f32 %v2622, %v2714
        %v2716 = vpop.f32.mrb[0].mxu0
        %v2717 = vadd.f32 %v2624, %v2716
        %2718 = vmatprep.mubr.f32.mxu0 0.0
        %v2719 = vand.u32 %v647, 4294901760
        %2720 = vmatmul.mubr.f32.gmra.mrb[0].mxu0 %v2719
        %v2721 = vpop.f32.mrb[0].mxu0
        %v2722 = vadd.f32 %v2631, %v2721
        %v2723 = vpop.f32.mrb[0].mxu0
        %v2724 = vadd.f32 %v2633, %v2723
        %2725 = vdwg.mxu0
        %v2726 = vand.u32 %v613, 4294901760
        %2727 = vmatprep.subr.mxu0 %v2726
        %v2728 = vand.u32 %v612, 4294901760
        %2729 = vmatpush1.msra.mxu0 %v2728
        %v2730 = vand.u32 %v631, 4294901760
        %2731 = vmatprep.subr.mxu0 %v2730
        %v2732 = vand.u32 %v630, 4294901760
        %2733 = vmatpush1.msra.mxu0 %v2732
        %2734 = vmatprep.subr.mxu0 0.0
        %2735 = vmatpush1.msra.mxu0 0.0
        %2736 = vmatprep.subr.mxu0 0.0
        %2737 = vmatpush1.msra.mxu0 0.0
        %2738 = vmatprep.subr.mxu0 0.0
        %2739 = vmatpush1.msra.mxu0 0.0
        %2740 = vmatprep.subr.mxu0 0.0
        %2741 = vmatpush1.msra.mxu0 0.0
        %2742 = vmatprep.subr.mxu0 0.0
        %2743 = vmatpush1.msra.mxu0 0.0
        %2744 = vmatprep.subr.mxu0 0.0
        %2745 = vmatpush1.msra.mxu0 0.0
        %2746 = vmatprep.subr.mxu0 0.0
        %2747 = vmatpush1.msra.mxu0 0.0
        %2748 = vmatprep.subr.mxu0 0.0
        %2749 = vmatpush1.msra.mxu0 0.0
        %2750 = vmatprep.subr.mxu0 0.0
        %2751 = vmatpush1.msra.mxu0 0.0
        %2752 = vmatprep.subr.mxu0 0.0
        %2753 = vmatpush1.msra.mxu0 0.0
        %2754 = vmatprep.subr.mxu0 0.0
        %2755 = vmatpush1.msra.mxu0 0.0
        %2756 = vmatprep.subr.mxu0 0.0
        %2757 = vmatpush1.msra.mxu0 0.0
        %2758 = vmatprep.subr.mxu0 0.0
        %2759 = vmatpush1.msra.mxu0 0.0
        %2760 = vmatprep.subr.mxu0 0.0
        %2761 = vmatpush1.msra.mxu0 0.0
        %2762 = vmatprep.subr.mxu0 0.0
        %2763 = vmatpush1.msra.mxu0 0.0
        %2764 = vmatprep.subr.mxu0 0.0
        %2765 = vmatpush1.msra.mxu0 0.0
        %2766 = vmatprep.subr.mxu0 0.0
        %2767 = vmatpush1.msra.mxu0 0.0
        %2768 = vmatprep.subr.mxu0 0.0
        %2769 = vmatpush1.msra.mxu0 0.0
        %2770 = vmatprep.subr.mxu0 0.0
        %2771 = vmatpush1.msra.mxu0 0.0
        %2772 = vmatprep.subr.mxu0 0.0
        %2773 = vmatpush1.msra.mxu0 0.0
        %2774 = vmatprep.subr.mxu0 0.0
        %2775 = vmatpush1.msra.mxu0 0.0
        %2776 = vmatprep.subr.mxu0 0.0
        %2777 = vmatpush1.msra.mxu0 0.0
        %2778 = vmatprep.subr.mxu0 0.0
        %2779 = vmatpush1.msra.mxu0 0.0
        %2780 = vmatprep.subr.mxu0 0.0
        %2781 = vmatpush1.msra.mxu0 0.0
        %2782 = vmatprep.subr.mxu0 0.0
        %2783 = vmatpush1.msra.mxu0 0.0
        %2784 = vmatprep.subr.mxu0 0.0
        %2785 = vmatpush1.msra.mxu0 0.0
        %2786 = vmatprep.subr.mxu0 0.0
        %2787 = vmatpush1.msra.mxu0 0.0
        %2788 = vmatprep.subr.mxu0 0.0
        %2789 = vmatpush1.msra.mxu0 0.0
        %2790 = vmatprep.subr.mxu0 0.0
        %2791 = vmatpush1.msra.mxu0 0.0
        %2792 = vmatprep.subr.mxu0 0.0
        %2793 = vmatpush1.msra.mxu0 0.0
        %2794 = vmatprep.mubr.f32.mxu0 0.0
        %v2795 = vand.u32 %v644, 4294901760
        %2796 = vmatmul.mubr.f32.gmra.mrb[0].mxu0 %v2795
        %v2797 = vpop.f32.mrb[0].mxu0
        %v2798 = vadd.f32 %v2715, %v2797
        %v2799 = vpop.f32.mrb[0].mxu0
        %v2800 = vadd.f32 %v2717, %v2799
        %2801 = vmatprep.mubr.f32.mxu0 0.0
        %v2802 = vand.u32 %v647, 4294901760
        %2803 = vmatmul.mubr.f32.gmra.mrb[0].mxu0 %v2802
        %v2804 = vpop.f32.mrb[0].mxu0
        %v2805 = vadd.f32 %v2722, %v2804
        %v2806 = vpop.f32.mrb[0].mxu0
        %v2807 = vadd.f32 %v2724, %v2806
        %2808 = vdwg.mxu0
        %v2809 = vand.u32 %v615, 4294901760
        %2810 = vmatprep.subr.mxu0 %v2809
        %v2811 = vand.u32 %v614, 4294901760
        %2812 = vmatpush1.msra.mxu0 %v2811
        %v2813 = vand.u32 %v633, 4294901760
        %2814 = vmatprep.subr.mxu0 %v2813
        %v2815 = vand.u32 %v632, 4294901760
        %2816 = vmatpush1.msra.mxu0 %v2815
        %2817 = vmatprep.subr.mxu0 0.0
        %2818 = vmatpush1.msra.mxu0 0.0
        %2819 = vmatprep.subr.mxu0 0.0
        %2820 = vmatpush1.msra.mxu0 0.0
        %2821 = vmatprep.subr.mxu0 0.0
        %2822 = vmatpush1.msra.mxu0 0.0
        %2823 = vmatprep.subr.mxu0 0.0
        %2824 = vmatpush1.msra.mxu0 0.0
        %2825 = vmatprep.subr.mxu0 0.0
        %2826 = vmatpush1.msra.mxu0 0.0
        %2827 = vmatprep.subr.mxu0 0.0
        %2828 = vmatpush1.msra.mxu0 0.0
        %2829 = vmatprep.subr.mxu0 0.0
        %2830 = vmatpush1.msra.mxu0 0.0
        %2831 = vmatprep.subr.mxu0 0.0
        %2832 = vmatpush1.msra.mxu0 0.0
        %2833 = vmatprep.subr.mxu0 0.0
        %2834 = vmatpush1.msra.mxu0 0.0
        %2835 = vmatprep.subr.mxu0 0.0
        %2836 = vmatpush1.msra.mxu0 0.0
        %2837 = vmatprep.subr.mxu0 0.0
        %2838 = vmatpush1.msra.mxu0 0.0
        %2839 = vmatprep.subr.mxu0 0.0
        %2840 = vmatpush1.msra.mxu0 0.0
        %2841 = vmatprep.subr.mxu0 0.0
        %2842 = vmatpush1.msra.mxu0 0.0
        %2843 = vmatprep.subr.mxu0 0.0
        %2844 = vmatpush1.msra.mxu0 0.0
        %2845 = vmatprep.subr.mxu0 0.0
        %2846 = vmatpush1.msra.mxu0 0.0
        %2847 = vmatprep.subr.mxu0 0.0
        %2848 = vmatpush1.msra.mxu0 0.0
        %2849 = vmatprep.subr.mxu0 0.0
        %2850 = vmatpush1.msra.mxu0 0.0
        %2851 = vmatprep.subr.mxu0 0.0
        %2852 = vmatpush1.msra.mxu0 0.0
        %2853 = vmatprep.subr.mxu0 0.0
        %2854 = vmatpush1.msra.mxu0 0.0
        %2855 = vmatprep.subr.mxu0 0.0
        %2856 = vmatpush1.msra.mxu0 0.0
        %2857 = vmatprep.subr.mxu0 0.0
        %2858 = vmatpush1.msra.mxu0 0.0
        %2859 = vmatprep.subr.mxu0 0.0
        %2860 = vmatpush1.msra.mxu0 0.0
        %2861 = vmatprep.subr.mxu0 0.0
        %2862 = vmatpush1.msra.mxu0 0.0
        %2863 = vmatprep.subr.mxu0 0.0
        %2864 = vmatpush1.msra.mxu0 0.0
        %2865 = vmatprep.subr.mxu0 0.0
        %2866 = vmatpush1.msra.mxu0 0.0
        %2867 = vmatprep.subr.mxu0 0.0
        %2868 = vmatpush1.msra.mxu0 0.0
        %2869 = vmatprep.subr.mxu0 0.0
        %2870 = vmatpush1.msra.mxu0 0.0
        %2871 = vmatprep.subr.mxu0 0.0
        %2872 = vmatpush1.msra.mxu0 0.0
        %2873 = vmatprep.subr.mxu0 0.0
        %2874 = vmatpush1.msra.mxu0 0.0
        %2875 = vmatprep.subr.mxu0 0.0
        %2876 = vmatpush1.msra.mxu0 0.0
        %2877 = vmatprep.mubr.f32.mxu0 0.0
        %v2878 = vand.u32 %v644, 4294901760
        %v2879 = vsub.f32 %v644, %v2878
        %v2880 = vand.u32 %v2879, 4294901760
        %v2881 = vsub.f32 %v2879, %v2880
        %v2882 = vand.u32 %v2881, 4294901760
        %2883 = vmatmul.mubr.f32.gmra.mrb[0].mxu0 %v2882
        %v2884 = vpop.f32.mrb[0].mxu0
        %v2885 = vadd.f32 0.0, %v2884
        %v2886 = vpop.f32.mrb[0].mxu0
        %v2887 = vadd.f32 0.0, %v2886
        %2888 = vmatprep.mubr.f32.mxu0 0.0
        %v2889 = vand.u32 %v647, 4294901760
        %v2890 = vsub.f32 %v647, %v2889
        %v2891 = vand.u32 %v2890, 4294901760
        %v2892 = vsub.f32 %v2890, %v2891
        %v2893 = vand.u32 %v2892, 4294901760
        %2894 = vmatmul.mubr.f32.gmra.mrb[0].mxu0 %v2893
        %v2895 = vpop.f32.mrb[0].mxu0
        %v2896 = vadd.f32 0.0, %v2895
        %v2897 = vpop.f32.mrb[0].mxu0
        %v2898 = vadd.f32 0.0, %v2897
        %2899 = vdwg.mxu0
        %v2900 = vand.u32 %v615, 4294901760
        %v2901 = vsub.f32 %v615, %v2900
        %v2902 = vand.u32 %v2901, 4294901760
        %v2903 = vsub.f32 %v2901, %v2902
        %v2904 = vand.u32 %v2903, 4294901760
        %2905 = vmatprep.subr.mxu0 %v2904
        %v2906 = vand.u32 %v614, 4294901760
        %v2907 = vsub.f32 %v614, %v2906
        %v2908 = vand.u32 %v2907, 4294901760
        %v2909 = vsub.f32 %v2907, %v2908
        %v2910 = vand.u32 %v2909, 4294901760
        %2911 = vmatpush1.msra.mxu0 %v2910
        %v2912 = vand.u32 %v633, 4294901760
        %v2913 = vsub.f32 %v633, %v2912
        %v2914 = vand.u32 %v2913, 4294901760
        %v2915 = vsub.f32 %v2913, %v2914
        %v2916 = vand.u32 %v2915, 4294901760
        %2917 = vmatprep.subr.mxu0 %v2916
        %v2918 = vand.u32 %v632, 4294901760
        %v2919 = vsub.f32 %v632, %v2918
        %v2920 = vand.u32 %v2919, 4294901760
        %v2921 = vsub.f32 %v2919, %v2920
        %v2922 = vand.u32 %v2921, 4294901760
        %2923 = vmatpush1.msra.mxu0 %v2922
        %2924 = vmatprep.subr.mxu0 0.0
        %2925 = vmatpush1.msra.mxu0 0.0
        %2926 = vmatprep.subr.mxu0 0.0
        %2927 = vmatpush1.msra.mxu0 0.0
        %2928 = vmatprep.subr.mxu0 0.0
        %2929 = vmatpush1.msra.mxu0 0.0
        %2930 = vmatprep.subr.mxu0 0.0
        %2931 = vmatpush1.msra.mxu0 0.0
        %2932 = vmatprep.subr.mxu0 0.0
        %2933 = vmatpush1.msra.mxu0 0.0
        %2934 = vmatprep.subr.mxu0 0.0
        %2935 = vmatpush1.msra.mxu0 0.0
        %2936 = vmatprep.subr.mxu0 0.0
        %2937 = vmatpush1.msra.mxu0 0.0
        %2938 = vmatprep.subr.mxu0 0.0
        %2939 = vmatpush1.msra.mxu0 0.0
        %2940 = vmatprep.subr.mxu0 0.0
        %2941 = vmatpush1.msra.mxu0 0.0
        %2942 = vmatprep.subr.mxu0 0.0
        %2943 = vmatpush1.msra.mxu0 0.0
        %2944 = vmatprep.subr.mxu0 0.0
        %2945 = vmatpush1.msra.mxu0 0.0
        %2946 = vmatprep.subr.mxu0 0.0
        %2947 = vmatpush1.msra.mxu0 0.0
        %2948 = vmatprep.subr.mxu0 0.0
        %2949 = vmatpush1.msra.mxu0 0.0
        %2950 = vmatprep.subr.mxu0 0.0
        %2951 = vmatpush1.msra.mxu0 0.0
        %2952 = vmatprep.subr.mxu0 0.0
        %2953 = vmatpush1.msra.mxu0 0.0
        %2954 = vmatprep.subr.mxu0 0.0
        %2955 = vmatpush1.msra.mxu0 0.0
        %2956 = vmatprep.subr.mxu0 0.0
        %2957 = vmatpush1.msra.mxu0 0.0
        %2958 = vmatprep.subr.mxu0 0.0
        %2959 = vmatpush1.msra.mxu0 0.0
        %2960 = vmatprep.subr.mxu0 0.0
        %2961 = vmatpush1.msra.mxu0 0.0
        %2962 = vmatprep.subr.mxu0 0.0
        %2963 = vmatpush1.msra.mxu0 0.0
        %2964 = vmatprep.subr.mxu0 0.0
        %2965 = vmatpush1.msra.mxu0 0.0
        %2966 = vmatprep.subr.mxu0 0.0
        %2967 = vmatpush1.msra.mxu0 0.0
        %2968 = vmatprep.subr.mxu0 0.0
        %2969 = vmatpush1.msra.mxu0 0.0
        %2970 = vmatprep.subr.mxu0 0.0
        %2971 = vmatpush1.msra.mxu0 0.0
        %2972 = vmatprep.subr.mxu0 0.0
        %2973 = vmatpush1.msra.mxu0 0.0
        %2974 = vmatprep.subr.mxu0 0.0
        %2975 = vmatpush1.msra.mxu0 0.0
        %2976 = vmatprep.subr.mxu0 0.0
        %2977 = vmatpush1.msra.mxu0 0.0
        %2978 = vmatprep.subr.mxu0 0.0
        %2979 = vmatpush1.msra.mxu0 0.0
        %2980 = vmatprep.subr.mxu0 0.0
        %2981 = vmatpush1.msra.mxu0 0.0
        %2982 = vmatprep.subr.mxu0 0.0
        %2983 = vmatpush1.msra.mxu0 0.0
        %2984 = vmatprep.mubr.f32.mxu0 0.0
        %v2985 = vand.u32 %v644, 4294901760
        %2986 = vmatmul.mubr.f32.gmra.mrb[0].mxu0 %v2985
        %v2987 = vpop.f32.mrb[0].mxu0
        %v2988 = vadd.f32 %v2885, %v2987
        %v2989 = vpop.f32.mrb[0].mxu0
        %v2990 = vadd.f32 %v2887, %v2989
        %2991 = vmatprep.mubr.f32.mxu0 0.0
        %v2992 = vand.u32 %v647, 4294901760
        %2993 = vmatmul.mubr.f32.gmra.mrb[0].mxu0 %v2992
        %v2994 = vpop.f32.mrb[0].mxu0
        %v2995 = vadd.f32 %v2896, %v2994
        %v2996 = vpop.f32.mrb[0].mxu0
        %v2997 = vadd.f32 %v2898, %v2996
        %2998 = vdwg.mxu0
        %v2999 = vand.u32 %v615, 4294901760
        %v3000 = vsub.f32 %v615, %v2999
        %3001 = vmatprep.subr.mxu0 %v3000
        %v3002 = vand.u32 %v614, 4294901760
        %v3003 = vsub.f32 %v614, %v3002
        %3004 = vmatpush1.msra.mxu0 %v3003
        %v3005 = vand.u32 %v633, 4294901760
        %v3006 = vsub.f32 %v633, %v3005
        %3007 = vmatprep.subr.mxu0 %v3006
        %v3008 = vand.u32 %v632, 4294901760
        %v3009 = vsub.f32 %v632, %v3008
        %3010 = vmatpush1.msra.mxu0 %v3009
        %3011 = vmatprep.subr.mxu0 0.0
        %3012 = vmatpush1.msra.mxu0 0.0
        %3013 = vmatprep.subr.mxu0 0.0
        %3014 = vmatpush1.msra.mxu0 0.0
        %3015 = vmatprep.subr.mxu0 0.0
        %3016 = vmatpush1.msra.mxu0 0.0
        %3017 = vmatprep.subr.mxu0 0.0
        %3018 = vmatpush1.msra.mxu0 0.0
        %3019 = vmatprep.subr.mxu0 0.0
        %3020 = vmatpush1.msra.mxu0 0.0
        %3021 = vmatprep.subr.mxu0 0.0
        %3022 = vmatpush1.msra.mxu0 0.0
        %3023 = vmatprep.subr.mxu0 0.0
        %3024 = vmatpush1.msra.mxu0 0.0
        %3025 = vmatprep.subr.mxu0 0.0
        %3026 = vmatpush1.msra.mxu0 0.0
        %3027 = vmatprep.subr.mxu0 0.0
        %3028 = vmatpush1.msra.mxu0 0.0
        %3029 = vmatprep.subr.mxu0 0.0
        %3030 = vmatpush1.msra.mxu0 0.0
        %3031 = vmatprep.subr.mxu0 0.0
        %3032 = vmatpush1.msra.mxu0 0.0
        %3033 = vmatprep.subr.mxu0 0.0
        %3034 = vmatpush1.msra.mxu0 0.0
        %3035 = vmatprep.subr.mxu0 0.0
        %3036 = vmatpush1.msra.mxu0 0.0
        %3037 = vmatprep.subr.mxu0 0.0
        %3038 = vmatpush1.msra.mxu0 0.0
        %3039 = vmatprep.subr.mxu0 0.0
        %3040 = vmatpush1.msra.mxu0 0.0
        %3041 = vmatprep.subr.mxu0 0.0
        %3042 = vmatpush1.msra.mxu0 0.0
        %3043 = vmatprep.subr.mxu0 0.0
        %3044 = vmatpush1.msra.mxu0 0.0
        %3045 = vmatprep.subr.mxu0 0.0
        %3046 = vmatpush1.msra.mxu0 0.0
        %3047 = vmatprep.subr.mxu0 0.0
        %3048 = vmatpush1.msra.mxu0 0.0
        %3049 = vmatprep.subr.mxu0 0.0
        %3050 = vmatpush1.msra.mxu0 0.0
        %3051 = vmatprep.subr.mxu0 0.0
        %3052 = vmatpush1.msra.mxu0 0.0
        %3053 = vmatprep.subr.mxu0 0.0
        %3054 = vmatpush1.msra.mxu0 0.0
        %3055 = vmatprep.subr.mxu0 0.0
        %3056 = vmatpush1.msra.mxu0 0.0
        %3057 = vmatprep.subr.mxu0 0.0
        %3058 = vmatpush1.msra.mxu0 0.0
        %3059 = vmatprep.subr.mxu0 0.0
        %3060 = vmatpush1.msra.mxu0 0.0
        %3061 = vmatprep.subr.mxu0 0.0
        %3062 = vmatpush1.msra.mxu0 0.0
        %3063 = vmatprep.subr.mxu0 0.0
        %3064 = vmatpush1.msra.mxu0 0.0
        %3065 = vmatprep.subr.mxu0 0.0
        %3066 = vmatpush1.msra.mxu0 0.0
        %3067 = vmatprep.subr.mxu0 0.0
        %3068 = vmatpush1.msra.mxu0 0.0
        %3069 = vmatprep.subr.mxu0 0.0
        %3070 = vmatpush1.msra.mxu0 0.0
        %3071 = vmatprep.mubr.f32.mxu0 0.0
        %v3072 = vand.u32 %v644, 4294901760
        %v3073 = vsub.f32 %v644, %v3072
        %3074 = vmatmul.mubr.f32.gmra.mrb[0].mxu0 %v3073
        %v3075 = vpop.f32.mrb[0].mxu0
        %v3076 = vadd.f32 %v2988, %v3075
        %v3077 = vpop.f32.mrb[0].mxu0
        %v3078 = vadd.f32 %v2990, %v3077
        %3079 = vmatprep.mubr.f32.mxu0 0.0
        %v3080 = vand.u32 %v647, 4294901760
        %v3081 = vsub.f32 %v647, %v3080
        %3082 = vmatmul.mubr.f32.gmra.mrb[0].mxu0 %v3081
        %v3083 = vpop.f32.mrb[0].mxu0
        %v3084 = vadd.f32 %v2995, %v3083
        %v3085 = vpop.f32.mrb[0].mxu0
        %v3086 = vadd.f32 %v2997, %v3085
        %3087 = vdwg.mxu0
        %v3088 = vand.u32 %v615, 4294901760
        %3089 = vmatprep.subr.mxu0 %v3088
        %v3090 = vand.u32 %v614, 4294901760
        %3091 = vmatpush1.msra.mxu0 %v3090
        %v3092 = vand.u32 %v633, 4294901760
        %3093 = vmatprep.subr.mxu0 %v3092
        %v3094 = vand.u32 %v632, 4294901760
        %3095 = vmatpush1.msra.mxu0 %v3094
        %3096 = vmatprep.subr.mxu0 0.0
        %3097 = vmatpush1.msra.mxu0 0.0
        %3098 = vmatprep.subr.mxu0 0.0
        %3099 = vmatpush1.msra.mxu0 0.0
        %3100 = vmatprep.subr.mxu0 0.0
        %3101 = vmatpush1.msra.mxu0 0.0
        %3102 = vmatprep.subr.mxu0 0.0
        %3103 = vmatpush1.msra.mxu0 0.0
        %3104 = vmatprep.subr.mxu0 0.0
        %3105 = vmatpush1.msra.mxu0 0.0
        %3106 = vmatprep.subr.mxu0 0.0
        %3107 = vmatpush1.msra.mxu0 0.0
        %3108 = vmatprep.subr.mxu0 0.0
        %3109 = vmatpush1.msra.mxu0 0.0
        %3110 = vmatprep.subr.mxu0 0.0
        %3111 = vmatpush1.msra.mxu0 0.0
        %3112 = vmatprep.subr.mxu0 0.0
        %3113 = vmatpush1.msra.mxu0 0.0
        %3114 = vmatprep.subr.mxu0 0.0
        %3115 = vmatpush1.msra.mxu0 0.0
        %3116 = vmatprep.subr.mxu0 0.0
        %3117 = vmatpush1.msra.mxu0 0.0
        %3118 = vmatprep.subr.mxu0 0.0
        %3119 = vmatpush1.msra.mxu0 0.0
        %3120 = vmatprep.subr.mxu0 0.0
        %3121 = vmatpush1.msra.mxu0 0.0
        %3122 = vmatprep.subr.mxu0 0.0
        %3123 = vmatpush1.msra.mxu0 0.0
        %3124 = vmatprep.subr.mxu0 0.0
        %3125 = vmatpush1.msra.mxu0 0.0
        %3126 = vmatprep.subr.mxu0 0.0
        %3127 = vmatpush1.msra.mxu0 0.0
        %3128 = vmatprep.subr.mxu0 0.0
        %3129 = vmatpush1.msra.mxu0 0.0
        %3130 = vmatprep.subr.mxu0 0.0
        %3131 = vmatpush1.msra.mxu0 0.0
        %3132 = vmatprep.subr.mxu0 0.0
        %3133 = vmatpush1.msra.mxu0 0.0
        %3134 = vmatprep.subr.mxu0 0.0
        %3135 = vmatpush1.msra.mxu0 0.0
        %3136 = vmatprep.subr.mxu0 0.0
        %3137 = vmatpush1.msra.mxu0 0.0
        %3138 = vmatprep.subr.mxu0 0.0
        %3139 = vmatpush1.msra.mxu0 0.0
        %3140 = vmatprep.subr.mxu0 0.0
        %3141 = vmatpush1.msra.mxu0 0.0
        %3142 = vmatprep.subr.mxu0 0.0
        %3143 = vmatpush1.msra.mxu0 0.0
        %3144 = vmatprep.subr.mxu0 0.0
        %3145 = vmatpush1.msra.mxu0 0.0
        %3146 = vmatprep.subr.mxu0 0.0
        %3147 = vmatpush1.msra.mxu0 0.0
        %3148 = vmatprep.subr.mxu0 0.0
        %3149 = vmatpush1.msra.mxu0 0.0
        %3150 = vmatprep.subr.mxu0 0.0
        %3151 = vmatpush1.msra.mxu0 0.0
        %3152 = vmatprep.subr.mxu0 0.0
        %3153 = vmatpush1.msra.mxu0 0.0
        %3154 = vmatprep.subr.mxu0 0.0
        %3155 = vmatpush1.msra.mxu0 0.0
        %3156 = vmatprep.mubr.f32.mxu0 0.0
        %v3157 = vand.u32 %v644, 4294901760
        %v3158 = vsub.f32 %v644, %v3157
        %v3159 = vand.u32 %v3158, 4294901760
        %3160 = vmatmul.mubr.f32.gmra.mrb[0].mxu0 %v3159
        %v3161 = vpop.f32.mrb[0].mxu0
        %v3162 = vadd.f32 %v3076, %v3161
        %v3163 = vpop.f32.mrb[0].mxu0
        %v3164 = vadd.f32 %v3078, %v3163
        %3165 = vmatprep.mubr.f32.mxu0 0.0
        %v3166 = vand.u32 %v647, 4294901760
        %v3167 = vsub.f32 %v647, %v3166
        %v3168 = vand.u32 %v3167, 4294901760
        %3169 = vmatmul.mubr.f32.gmra.mrb[0].mxu0 %v3168
        %v3170 = vpop.f32.mrb[0].mxu0
        %v3171 = vadd.f32 %v3084, %v3170
        %v3172 = vpop.f32.mrb[0].mxu0
        %v3173 = vadd.f32 %v3086, %v3172
        %3174 = vdwg.mxu0
        %v3175 = vand.u32 %v615, 4294901760
        %v3176 = vsub.f32 %v615, %v3175
        %v3177 = vand.u32 %v3176, 4294901760
        %3178 = vmatprep.subr.mxu0 %v3177
        %v3179 = vand.u32 %v614, 4294901760
        %v3180 = vsub.f32 %v614, %v3179
        %v3181 = vand.u32 %v3180, 4294901760
        %3182 = vmatpush1.msra.mxu0 %v3181
        %v3183 = vand.u32 %v633, 4294901760
        %v3184 = vsub.f32 %v633, %v3183
        %v3185 = vand.u32 %v3184, 4294901760
        %3186 = vmatprep.subr.mxu0 %v3185
        %v3187 = vand.u32 %v632, 4294901760
        %v3188 = vsub.f32 %v632, %v3187
        %v3189 = vand.u32 %v3188, 4294901760
        %3190 = vmatpush1.msra.mxu0 %v3189
        %3191 = vmatprep.subr.mxu0 0.0
        %3192 = vmatpush1.msra.mxu0 0.0
        %3193 = vmatprep.subr.mxu0 0.0
        %3194 = vmatpush1.msra.mxu0 0.0
        %3195 = vmatprep.subr.mxu0 0.0
        %3196 = vmatpush1.msra.mxu0 0.0
        %3197 = vmatprep.subr.mxu0 0.0
        %3198 = vmatpush1.msra.mxu0 0.0
        %3199 = vmatprep.subr.mxu0 0.0
        %3200 = vmatpush1.msra.mxu0 0.0
        %3201 = vmatprep.subr.mxu0 0.0
        %3202 = vmatpush1.msra.mxu0 0.0
        %3203 = vmatprep.subr.mxu0 0.0
        %3204 = vmatpush1.msra.mxu0 0.0
        %3205 = vmatprep.subr.mxu0 0.0
        %3206 = vmatpush1.msra.mxu0 0.0
        %3207 = vmatprep.subr.mxu0 0.0
        %3208 = vmatpush1.msra.mxu0 0.0
        %3209 = vmatprep.subr.mxu0 0.0
        %3210 = vmatpush1.msra.mxu0 0.0
        %3211 = vmatprep.subr.mxu0 0.0
        %3212 = vmatpush1.msra.mxu0 0.0
        %3213 = vmatprep.subr.mxu0 0.0
        %3214 = vmatpush1.msra.mxu0 0.0
        %3215 = vmatprep.subr.mxu0 0.0
        %3216 = vmatpush1.msra.mxu0 0.0
        %3217 = vmatprep.subr.mxu0 0.0
        %3218 = vmatpush1.msra.mxu0 0.0
        %3219 = vmatprep.subr.mxu0 0.0
        %3220 = vmatpush1.msra.mxu0 0.0
        %3221 = vmatprep.subr.mxu0 0.0
        %3222 = vmatpush1.msra.mxu0 0.0
        %3223 = vmatprep.subr.mxu0 0.0
        %3224 = vmatpush1.msra.mxu0 0.0
        %3225 = vmatprep.subr.mxu0 0.0
        %3226 = vmatpush1.msra.mxu0 0.0
        %3227 = vmatprep.subr.mxu0 0.0
        %3228 = vmatpush1.msra.mxu0 0.0
        %3229 = vmatprep.subr.mxu0 0.0
        %3230 = vmatpush1.msra.mxu0 0.0
        %3231 = vmatprep.subr.mxu0 0.0
        %3232 = vmatpush1.msra.mxu0 0.0
        %3233 = vmatprep.subr.mxu0 0.0
        %3234 = vmatpush1.msra.mxu0 0.0
        %3235 = vmatprep.subr.mxu0 0.0
        %3236 = vmatpush1.msra.mxu0 0.0
        %3237 = vmatprep.subr.mxu0 0.0
        %3238 = vmatpush1.msra.mxu0 0.0
        %3239 = vmatprep.subr.mxu0 0.0
        %3240 = vmatpush1.msra.mxu0 0.0
        %3241 = vmatprep.subr.mxu0 0.0
        %3242 = vmatpush1.msra.mxu0 0.0
        %3243 = vmatprep.subr.mxu0 0.0
        %3244 = vmatpush1.msra.mxu0 0.0
        %3245 = vmatprep.subr.mxu0 0.0
        %3246 = vmatpush1.msra.mxu0 0.0
        %3247 = vmatprep.subr.mxu0 0.0
        %3248 = vmatpush1.msra.mxu0 0.0
        %3249 = vmatprep.subr.mxu0 0.0
        %3250 = vmatpush1.msra.mxu0 0.0
        %3251 = vmatprep.mubr.f32.mxu0 0.0
        %v3252 = vand.u32 %v644, 4294901760
        %3253 = vmatmul.mubr.f32.gmra.mrb[0].mxu0 %v3252
        %v3254 = vpop.f32.mrb[0].mxu0
        %v3255 = vadd.f32 %v3162, %v3254
        %v3256 = vpop.f32.mrb[0].mxu0
        %v3257 = vadd.f32 %v3164, %v3256
        %3258 = vmatprep.mubr.f32.mxu0 0.0
        %v3259 = vand.u32 %v647, 4294901760
        %3260 = vmatmul.mubr.f32.gmra.mrb[0].mxu0 %v3259
        %v3261 = vpop.f32.mrb[0].mxu0
        %v3262 = vadd.f32 %v3171, %v3261
        %v3263 = vpop.f32.mrb[0].mxu0
        %v3264 = vadd.f32 %v3173, %v3263
        %3265 = vdwg.mxu0
        %v3266 = vand.u32 %v615, 4294901760
        %3267 = vmatprep.subr.mxu0 %v3266
        %v3268 = vand.u32 %v614, 4294901760
        %3269 = vmatpush1.msra.mxu0 %v3268
        %v3270 = vand.u32 %v633, 4294901760
        %3271 = vmatprep.subr.mxu0 %v3270
        %v3272 = vand.u32 %v632, 4294901760
        %3273 = vmatpush1.msra.mxu0 %v3272
        %3274 = vmatprep.subr.mxu0 0.0
        %3275 = vmatpush1.msra.mxu0 0.0
        %3276 = vmatprep.subr.mxu0 0.0
        %3277 = vmatpush1.msra.mxu0 0.0
        %3278 = vmatprep.subr.mxu0 0.0
        %3279 = vmatpush1.msra.mxu0 0.0
        %3280 = vmatprep.subr.mxu0 0.0
        %3281 = vmatpush1.msra.mxu0 0.0
        %3282 = vmatprep.subr.mxu0 0.0
        %3283 = vmatpush1.msra.mxu0 0.0
        %3284 = vmatprep.subr.mxu0 0.0
        %3285 = vmatpush1.msra.mxu0 0.0
        %3286 = vmatprep.subr.mxu0 0.0
        %3287 = vmatpush1.msra.mxu0 0.0
        %3288 = vmatprep.subr.mxu0 0.0
        %3289 = vmatpush1.msra.mxu0 0.0
        %3290 = vmatprep.subr.mxu0 0.0
        %3291 = vmatpush1.msra.mxu0 0.0
        %3292 = vmatprep.subr.mxu0 0.0
        %3293 = vmatpush1.msra.mxu0 0.0
        %3294 = vmatprep.subr.mxu0 0.0
        %3295 = vmatpush1.msra.mxu0 0.0
        %3296 = vmatprep.subr.mxu0 0.0
        %3297 = vmatpush1.msra.mxu0 0.0
        %3298 = vmatprep.subr.mxu0 0.0
        %3299 = vmatpush1.msra.mxu0 0.0
        %3300 = vmatprep.subr.mxu0 0.0
        %3301 = vmatpush1.msra.mxu0 0.0
        %3302 = vmatprep.subr.mxu0 0.0
        %3303 = vmatpush1.msra.mxu0 0.0
        %3304 = vmatprep.subr.mxu0 0.0
        %3305 = vmatpush1.msra.mxu0 0.0
        %3306 = vmatprep.subr.mxu0 0.0
        %3307 = vmatpush1.msra.mxu0 0.0
        %3308 = vmatprep.subr.mxu0 0.0
        %3309 = vmatpush1.msra.mxu0 0.0
        %3310 = vmatprep.subr.mxu0 0.0
        %3311 = vmatpush1.msra.mxu0 0.0
        %3312 = vmatprep.subr.mxu0 0.0
        %3313 = vmatpush1.msra.mxu0 0.0
        %3314 = vmatprep.subr.mxu0 0.0
        %3315 = vmatpush1.msra.mxu0 0.0
        %3316 = vmatprep.subr.mxu0 0.0
        %3317 = vmatpush1.msra.mxu0 0.0
        %3318 = vmatprep.subr.mxu0 0.0
        %3319 = vmatpush1.msra.mxu0 0.0
        %3320 = vmatprep.subr.mxu0 0.0
        %3321 = vmatpush1.msra.mxu0 0.0
        %3322 = vmatprep.subr.mxu0 0.0
        %3323 = vmatpush1.msra.mxu0 0.0
        %3324 = vmatprep.subr.mxu0 0.0
        %3325 = vmatpush1.msra.mxu0 0.0
        %3326 = vmatprep.subr.mxu0 0.0
        %3327 = vmatpush1.msra.mxu0 0.0
        %3328 = vmatprep.subr.mxu0 0.0
        %3329 = vmatpush1.msra.mxu0 0.0
        %3330 = vmatprep.subr.mxu0 0.0
        %3331 = vmatpush1.msra.mxu0 0.0
        %3332 = vmatprep.subr.mxu0 0.0
        %3333 = vmatpush1.msra.mxu0 0.0
        %3334 = vmatprep.mubr.f32.mxu0 0.0
        %v3335 = vand.u32 %v644, 4294901760
        %3336 = vmatmul.mubr.f32.gmra.mrb[0].mxu0 %v3335
        %v3337 = vpop.f32.mrb[0].mxu0
        %v3338 = vadd.f32 %v3255, %v3337
        %v3339 = vpop.f32.mrb[0].mxu0
        %v3340 = vadd.f32 %v3257, %v3339
        %3341 = vmatprep.mubr.f32.mxu0 0.0
        %v3342 = vand.u32 %v647, 4294901760
        %3343 = vmatmul.mubr.f32.gmra.mrb[0].mxu0 %v3342
        %v3344 = vpop.f32.mrb[0].mxu0
        %v3345 = vadd.f32 %v3262, %v3344
        %v3346 = vpop.f32.mrb[0].mxu0
        %v3347 = vadd.f32 %v3264, %v3346
        %3348 = vdwg.mxu0
        %v3349 = vand.u32 %v617, 4294901760
        %3350 = vmatprep.subr.mxu0 %v3349
        %v3351 = vand.u32 %v616, 4294901760
        %3352 = vmatpush1.msra.mxu0 %v3351
        %v3353 = vand.u32 %v635, 4294901760
        %3354 = vmatprep.subr.mxu0 %v3353
        %v3355 = vand.u32 %v634, 4294901760
        %3356 = vmatpush1.msra.mxu0 %v3355
        %3357 = vmatprep.subr.mxu0 0.0
        %3358 = vmatpush1.msra.mxu0 0.0
        %3359 = vmatprep.subr.mxu0 0.0
        %3360 = vmatpush1.msra.mxu0 0.0
        %3361 = vmatprep.subr.mxu0 0.0
        %3362 = vmatpush1.msra.mxu0 0.0
        %3363 = vmatprep.subr.mxu0 0.0
        %3364 = vmatpush1.msra.mxu0 0.0
        %3365 = vmatprep.subr.mxu0 0.0
        %3366 = vmatpush1.msra.mxu0 0.0
        %3367 = vmatprep.subr.mxu0 0.0
        %3368 = vmatpush1.msra.mxu0 0.0
        %3369 = vmatprep.subr.mxu0 0.0
        %3370 = vmatpush1.msra.mxu0 0.0
        %3371 = vmatprep.subr.mxu0 0.0
        %3372 = vmatpush1.msra.mxu0 0.0
        %3373 = vmatprep.subr.mxu0 0.0
        %3374 = vmatpush1.msra.mxu0 0.0
        %3375 = vmatprep.subr.mxu0 0.0
        %3376 = vmatpush1.msra.mxu0 0.0
        %3377 = vmatprep.subr.mxu0 0.0
        %3378 = vmatpush1.msra.mxu0 0.0
        %3379 = vmatprep.subr.mxu0 0.0
        %3380 = vmatpush1.msra.mxu0 0.0
        %3381 = vmatprep.subr.mxu0 0.0
        %3382 = vmatpush1.msra.mxu0 0.0
        %3383 = vmatprep.subr.mxu0 0.0
        %3384 = vmatpush1.msra.mxu0 0.0
        %3385 = vmatprep.subr.mxu0 0.0
        %3386 = vmatpush1.msra.mxu0 0.0
        %3387 = vmatprep.subr.mxu0 0.0
        %3388 = vmatpush1.msra.mxu0 0.0
        %3389 = vmatprep.subr.mxu0 0.0
        %3390 = vmatpush1.msra.mxu0 0.0
        %3391 = vmatprep.subr.mxu0 0.0
        %3392 = vmatpush1.msra.mxu0 0.0
        %3393 = vmatprep.subr.mxu0 0.0
        %3394 = vmatpush1.msra.mxu0 0.0
        %3395 = vmatprep.subr.mxu0 0.0
        %3396 = vmatpush1.msra.mxu0 0.0
        %3397 = vmatprep.subr.mxu0 0.0
        %3398 = vmatpush1.msra.mxu0 0.0
        %3399 = vmatprep.subr.mxu0 0.0
        %3400 = vmatpush1.msra.mxu0 0.0
        %3401 = vmatprep.subr.mxu0 0.0
        %3402 = vmatpush1.msra.mxu0 0.0
        %3403 = vmatprep.subr.mxu0 0.0
        %3404 = vmatpush1.msra.mxu0 0.0
        %3405 = vmatprep.subr.mxu0 0.0
        %3406 = vmatpush1.msra.mxu0 0.0
        %3407 = vmatprep.subr.mxu0 0.0
        %3408 = vmatpush1.msra.mxu0 0.0
        %3409 = vmatprep.subr.mxu0 0.0
        %3410 = vmatpush1.msra.mxu0 0.0
        %3411 = vmatprep.subr.mxu0 0.0
        %3412 = vmatpush1.msra.mxu0 0.0
        %3413 = vmatprep.subr.mxu0 0.0
        %3414 = vmatpush1.msra.mxu0 0.0
        %3415 = vmatprep.subr.mxu0 0.0
        %3416 = vmatpush1.msra.mxu0 0.0
        %3417 = vmatprep.mubr.f32.mxu0 0.0
        %v3418 = vand.u32 %v644, 4294901760
        %v3419 = vsub.f32 %v644, %v3418
        %v3420 = vand.u32 %v3419, 4294901760
        %v3421 = vsub.f32 %v3419, %v3420
        %v3422 = vand.u32 %v3421, 4294901760
        %3423 = vmatmul.mubr.f32.gmra.mrb[0].mxu0 %v3422
        %v3424 = vpop.f32.mrb[0].mxu0
        %v3425 = vadd.f32 0.0, %v3424
        %v3426 = vpop.f32.mrb[0].mxu0
        %v3427 = vadd.f32 0.0, %v3426
        %3428 = vmatprep.mubr.f32.mxu0 0.0
        %v3429 = vand.u32 %v647, 4294901760
        %v3430 = vsub.f32 %v647, %v3429
        %v3431 = vand.u32 %v3430, 4294901760
        %v3432 = vsub.f32 %v3430, %v3431
        %v3433 = vand.u32 %v3432, 4294901760
        %3434 = vmatmul.mubr.f32.gmra.mrb[0].mxu0 %v3433
        %v3435 = vpop.f32.mrb[0].mxu0
        %v3436 = vadd.f32 0.0, %v3435
        %v3437 = vpop.f32.mrb[0].mxu0
        %v3438 = vadd.f32 0.0, %v3437
        %3439 = vdwg.mxu0
        %v3440 = vand.u32 %v617, 4294901760
        %v3441 = vsub.f32 %v617, %v3440
        %v3442 = vand.u32 %v3441, 4294901760
        %v3443 = vsub.f32 %v3441, %v3442
        %v3444 = vand.u32 %v3443, 4294901760
        %3445 = vmatprep.subr.mxu0 %v3444
        %v3446 = vand.u32 %v616, 4294901760
        %v3447 = vsub.f32 %v616, %v3446
        %v3448 = vand.u32 %v3447, 4294901760
        %v3449 = vsub.f32 %v3447, %v3448
        %v3450 = vand.u32 %v3449, 4294901760
        %3451 = vmatpush1.msra.mxu0 %v3450
        %v3452 = vand.u32 %v635, 4294901760
        %v3453 = vsub.f32 %v635, %v3452
        %v3454 = vand.u32 %v3453, 4294901760
        %v3455 = vsub.f32 %v3453, %v3454
        %v3456 = vand.u32 %v3455, 4294901760
        %3457 = vmatprep.subr.mxu0 %v3456
        %v3458 = vand.u32 %v634, 4294901760
        %v3459 = vsub.f32 %v634, %v3458
        %v3460 = vand.u32 %v3459, 4294901760
        %v3461 = vsub.f32 %v3459, %v3460
        %v3462 = vand.u32 %v3461, 4294901760
        %3463 = vmatpush1.msra.mxu0 %v3462
        %3464 = vmatprep.subr.mxu0 0.0
        %3465 = vmatpush1.msra.mxu0 0.0
        %3466 = vmatprep.subr.mxu0 0.0
        %3467 = vmatpush1.msra.mxu0 0.0
        %3468 = vmatprep.subr.mxu0 0.0
        %3469 = vmatpush1.msra.mxu0 0.0
        %3470 = vmatprep.subr.mxu0 0.0
        %3471 = vmatpush1.msra.mxu0 0.0
        %3472 = vmatprep.subr.mxu0 0.0
        %3473 = vmatpush1.msra.mxu0 0.0
        %3474 = vmatprep.subr.mxu0 0.0
        %3475 = vmatpush1.msra.mxu0 0.0
        %3476 = vmatprep.subr.mxu0 0.0
        %3477 = vmatpush1.msra.mxu0 0.0
        %3478 = vmatprep.subr.mxu0 0.0
        %3479 = vmatpush1.msra.mxu0 0.0
        %3480 = vmatprep.subr.mxu0 0.0
        %3481 = vmatpush1.msra.mxu0 0.0
        %3482 = vmatprep.subr.mxu0 0.0
        %3483 = vmatpush1.msra.mxu0 0.0
        %3484 = vmatprep.subr.mxu0 0.0
        %3485 = vmatpush1.msra.mxu0 0.0
        %3486 = vmatprep.subr.mxu0 0.0
        %3487 = vmatpush1.msra.mxu0 0.0
        %3488 = vmatprep.subr.mxu0 0.0
        %3489 = vmatpush1.msra.mxu0 0.0
        %3490 = vmatprep.subr.mxu0 0.0
        %3491 = vmatpush1.msra.mxu0 0.0
        %3492 = vmatprep.subr.mxu0 0.0
        %3493 = vmatpush1.msra.mxu0 0.0
        %3494 = vmatprep.subr.mxu0 0.0
        %3495 = vmatpush1.msra.mxu0 0.0
        %3496 = vmatprep.subr.mxu0 0.0
        %3497 = vmatpush1.msra.mxu0 0.0
        %3498 = vmatprep.subr.mxu0 0.0
        %3499 = vmatpush1.msra.mxu0 0.0
        %3500 = vmatprep.subr.mxu0 0.0
        %3501 = vmatpush1.msra.mxu0 0.0
        %3502 = vmatprep.subr.mxu0 0.0
        %3503 = vmatpush1.msra.mxu0 0.0
        %3504 = vmatprep.subr.mxu0 0.0
        %3505 = vmatpush1.msra.mxu0 0.0
        %3506 = vmatprep.subr.mxu0 0.0
        %3507 = vmatpush1.msra.mxu0 0.0
        %3508 = vmatprep.subr.mxu0 0.0
        %3509 = vmatpush1.msra.mxu0 0.0
        %3510 = vmatprep.subr.mxu0 0.0
        %3511 = vmatpush1.msra.mxu0 0.0
        %3512 = vmatprep.subr.mxu0 0.0
        %3513 = vmatpush1.msra.mxu0 0.0
        %3514 = vmatprep.subr.mxu0 0.0
        %3515 = vmatpush1.msra.mxu0 0.0
        %3516 = vmatprep.subr.mxu0 0.0
        %3517 = vmatpush1.msra.mxu0 0.0
        %3518 = vmatprep.subr.mxu0 0.0
        %3519 = vmatpush1.msra.mxu0 0.0
        %3520 = vmatprep.subr.mxu0 0.0
        %3521 = vmatpush1.msra.mxu0 0.0
        %3522 = vmatprep.subr.mxu0 0.0
        %3523 = vmatpush1.msra.mxu0 0.0
        %3524 = vmatprep.mubr.f32.mxu0 0.0
        %v3525 = vand.u32 %v644, 4294901760
        %3526 = vmatmul.mubr.f32.gmra.mrb[0].mxu0 %v3525
        %v3527 = vpop.f32.mrb[0].mxu0
        %v3528 = vadd.f32 %v3425, %v3527
        %v3529 = vpop.f32.mrb[0].mxu0
        %v3530 = vadd.f32 %v3427, %v3529
        %3531 = vmatprep.mubr.f32.mxu0 0.0
        %v3532 = vand.u32 %v647, 4294901760
        %3533 = vmatmul.mubr.f32.gmra.mrb[0].mxu0 %v3532
        %v3534 = vpop.f32.mrb[0].mxu0
        %v3535 = vadd.f32 %v3436, %v3534
        %v3536 = vpop.f32.mrb[0].mxu0
        %v3537 = vadd.f32 %v3438, %v3536
        %3538 = vdwg.mxu0
        %v3539 = vand.u32 %v617, 4294901760
        %v3540 = vsub.f32 %v617, %v3539
        %3541 = vmatprep.subr.mxu0 %v3540
        %v3542 = vand.u32 %v616, 4294901760
        %v3543 = vsub.f32 %v616, %v3542
        %3544 = vmatpush1.msra.mxu0 %v3543
        %v3545 = vand.u32 %v635, 4294901760
        %v3546 = vsub.f32 %v635, %v3545
        %3547 = vmatprep.subr.mxu0 %v3546
        %v3548 = vand.u32 %v634, 4294901760
        %v3549 = vsub.f32 %v634, %v3548
        %3550 = vmatpush1.msra.mxu0 %v3549
        %3551 = vmatprep.subr.mxu0 0.0
        %3552 = vmatpush1.msra.mxu0 0.0
        %3553 = vmatprep.subr.mxu0 0.0
        %3554 = vmatpush1.msra.mxu0 0.0
        %3555 = vmatprep.subr.mxu0 0.0
        %3556 = vmatpush1.msra.mxu0 0.0
        %3557 = vmatprep.subr.mxu0 0.0
        %3558 = vmatpush1.msra.mxu0 0.0
        %3559 = vmatprep.subr.mxu0 0.0
        %3560 = vmatpush1.msra.mxu0 0.0
        %3561 = vmatprep.subr.mxu0 0.0
        %3562 = vmatpush1.msra.mxu0 0.0
        %3563 = vmatprep.subr.mxu0 0.0
        %3564 = vmatpush1.msra.mxu0 0.0
        %3565 = vmatprep.subr.mxu0 0.0
        %3566 = vmatpush1.msra.mxu0 0.0
        %3567 = vmatprep.subr.mxu0 0.0
        %3568 = vmatpush1.msra.mxu0 0.0
        %3569 = vmatprep.subr.mxu0 0.0
        %3570 = vmatpush1.msra.mxu0 0.0
        %3571 = vmatprep.subr.mxu0 0.0
        %3572 = vmatpush1.msra.mxu0 0.0
        %3573 = vmatprep.subr.mxu0 0.0
        %3574 = vmatpush1.msra.mxu0 0.0
        %3575 = vmatprep.subr.mxu0 0.0
        %3576 = vmatpush1.msra.mxu0 0.0
        %3577 = vmatprep.subr.mxu0 0.0
        %3578 = vmatpush1.msra.mxu0 0.0
        %3579 = vmatprep.subr.mxu0 0.0
        %3580 = vmatpush1.msra.mxu0 0.0
        %3581 = vmatprep.subr.mxu0 0.0
        %3582 = vmatpush1.msra.mxu0 0.0
        %3583 = vmatprep.subr.mxu0 0.0
        %3584 = vmatpush1.msra.mxu0 0.0
        %3585 = vmatprep.subr.mxu0 0.0
        %3586 = vmatpush1.msra.mxu0 0.0
        %3587 = vmatprep.subr.mxu0 0.0
        %3588 = vmatpush1.msra.mxu0 0.0
        %3589 = vmatprep.subr.mxu0 0.0
        %3590 = vmatpush1.msra.mxu0 0.0
        %3591 = vmatprep.subr.mxu0 0.0
        %3592 = vmatpush1.msra.mxu0 0.0
        %3593 = vmatprep.subr.mxu0 0.0
        %3594 = vmatpush1.msra.mxu0 0.0
        %3595 = vmatprep.subr.mxu0 0.0
        %3596 = vmatpush1.msra.mxu0 0.0
        %3597 = vmatprep.subr.mxu0 0.0
        %3598 = vmatpush1.msra.mxu0 0.0
        %3599 = vmatprep.subr.mxu0 0.0
        %3600 = vmatpush1.msra.mxu0 0.0
        %3601 = vmatprep.subr.mxu0 0.0
        %3602 = vmatpush1.msra.mxu0 0.0
        %3603 = vmatprep.subr.mxu0 0.0
        %3604 = vmatpush1.msra.mxu0 0.0
        %3605 = vmatprep.subr.mxu0 0.0
        %3606 = vmatpush1.msra.mxu0 0.0
        %3607 = vmatprep.subr.mxu0 0.0
        %3608 = vmatpush1.msra.mxu0 0.0
        %3609 = vmatprep.subr.mxu0 0.0
        %3610 = vmatpush1.msra.mxu0 0.0
        %3611 = vmatprep.mubr.f32.mxu0 0.0
        %v3612 = vand.u32 %v644, 4294901760
        %v3613 = vsub.f32 %v644, %v3612
        %3614 = vmatmul.mubr.f32.gmra.mrb[0].mxu0 %v3613
        %v3615 = vpop.f32.mrb[0].mxu0
        %v3616 = vadd.f32 %v3528, %v3615
        %v3617 = vpop.f32.mrb[0].mxu0
        %v3618 = vadd.f32 %v3530, %v3617
        %3619 = vmatprep.mubr.f32.mxu0 0.0
        %v3620 = vand.u32 %v647, 4294901760
        %v3621 = vsub.f32 %v647, %v3620
        %3622 = vmatmul.mubr.f32.gmra.mrb[0].mxu0 %v3621
        %v3623 = vpop.f32.mrb[0].mxu0
        %v3624 = vadd.f32 %v3535, %v3623
        %v3625 = vpop.f32.mrb[0].mxu0
        %v3626 = vadd.f32 %v3537, %v3625
        %3627 = vdwg.mxu0
        %v3628 = vand.u32 %v617, 4294901760
        %3629 = vmatprep.subr.mxu0 %v3628
        %v3630 = vand.u32 %v616, 4294901760
        %3631 = vmatpush1.msra.mxu0 %v3630
        %v3632 = vand.u32 %v635, 4294901760
        %3633 = vmatprep.subr.mxu0 %v3632
        %v3634 = vand.u32 %v634, 4294901760
        %3635 = vmatpush1.msra.mxu0 %v3634
        %3636 = vmatprep.subr.mxu0 0.0
        %3637 = vmatpush1.msra.mxu0 0.0
        %3638 = vmatprep.subr.mxu0 0.0
        %3639 = vmatpush1.msra.mxu0 0.0
        %3640 = vmatprep.subr.mxu0 0.0
        %3641 = vmatpush1.msra.mxu0 0.0
        %3642 = vmatprep.subr.mxu0 0.0
        %3643 = vmatpush1.msra.mxu0 0.0
        %3644 = vmatprep.subr.mxu0 0.0
        %3645 = vmatpush1.msra.mxu0 0.0
        %3646 = vmatprep.subr.mxu0 0.0
        %3647 = vmatpush1.msra.mxu0 0.0
        %3648 = vmatprep.subr.mxu0 0.0
        %3649 = vmatpush1.msra.mxu0 0.0
        %3650 = vmatprep.subr.mxu0 0.0
        %3651 = vmatpush1.msra.mxu0 0.0
        %3652 = vmatprep.subr.mxu0 0.0
        %3653 = vmatpush1.msra.mxu0 0.0
        %3654 = vmatprep.subr.mxu0 0.0
        %3655 = vmatpush1.msra.mxu0 0.0
        %3656 = vmatprep.subr.mxu0 0.0
        %3657 = vmatpush1.msra.mxu0 0.0
        %3658 = vmatprep.subr.mxu0 0.0
        %3659 = vmatpush1.msra.mxu0 0.0
        %3660 = vmatprep.subr.mxu0 0.0
        %3661 = vmatpush1.msra.mxu0 0.0
        %3662 = vmatprep.subr.mxu0 0.0
        %3663 = vmatpush1.msra.mxu0 0.0
        %3664 = vmatprep.subr.mxu0 0.0
        %3665 = vmatpush1.msra.mxu0 0.0
        %3666 = vmatprep.subr.mxu0 0.0
        %3667 = vmatpush1.msra.mxu0 0.0
        %3668 = vmatprep.subr.mxu0 0.0
        %3669 = vmatpush1.msra.mxu0 0.0
        %3670 = vmatprep.subr.mxu0 0.0
        %3671 = vmatpush1.msra.mxu0 0.0
        %3672 = vmatprep.subr.mxu0 0.0
        %3673 = vmatpush1.msra.mxu0 0.0
        %3674 = vmatprep.subr.mxu0 0.0
        %3675 = vmatpush1.msra.mxu0 0.0
        %3676 = vmatprep.subr.mxu0 0.0
        %3677 = vmatpush1.msra.mxu0 0.0
        %3678 = vmatprep.subr.mxu0 0.0
        %3679 = vmatpush1.msra.mxu0 0.0
        %3680 = vmatprep.subr.mxu0 0.0
        %3681 = vmatpush1.msra.mxu0 0.0
        %3682 = vmatprep.subr.mxu0 0.0
        %3683 = vmatpush1.msra.mxu0 0.0
        %3684 = vmatprep.subr.mxu0 0.0
        %3685 = vmatpush1.msra.mxu0 0.0
        %3686 = vmatprep.subr.mxu0 0.0
        %3687 = vmatpush1.msra.mxu0 0.0
        %3688 = vmatprep.subr.mxu0 0.0
        %3689 = vmatpush1.msra.mxu0 0.0
        %3690 = vmatprep.subr.mxu0 0.0
        %3691 = vmatpush1.msra.mxu0 0.0
        %3692 = vmatprep.subr.mxu0 0.0
        %3693 = vmatpush1.msra.mxu0 0.0
        %3694 = vmatprep.subr.mxu0 0.0
        %3695 = vmatpush1.msra.mxu0 0.0
        %3696 = vmatprep.mubr.f32.mxu0 0.0
        %v3697 = vand.u32 %v644, 4294901760
        %v3698 = vsub.f32 %v644, %v3697
        %v3699 = vand.u32 %v3698, 4294901760
        %3700 = vmatmul.mubr.f32.gmra.mrb[0].mxu0 %v3699
        %v3701 = vpop.f32.mrb[0].mxu0
        %v3702 = vadd.f32 %v3616, %v3701
        %v3703 = vpop.f32.mrb[0].mxu0
        %v3704 = vadd.f32 %v3618, %v3703
        %3705 = vmatprep.mubr.f32.mxu0 0.0
        %v3706 = vand.u32 %v647, 4294901760
        %v3707 = vsub.f32 %v647, %v3706
        %v3708 = vand.u32 %v3707, 4294901760
        %3709 = vmatmul.mubr.f32.gmra.mrb[0].mxu0 %v3708
        %v3710 = vpop.f32.mrb[0].mxu0
        %v3711 = vadd.f32 %v3624, %v3710
        %v3712 = vpop.f32.mrb[0].mxu0
        %v3713 = vadd.f32 %v3626, %v3712
        %3714 = vdwg.mxu0
        %v3715 = vand.u32 %v617, 4294901760
        %v3716 = vsub.f32 %v617, %v3715
        %v3717 = vand.u32 %v3716, 4294901760
        %3718 = vmatprep.subr.mxu0 %v3717
        %v3719 = vand.u32 %v616, 4294901760
        %v3720 = vsub.f32 %v616, %v3719
        %v3721 = vand.u32 %v3720, 4294901760
        %3722 = vmatpush1.msra.mxu0 %v3721
        %v3723 = vand.u32 %v635, 4294901760
        %v3724 = vsub.f32 %v635, %v3723
        %v3725 = vand.u32 %v3724, 4294901760
        %3726 = vmatprep.subr.mxu0 %v3725
        %v3727 = vand.u32 %v634, 4294901760
        %v3728 = vsub.f32 %v634, %v3727
        %v3729 = vand.u32 %v3728, 4294901760
        %3730 = vmatpush1.msra.mxu0 %v3729
        %3731 = vmatprep.subr.mxu0 0.0
        %3732 = vmatpush1.msra.mxu0 0.0
        %3733 = vmatprep.subr.mxu0 0.0
        %3734 = vmatpush1.msra.mxu0 0.0
        %3735 = vmatprep.subr.mxu0 0.0
        %3736 = vmatpush1.msra.mxu0 0.0
        %3737 = vmatprep.subr.mxu0 0.0
        %3738 = vmatpush1.msra.mxu0 0.0
        %3739 = vmatprep.subr.mxu0 0.0
        %3740 = vmatpush1.msra.mxu0 0.0
        %3741 = vmatprep.subr.mxu0 0.0
        %3742 = vmatpush1.msra.mxu0 0.0
        %3743 = vmatprep.subr.mxu0 0.0
        %3744 = vmatpush1.msra.mxu0 0.0
        %3745 = vmatprep.subr.mxu0 0.0
        %3746 = vmatpush1.msra.mxu0 0.0
        %3747 = vmatprep.subr.mxu0 0.0
        %3748 = vmatpush1.msra.mxu0 0.0
        %3749 = vmatprep.subr.mxu0 0.0
        %3750 = vmatpush1.msra.mxu0 0.0
        %3751 = vmatprep.subr.mxu0 0.0
        %3752 = vmatpush1.msra.mxu0 0.0
        %3753 = vmatprep.subr.mxu0 0.0
        %3754 = vmatpush1.msra.mxu0 0.0
        %3755 = vmatprep.subr.mxu0 0.0
        %3756 = vmatpush1.msra.mxu0 0.0
        %3757 = vmatprep.subr.mxu0 0.0
        %3758 = vmatpush1.msra.mxu0 0.0
        %3759 = vmatprep.subr.mxu0 0.0
        %3760 = vmatpush1.msra.mxu0 0.0
        %3761 = vmatprep.subr.mxu0 0.0
        %3762 = vmatpush1.msra.mxu0 0.0
        %3763 = vmatprep.subr.mxu0 0.0
        %3764 = vmatpush1.msra.mxu0 0.0
        %3765 = vmatprep.subr.mxu0 0.0
        %3766 = vmatpush1.msra.mxu0 0.0
        %3767 = vmatprep.subr.mxu0 0.0
        %3768 = vmatpush1.msra.mxu0 0.0
        %3769 = vmatprep.subr.mxu0 0.0
        %3770 = vmatpush1.msra.mxu0 0.0
        %3771 = vmatprep.subr.mxu0 0.0
        %3772 = vmatpush1.msra.mxu0 0.0
        %3773 = vmatprep.subr.mxu0 0.0
        %3774 = vmatpush1.msra.mxu0 0.0
        %3775 = vmatprep.subr.mxu0 0.0
        %3776 = vmatpush1.msra.mxu0 0.0
        %3777 = vmatprep.subr.mxu0 0.0
        %3778 = vmatpush1.msra.mxu0 0.0
        %3779 = vmatprep.subr.mxu0 0.0
        %3780 = vmatpush1.msra.mxu0 0.0
        %3781 = vmatprep.subr.mxu0 0.0
        %3782 = vmatpush1.msra.mxu0 0.0
        %3783 = vmatprep.subr.mxu0 0.0
        %3784 = vmatpush1.msra.mxu0 0.0
        %3785 = vmatprep.subr.mxu0 0.0
        %3786 = vmatpush1.msra.mxu0 0.0
        %3787 = vmatprep.subr.mxu0 0.0
        %3788 = vmatpush1.msra.mxu0 0.0
        %3789 = vmatprep.subr.mxu0 0.0
        %3790 = vmatpush1.msra.mxu0 0.0
        %3791 = vmatprep.mubr.f32.mxu0 0.0
        %v3792 = vand.u32 %v644, 4294901760
        %3793 = vmatmul.mubr.f32.gmra.mrb[0].mxu0 %v3792
        %v3794 = vpop.f32.mrb[0].mxu0
        %v3795 = vadd.f32 %v3702, %v3794
        %v3796 = vpop.f32.mrb[0].mxu0
        %v3797 = vadd.f32 %v3704, %v3796
        %3798 = vmatprep.mubr.f32.mxu0 0.0
        %v3799 = vand.u32 %v647, 4294901760
        %3800 = vmatmul.mubr.f32.gmra.mrb[0].mxu0 %v3799
        %v3801 = vpop.f32.mrb[0].mxu0
        %v3802 = vadd.f32 %v3711, %v3801
        %v3803 = vpop.f32.mrb[0].mxu0
        %v3804 = vadd.f32 %v3713, %v3803
        %3805 = vdwg.mxu0
        %v3806 = vand.u32 %v617, 4294901760
        %3807 = vmatprep.subr.mxu0 %v3806
        %v3808 = vand.u32 %v616, 4294901760
        %3809 = vmatpush1.msra.mxu0 %v3808
        %v3810 = vand.u32 %v635, 4294901760
        %3811 = vmatprep.subr.mxu0 %v3810
        %v3812 = vand.u32 %v634, 4294901760
        %3813 = vmatpush1.msra.mxu0 %v3812
        %3814 = vmatprep.subr.mxu0 0.0
        %3815 = vmatpush1.msra.mxu0 0.0
        %3816 = vmatprep.subr.mxu0 0.0
        %3817 = vmatpush1.msra.mxu0 0.0
        %3818 = vmatprep.subr.mxu0 0.0
        %3819 = vmatpush1.msra.mxu0 0.0
        %3820 = vmatprep.subr.mxu0 0.0
        %3821 = vmatpush1.msra.mxu0 0.0
        %3822 = vmatprep.subr.mxu0 0.0
        %3823 = vmatpush1.msra.mxu0 0.0
        %3824 = vmatprep.subr.mxu0 0.0
        %3825 = vmatpush1.msra.mxu0 0.0
        %3826 = vmatprep.subr.mxu0 0.0
        %3827 = vmatpush1.msra.mxu0 0.0
        %3828 = vmatprep.subr.mxu0 0.0
        %3829 = vmatpush1.msra.mxu0 0.0
        %3830 = vmatprep.subr.mxu0 0.0
        %3831 = vmatpush1.msra.mxu0 0.0
        %3832 = vmatprep.subr.mxu0 0.0
        %3833 = vmatpush1.msra.mxu0 0.0
        %3834 = vmatprep.subr.mxu0 0.0
        %3835 = vmatpush1.msra.mxu0 0.0
        %3836 = vmatprep.subr.mxu0 0.0
        %3837 = vmatpush1.msra.mxu0 0.0
        %3838 = vmatprep.subr.mxu0 0.0
        %3839 = vmatpush1.msra.mxu0 0.0
        %3840 = vmatprep.subr.mxu0 0.0
        %3841 = vmatpush1.msra.mxu0 0.0
        %3842 = vmatprep.subr.mxu0 0.0
        %3843 = vmatpush1.msra.mxu0 0.0
        %3844 = vmatprep.subr.mxu0 0.0
        %3845 = vmatpush1.msra.mxu0 0.0
        %3846 = vmatprep.subr.mxu0 0.0
        %3847 = vmatpush1.msra.mxu0 0.0
        %3848 = vmatprep.subr.mxu0 0.0
        %3849 = vmatpush1.msra.mxu0 0.0
        %3850 = vmatprep.subr.mxu0 0.0
        %3851 = vmatpush1.msra.mxu0 0.0
        %3852 = vmatprep.subr.mxu0 0.0
        %3853 = vmatpush1.msra.mxu0 0.0
        %3854 = vmatprep.subr.mxu0 0.0
        %3855 = vmatpush1.msra.mxu0 0.0
        %3856 = vmatprep.subr.mxu0 0.0
        %3857 = vmatpush1.msra.mxu0 0.0
        %3858 = vmatprep.subr.mxu0 0.0
        %3859 = vmatpush1.msra.mxu0 0.0
        %3860 = vmatprep.subr.mxu0 0.0
        %3861 = vmatpush1.msra.mxu0 0.0
        %3862 = vmatprep.subr.mxu0 0.0
        %3863 = vmatpush1.msra.mxu0 0.0
        %3864 = vmatprep.subr.mxu0 0.0
        %3865 = vmatpush1.msra.mxu0 0.0
        %3866 = vmatprep.subr.mxu0 0.0
        %3867 = vmatpush1.msra.mxu0 0.0
        %3868 = vmatprep.subr.mxu0 0.0
        %3869 = vmatpush1.msra.mxu0 0.0
        %3870 = vmatprep.subr.mxu0 0.0
        %3871 = vmatpush1.msra.mxu0 0.0
        %3872 = vmatprep.subr.mxu0 0.0
        %3873 = vmatpush1.msra.mxu0 0.0
        %3874 = vmatprep.mubr.f32.mxu0 0.0
        %v3875 = vand.u32 %v644, 4294901760
        %3876 = vmatmul.mubr.f32.gmra.mrb[0].mxu0 %v3875
        %v3877 = vpop.f32.mrb[0].mxu0
        %v3878 = vadd.f32 %v3795, %v3877
        %v3879 = vpop.f32.mrb[0].mxu0
        %v3880 = vadd.f32 %v3797, %v3879
        %3881 = vmatprep.mubr.f32.mxu0 0.0
        %v3882 = vand.u32 %v647, 4294901760
        %3883 = vmatmul.mubr.f32.gmra.mrb[0].mxu0 %v3882
        %v3884 = vpop.f32.mrb[0].mxu0
        %v3885 = vadd.f32 %v3802, %v3884
        %v3886 = vpop.f32.mrb[0].mxu0
        %v3887 = vadd.f32 %v3804, %v3886
        %3888 = vdwg.mxu0
        %v3889 = vand.u32 %v619, 4294901760
        %3890 = vmatprep.subr.mxu0 %v3889
        %v3891 = vand.u32 %v618, 4294901760
        %3892 = vmatpush1.msra.mxu0 %v3891
        %v3893 = vand.u32 %v637, 4294901760
        %3894 = vmatprep.subr.mxu0 %v3893
        %v3895 = vand.u32 %v636, 4294901760
        %3896 = vmatpush1.msra.mxu0 %v3895
        %3897 = vmatprep.subr.mxu0 0.0
        %3898 = vmatpush1.msra.mxu0 0.0
        %3899 = vmatprep.subr.mxu0 0.0
        %3900 = vmatpush1.msra.mxu0 0.0
        %3901 = vmatprep.subr.mxu0 0.0
        %3902 = vmatpush1.msra.mxu0 0.0
        %3903 = vmatprep.subr.mxu0 0.0
        %3904 = vmatpush1.msra.mxu0 0.0
        %3905 = vmatprep.subr.mxu0 0.0
        %3906 = vmatpush1.msra.mxu0 0.0
        %3907 = vmatprep.subr.mxu0 0.0
        %3908 = vmatpush1.msra.mxu0 0.0
        %3909 = vmatprep.subr.mxu0 0.0
        %3910 = vmatpush1.msra.mxu0 0.0
        %3911 = vmatprep.subr.mxu0 0.0
        %3912 = vmatpush1.msra.mxu0 0.0
        %3913 = vmatprep.subr.mxu0 0.0
        %3914 = vmatpush1.msra.mxu0 0.0
        %3915 = vmatprep.subr.mxu0 0.0
        %3916 = vmatpush1.msra.mxu0 0.0
        %3917 = vmatprep.subr.mxu0 0.0
        %3918 = vmatpush1.msra.mxu0 0.0
        %3919 = vmatprep.subr.mxu0 0.0
        %3920 = vmatpush1.msra.mxu0 0.0
        %3921 = vmatprep.subr.mxu0 0.0
        %3922 = vmatpush1.msra.mxu0 0.0
        %3923 = vmatprep.subr.mxu0 0.0
        %3924 = vmatpush1.msra.mxu0 0.0
        %3925 = vmatprep.subr.mxu0 0.0
        %3926 = vmatpush1.msra.mxu0 0.0
        %3927 = vmatprep.subr.mxu0 0.0
        %3928 = vmatpush1.msra.mxu0 0.0
        %3929 = vmatprep.subr.mxu0 0.0
        %3930 = vmatpush1.msra.mxu0 0.0
        %3931 = vmatprep.subr.mxu0 0.0
        %3932 = vmatpush1.msra.mxu0 0.0
        %3933 = vmatprep.subr.mxu0 0.0
        %3934 = vmatpush1.msra.mxu0 0.0
        %3935 = vmatprep.subr.mxu0 0.0
        %3936 = vmatpush1.msra.mxu0 0.0
        %3937 = vmatprep.subr.mxu0 0.0
        %3938 = vmatpush1.msra.mxu0 0.0
        %3939 = vmatprep.subr.mxu0 0.0
        %3940 = vmatpush1.msra.mxu0 0.0
        %3941 = vmatprep.subr.mxu0 0.0
        %3942 = vmatpush1.msra.mxu0 0.0
        %3943 = vmatprep.subr.mxu0 0.0
        %3944 = vmatpush1.msra.mxu0 0.0
        %3945 = vmatprep.subr.mxu0 0.0
        %3946 = vmatpush1.msra.mxu0 0.0
        %3947 = vmatprep.subr.mxu0 0.0
        %3948 = vmatpush1.msra.mxu0 0.0
        %3949 = vmatprep.subr.mxu0 0.0
        %3950 = vmatpush1.msra.mxu0 0.0
        %3951 = vmatprep.subr.mxu0 0.0
        %3952 = vmatpush1.msra.mxu0 0.0
        %3953 = vmatprep.subr.mxu0 0.0
        %3954 = vmatpush1.msra.mxu0 0.0
        %3955 = vmatprep.subr.mxu0 0.0
        %3956 = vmatpush1.msra.mxu0 0.0
        %3957 = vmatprep.mubr.f32.mxu0 0.0
        %v3958 = vand.u32 %v644, 4294901760
        %v3959 = vsub.f32 %v644, %v3958
        %v3960 = vand.u32 %v3959, 4294901760
        %v3961 = vsub.f32 %v3959, %v3960
        %v3962 = vand.u32 %v3961, 4294901760
        %3963 = vmatmul.mubr.f32.gmra.mrb[0].mxu0 %v3962
        %v3964 = vpop.f32.mrb[0].mxu0
        %v3965 = vadd.f32 0.0, %v3964
        %v3966 = vpop.f32.mrb[0].mxu0
        %v3967 = vadd.f32 0.0, %v3966
        %3968 = vmatprep.mubr.f32.mxu0 0.0
        %v3969 = vand.u32 %v647, 4294901760
        %v3970 = vsub.f32 %v647, %v3969
        %v3971 = vand.u32 %v3970, 4294901760
        %v3972 = vsub.f32 %v3970, %v3971
        %v3973 = vand.u32 %v3972, 4294901760
        %3974 = vmatmul.mubr.f32.gmra.mrb[0].mxu0 %v3973
        %v3975 = vpop.f32.mrb[0].mxu0
        %v3976 = vadd.f32 0.0, %v3975
        %v3977 = vpop.f32.mrb[0].mxu0
        %v3978 = vadd.f32 0.0, %v3977
        %3979 = vdwg.mxu0
        %v3980 = vand.u32 %v619, 4294901760
        %v3981 = vsub.f32 %v619, %v3980
        %v3982 = vand.u32 %v3981, 4294901760
        %v3983 = vsub.f32 %v3981, %v3982
        %v3984 = vand.u32 %v3983, 4294901760
        %3985 = vmatprep.subr.mxu0 %v3984
        %v3986 = vand.u32 %v618, 4294901760
        %v3987 = vsub.f32 %v618, %v3986
        %v3988 = vand.u32 %v3987, 4294901760
        %v3989 = vsub.f32 %v3987, %v3988
        %v3990 = vand.u32 %v3989, 4294901760
        %3991 = vmatpush1.msra.mxu0 %v3990
        %v3992 = vand.u32 %v637, 4294901760
        %v3993 = vsub.f32 %v637, %v3992
        %v3994 = vand.u32 %v3993, 4294901760
        %v3995 = vsub.f32 %v3993, %v3994
        %v3996 = vand.u32 %v3995, 4294901760
        %3997 = vmatprep.subr.mxu0 %v3996
        %v3998 = vand.u32 %v636, 4294901760
        %v3999 = vsub.f32 %v636, %v3998
        %v4000 = vand.u32 %v3999, 4294901760
        %v4001 = vsub.f32 %v3999, %v4000
        %v4002 = vand.u32 %v4001, 4294901760
        %4003 = vmatpush1.msra.mxu0 %v4002
        %4004 = vmatprep.subr.mxu0 0.0
        %4005 = vmatpush1.msra.mxu0 0.0
        %4006 = vmatprep.subr.mxu0 0.0
        %4007 = vmatpush1.msra.mxu0 0.0
        %4008 = vmatprep.subr.mxu0 0.0
        %4009 = vmatpush1.msra.mxu0 0.0
        %4010 = vmatprep.subr.mxu0 0.0
        %4011 = vmatpush1.msra.mxu0 0.0
        %4012 = vmatprep.subr.mxu0 0.0
        %4013 = vmatpush1.msra.mxu0 0.0
        %4014 = vmatprep.subr.mxu0 0.0
        %4015 = vmatpush1.msra.mxu0 0.0
        %4016 = vmatprep.subr.mxu0 0.0
        %4017 = vmatpush1.msra.mxu0 0.0
        %4018 = vmatprep.subr.mxu0 0.0
        %4019 = vmatpush1.msra.mxu0 0.0
        %4020 = vmatprep.subr.mxu0 0.0
        %4021 = vmatpush1.msra.mxu0 0.0
        %4022 = vmatprep.subr.mxu0 0.0
        %4023 = vmatpush1.msra.mxu0 0.0
        %4024 = vmatprep.subr.mxu0 0.0
        %4025 = vmatpush1.msra.mxu0 0.0
        %4026 = vmatprep.subr.mxu0 0.0
        %4027 = vmatpush1.msra.mxu0 0.0
        %4028 = vmatprep.subr.mxu0 0.0
        %4029 = vmatpush1.msra.mxu0 0.0
        %4030 = vmatprep.subr.mxu0 0.0
        %4031 = vmatpush1.msra.mxu0 0.0
        %4032 = vmatprep.subr.mxu0 0.0
        %4033 = vmatpush1.msra.mxu0 0.0
        %4034 = vmatprep.subr.mxu0 0.0
        %4035 = vmatpush1.msra.mxu0 0.0
        %4036 = vmatprep.subr.mxu0 0.0
        %4037 = vmatpush1.msra.mxu0 0.0
        %4038 = vmatprep.subr.mxu0 0.0
        %4039 = vmatpush1.msra.mxu0 0.0
        %4040 = vmatprep.subr.mxu0 0.0
        %4041 = vmatpush1.msra.mxu0 0.0
        %4042 = vmatprep.subr.mxu0 0.0
        %4043 = vmatpush1.msra.mxu0 0.0
        %4044 = vmatprep.subr.mxu0 0.0
        %4045 = vmatpush1.msra.mxu0 0.0
        %4046 = vmatprep.subr.mxu0 0.0
        %4047 = vmatpush1.msra.mxu0 0.0
        %4048 = vmatprep.subr.mxu0 0.0
        %4049 = vmatpush1.msra.mxu0 0.0
        %4050 = vmatprep.subr.mxu0 0.0
        %4051 = vmatpush1.msra.mxu0 0.0
        %4052 = vmatprep.subr.mxu0 0.0
        %4053 = vmatpush1.msra.mxu0 0.0
        %4054 = vmatprep.subr.mxu0 0.0
        %4055 = vmatpush1.msra.mxu0 0.0
        %4056 = vmatprep.subr.mxu0 0.0
        %4057 = vmatpush1.msra.mxu0 0.0
        %4058 = vmatprep.subr.mxu0 0.0
        %4059 = vmatpush1.msra.mxu0 0.0
        %4060 = vmatprep.subr.mxu0 0.0
        %4061 = vmatpush1.msra.mxu0 0.0
        %4062 = vmatprep.subr.mxu0 0.0
        %4063 = vmatpush1.msra.mxu0 0.0
        %4064 = vmatprep.mubr.f32.mxu0 0.0
        %v4065 = vand.u32 %v644, 4294901760
        %4066 = vmatmul.mubr.f32.gmra.mrb[0].mxu0 %v4065
        %v4067 = vpop.f32.mrb[0].mxu0
        %v4068 = vadd.f32 %v3965, %v4067
        %v4069 = vpop.f32.mrb[0].mxu0
        %v4070 = vadd.f32 %v3967, %v4069
        %4071 = vmatprep.mubr.f32.mxu0 0.0
        %v4072 = vand.u32 %v647, 4294901760
        %4073 = vmatmul.mubr.f32.gmra.mrb[0].mxu0 %v4072
        %v4074 = vpop.f32.mrb[0].mxu0
        %v4075 = vadd.f32 %v3976, %v4074
        %v4076 = vpop.f32.mrb[0].mxu0
        %v4077 = vadd.f32 %v3978, %v4076
        %4078 = vdwg.mxu0
        %v4079 = vand.u32 %v619, 4294901760
        %v4080 = vsub.f32 %v619, %v4079
        %4081 = vmatprep.subr.mxu0 %v4080
        %v4082 = vand.u32 %v618, 4294901760
        %v4083 = vsub.f32 %v618, %v4082
        %4084 = vmatpush1.msra.mxu0 %v4083
        %v4085 = vand.u32 %v637, 4294901760
        %v4086 = vsub.f32 %v637, %v4085
        %4087 = vmatprep.subr.mxu0 %v4086
        %v4088 = vand.u32 %v636, 4294901760
        %v4089 = vsub.f32 %v636, %v4088
        %4090 = vmatpush1.msra.mxu0 %v4089
        %4091 = vmatprep.subr.mxu0 0.0
        %4092 = vmatpush1.msra.mxu0 0.0
        %4093 = vmatprep.subr.mxu0 0.0
        %4094 = vmatpush1.msra.mxu0 0.0
        %4095 = vmatprep.subr.mxu0 0.0
        %4096 = vmatpush1.msra.mxu0 0.0
        %4097 = vmatprep.subr.mxu0 0.0
        %4098 = vmatpush1.msra.mxu0 0.0
        %4099 = vmatprep.subr.mxu0 0.0
        %4100 = vmatpush1.msra.mxu0 0.0
        %4101 = vmatprep.subr.mxu0 0.0
        %4102 = vmatpush1.msra.mxu0 0.0
        %4103 = vmatprep.subr.mxu0 0.0
        %4104 = vmatpush1.msra.mxu0 0.0
        %4105 = vmatprep.subr.mxu0 0.0
        %4106 = vmatpush1.msra.mxu0 0.0
        %4107 = vmatprep.subr.mxu0 0.0
        %4108 = vmatpush1.msra.mxu0 0.0
        %4109 = vmatprep.subr.mxu0 0.0
        %4110 = vmatpush1.msra.mxu0 0.0
        %4111 = vmatprep.subr.mxu0 0.0
        %4112 = vmatpush1.msra.mxu0 0.0
        %4113 = vmatprep.subr.mxu0 0.0
        %4114 = vmatpush1.msra.mxu0 0.0
        %4115 = vmatprep.subr.mxu0 0.0
        %4116 = vmatpush1.msra.mxu0 0.0
        %4117 = vmatprep.subr.mxu0 0.0
        %4118 = vmatpush1.msra.mxu0 0.0
        %4119 = vmatprep.subr.mxu0 0.0
        %4120 = vmatpush1.msra.mxu0 0.0
        %4121 = vmatprep.subr.mxu0 0.0
        %4122 = vmatpush1.msra.mxu0 0.0
        %4123 = vmatprep.subr.mxu0 0.0
        %4124 = vmatpush1.msra.mxu0 0.0
        %4125 = vmatprep.subr.mxu0 0.0
        %4126 = vmatpush1.msra.mxu0 0.0
        %4127 = vmatprep.subr.mxu0 0.0
        %4128 = vmatpush1.msra.mxu0 0.0
        %4129 = vmatprep.subr.mxu0 0.0
        %4130 = vmatpush1.msra.mxu0 0.0
        %4131 = vmatprep.subr.mxu0 0.0
        %4132 = vmatpush1.msra.mxu0 0.0
        %4133 = vmatprep.subr.mxu0 0.0
        %4134 = vmatpush1.msra.mxu0 0.0
        %4135 = vmatprep.subr.mxu0 0.0
        %4136 = vmatpush1.msra.mxu0 0.0
        %4137 = vmatprep.subr.mxu0 0.0
        %4138 = vmatpush1.msra.mxu0 0.0
        %4139 = vmatprep.subr.mxu0 0.0
        %4140 = vmatpush1.msra.mxu0 0.0
        %4141 = vmatprep.subr.mxu0 0.0
        %4142 = vmatpush1.msra.mxu0 0.0
        %4143 = vmatprep.subr.mxu0 0.0
        %4144 = vmatpush1.msra.mxu0 0.0
        %4145 = vmatprep.subr.mxu0 0.0
        %4146 = vmatpush1.msra.mxu0 0.0
        %4147 = vmatprep.subr.mxu0 0.0
        %4148 = vmatpush1.msra.mxu0 0.0
        %4149 = vmatprep.subr.mxu0 0.0
        %4150 = vmatpush1.msra.mxu0 0.0
        %4151 = vmatprep.mubr.f32.mxu0 0.0
        %v4152 = vand.u32 %v644, 4294901760
        %v4153 = vsub.f32 %v644, %v4152
        %4154 = vmatmul.mubr.f32.gmra.mrb[0].mxu0 %v4153
        %v4155 = vpop.f32.mrb[0].mxu0
        %v4156 = vadd.f32 %v4068, %v4155
        %v4157 = vpop.f32.mrb[0].mxu0
        %v4158 = vadd.f32 %v4070, %v4157
        %4159 = vmatprep.mubr.f32.mxu0 0.0
        %v4160 = vand.u32 %v647, 4294901760
        %v4161 = vsub.f32 %v647, %v4160
        %4162 = vmatmul.mubr.f32.gmra.mrb[0].mxu0 %v4161
        %v4163 = vpop.f32.mrb[0].mxu0
        %v4164 = vadd.f32 %v4075, %v4163
        %v4165 = vpop.f32.mrb[0].mxu0
        %v4166 = vadd.f32 %v4077, %v4165
        %4167 = vdwg.mxu0
        %v4168 = vand.u32 %v619, 4294901760
        %4169 = vmatprep.subr.mxu0 %v4168
        %v4170 = vand.u32 %v618, 4294901760
        %4171 = vmatpush1.msra.mxu0 %v4170
        %v4172 = vand.u32 %v637, 4294901760
        %4173 = vmatprep.subr.mxu0 %v4172
        %v4174 = vand.u32 %v636, 4294901760
        %4175 = vmatpush1.msra.mxu0 %v4174
        %4176 = vmatprep.subr.mxu0 0.0
        %4177 = vmatpush1.msra.mxu0 0.0
        %4178 = vmatprep.subr.mxu0 0.0
        %4179 = vmatpush1.msra.mxu0 0.0
        %4180 = vmatprep.subr.mxu0 0.0
        %4181 = vmatpush1.msra.mxu0 0.0
        %4182 = vmatprep.subr.mxu0 0.0
        %4183 = vmatpush1.msra.mxu0 0.0
        %4184 = vmatprep.subr.mxu0 0.0
        %4185 = vmatpush1.msra.mxu0 0.0
        %4186 = vmatprep.subr.mxu0 0.0
        %4187 = vmatpush1.msra.mxu0 0.0
        %4188 = vmatprep.subr.mxu0 0.0
        %4189 = vmatpush1.msra.mxu0 0.0
        %4190 = vmatprep.subr.mxu0 0.0
        %4191 = vmatpush1.msra.mxu0 0.0
        %4192 = vmatprep.subr.mxu0 0.0
        %4193 = vmatpush1.msra.mxu0 0.0
        %4194 = vmatprep.subr.mxu0 0.0
        %4195 = vmatpush1.msra.mxu0 0.0
        %4196 = vmatprep.subr.mxu0 0.0
        %4197 = vmatpush1.msra.mxu0 0.0
        %4198 = vmatprep.subr.mxu0 0.0
        %4199 = vmatpush1.msra.mxu0 0.0
        %4200 = vmatprep.subr.mxu0 0.0
        %4201 = vmatpush1.msra.mxu0 0.0
        %4202 = vmatprep.subr.mxu0 0.0
        %4203 = vmatpush1.msra.mxu0 0.0
        %4204 = vmatprep.subr.mxu0 0.0
        %4205 = vmatpush1.msra.mxu0 0.0
        %4206 = vmatprep.subr.mxu0 0.0
        %4207 = vmatpush1.msra.mxu0 0.0
        %4208 = vmatprep.subr.mxu0 0.0
        %4209 = vmatpush1.msra.mxu0 0.0
        %4210 = vmatprep.subr.mxu0 0.0
        %4211 = vmatpush1.msra.mxu0 0.0
        %4212 = vmatprep.subr.mxu0 0.0
        %4213 = vmatpush1.msra.mxu0 0.0
        %4214 = vmatprep.subr.mxu0 0.0
        %4215 = vmatpush1.msra.mxu0 0.0
        %4216 = vmatprep.subr.mxu0 0.0
        %4217 = vmatpush1.msra.mxu0 0.0
        %4218 = vmatprep.subr.mxu0 0.0
        %4219 = vmatpush1.msra.mxu0 0.0
        %4220 = vmatprep.subr.mxu0 0.0
        %4221 = vmatpush1.msra.mxu0 0.0
        %4222 = vmatprep.subr.mxu0 0.0
        %4223 = vmatpush1.msra.mxu0 0.0
        %4224 = vmatprep.subr.mxu0 0.0
        %4225 = vmatpush1.msra.mxu0 0.0
        %4226 = vmatprep.subr.mxu0 0.0
        %4227 = vmatpush1.msra.mxu0 0.0
        %4228 = vmatprep.subr.mxu0 0.0
        %4229 = vmatpush1.msra.mxu0 0.0
        %4230 = vmatprep.subr.mxu0 0.0
        %4231 = vmatpush1.msra.mxu0 0.0
        %4232 = vmatprep.subr.mxu0 0.0
        %4233 = vmatpush1.msra.mxu0 0.0
        %4234 = vmatprep.subr.mxu0 0.0
        %4235 = vmatpush1.msra.mxu0 0.0
        %4236 = vmatprep.mubr.f32.mxu0 0.0
        %v4237 = vand.u32 %v644, 4294901760
        %v4238 = vsub.f32 %v644, %v4237
        %v4239 = vand.u32 %v4238, 4294901760
        %4240 = vmatmul.mubr.f32.gmra.mrb[0].mxu0 %v4239
        %v4241 = vpop.f32.mrb[0].mxu0
        %v4242 = vadd.f32 %v4156, %v4241
        %v4243 = vpop.f32.mrb[0].mxu0
        %v4244 = vadd.f32 %v4158, %v4243
        %4245 = vmatprep.mubr.f32.mxu0 0.0
        %v4246 = vand.u32 %v647, 4294901760
        %v4247 = vsub.f32 %v647, %v4246
        %v4248 = vand.u32 %v4247, 4294901760
        %4249 = vmatmul.mubr.f32.gmra.mrb[0].mxu0 %v4248
        %v4250 = vpop.f32.mrb[0].mxu0
        %v4251 = vadd.f32 %v4164, %v4250
        %v4252 = vpop.f32.mrb[0].mxu0
        %v4253 = vadd.f32 %v4166, %v4252
        %4254 = vdwg.mxu0
        %v4255 = vand.u32 %v619, 4294901760
        %v4256 = vsub.f32 %v619, %v4255
        %v4257 = vand.u32 %v4256, 4294901760
        %4258 = vmatprep.subr.mxu0 %v4257
        %v4259 = vand.u32 %v618, 4294901760
        %v4260 = vsub.f32 %v618, %v4259
        %v4261 = vand.u32 %v4260, 4294901760
        %4262 = vmatpush1.msra.mxu0 %v4261
        %v4263 = vand.u32 %v637, 4294901760
        %v4264 = vsub.f32 %v637, %v4263
        %v4265 = vand.u32 %v4264, 4294901760
        %4266 = vmatprep.subr.mxu0 %v4265
        %v4267 = vand.u32 %v636, 4294901760
        %v4268 = vsub.f32 %v636, %v4267
        %v4269 = vand.u32 %v4268, 4294901760
        %4270 = vmatpush1.msra.mxu0 %v4269
        %4271 = vmatprep.subr.mxu0 0.0
        %4272 = vmatpush1.msra.mxu0 0.0
        %4273 = vmatprep.subr.mxu0 0.0
        %4274 = vmatpush1.msra.mxu0 0.0
        %4275 = vmatprep.subr.mxu0 0.0
        %4276 = vmatpush1.msra.mxu0 0.0
        %4277 = vmatprep.subr.mxu0 0.0
        %4278 = vmatpush1.msra.mxu0 0.0
        %4279 = vmatprep.subr.mxu0 0.0
        %4280 = vmatpush1.msra.mxu0 0.0
        %4281 = vmatprep.subr.mxu0 0.0
        %4282 = vmatpush1.msra.mxu0 0.0
        %4283 = vmatprep.subr.mxu0 0.0
        %4284 = vmatpush1.msra.mxu0 0.0
        %4285 = vmatprep.subr.mxu0 0.0
        %4286 = vmatpush1.msra.mxu0 0.0
        %4287 = vmatprep.subr.mxu0 0.0
        %4288 = vmatpush1.msra.mxu0 0.0
        %4289 = vmatprep.subr.mxu0 0.0
        %4290 = vmatpush1.msra.mxu0 0.0
        %4291 = vmatprep.subr.mxu0 0.0
        %4292 = vmatpush1.msra.mxu0 0.0
        %4293 = vmatprep.subr.mxu0 0.0
        %4294 = vmatpush1.msra.mxu0 0.0
        %4295 = vmatprep.subr.mxu0 0.0
        %4296 = vmatpush1.msra.mxu0 0.0
        %4297 = vmatprep.subr.mxu0 0.0
        %4298 = vmatpush1.msra.mxu0 0.0
        %4299 = vmatprep.subr.mxu0 0.0
        %4300 = vmatpush1.msra.mxu0 0.0
        %4301 = vmatprep.subr.mxu0 0.0
        %4302 = vmatpush1.msra.mxu0 0.0
        %4303 = vmatprep.subr.mxu0 0.0
        %4304 = vmatpush1.msra.mxu0 0.0
        %4305 = vmatprep.subr.mxu0 0.0
        %4306 = vmatpush1.msra.mxu0 0.0
        %4307 = vmatprep.subr.mxu0 0.0
        %4308 = vmatpush1.msra.mxu0 0.0
        %4309 = vmatprep.subr.mxu0 0.0
        %4310 = vmatpush1.msra.mxu0 0.0
        %4311 = vmatprep.subr.mxu0 0.0
        %4312 = vmatpush1.msra.mxu0 0.0
        %4313 = vmatprep.subr.mxu0 0.0
        %4314 = vmatpush1.msra.mxu0 0.0
        %4315 = vmatprep.subr.mxu0 0.0
        %4316 = vmatpush1.msra.mxu0 0.0
        %4317 = vmatprep.subr.mxu0 0.0
        %4318 = vmatpush1.msra.mxu0 0.0
        %4319 = vmatprep.subr.mxu0 0.0
        %4320 = vmatpush1.msra.mxu0 0.0
        %4321 = vmatprep.subr.mxu0 0.0
        %4322 = vmatpush1.msra.mxu0 0.0
        %4323 = vmatprep.subr.mxu0 0.0
        %4324 = vmatpush1.msra.mxu0 0.0
        %4325 = vmatprep.subr.mxu0 0.0
        %4326 = vmatpush1.msra.mxu0 0.0
        %4327 = vmatprep.subr.mxu0 0.0
        %4328 = vmatpush1.msra.mxu0 0.0
        %4329 = vmatprep.subr.mxu0 0.0
        %4330 = vmatpush1.msra.mxu0 0.0
        %4331 = vmatprep.mubr.f32.mxu0 0.0
        %v4332 = vand.u32 %v644, 4294901760
        %4333 = vmatmul.mubr.f32.gmra.mrb[0].mxu0 %v4332
        %v4334 = vpop.f32.mrb[0].mxu0
        %v4335 = vadd.f32 %v4242, %v4334
        %v4336 = vpop.f32.mrb[0].mxu0
        %v4337 = vadd.f32 %v4244, %v4336
        %4338 = vmatprep.mubr.f32.mxu0 0.0
        %v4339 = vand.u32 %v647, 4294901760
        %4340 = vmatmul.mubr.f32.gmra.mrb[0].mxu0 %v4339
        %v4341 = vpop.f32.mrb[0].mxu0
        %v4342 = vadd.f32 %v4251, %v4341
        %v4343 = vpop.f32.mrb[0].mxu0
        %v4344 = vadd.f32 %v4253, %v4343
        %4345 = vdwg.mxu0
        %v4346 = vand.u32 %v619, 4294901760
        %4347 = vmatprep.subr.mxu0 %v4346
        %v4348 = vand.u32 %v618, 4294901760
        %4349 = vmatpush1.msra.mxu0 %v4348
        %v4350 = vand.u32 %v637, 4294901760
        %4351 = vmatprep.subr.mxu0 %v4350
        %v4352 = vand.u32 %v636, 4294901760
        %4353 = vmatpush1.msra.mxu0 %v4352
        %4354 = vmatprep.subr.mxu0 0.0
        %4355 = vmatpush1.msra.mxu0 0.0
        %4356 = vmatprep.subr.mxu0 0.0
        %4357 = vmatpush1.msra.mxu0 0.0
        %4358 = vmatprep.subr.mxu0 0.0
        %4359 = vmatpush1.msra.mxu0 0.0
        %4360 = vmatprep.subr.mxu0 0.0
        %4361 = vmatpush1.msra.mxu0 0.0
        %4362 = vmatprep.subr.mxu0 0.0
        %4363 = vmatpush1.msra.mxu0 0.0
        %4364 = vmatprep.subr.mxu0 0.0
        %4365 = vmatpush1.msra.mxu0 0.0
        %4366 = vmatprep.subr.mxu0 0.0
        %4367 = vmatpush1.msra.mxu0 0.0
        %4368 = vmatprep.subr.mxu0 0.0
        %4369 = vmatpush1.msra.mxu0 0.0
        %4370 = vmatprep.subr.mxu0 0.0
        %4371 = vmatpush1.msra.mxu0 0.0
        %4372 = vmatprep.subr.mxu0 0.0
        %4373 = vmatpush1.msra.mxu0 0.0
        %4374 = vmatprep.subr.mxu0 0.0
        %4375 = vmatpush1.msra.mxu0 0.0
        %4376 = vmatprep.subr.mxu0 0.0
        %4377 = vmatpush1.msra.mxu0 0.0
        %4378 = vmatprep.subr.mxu0 0.0
        %4379 = vmatpush1.msra.mxu0 0.0
        %4380 = vmatprep.subr.mxu0 0.0
        %4381 = vmatpush1.msra.mxu0 0.0
        %4382 = vmatprep.subr.mxu0 0.0
        %4383 = vmatpush1.msra.mxu0 0.0
        %4384 = vmatprep.subr.mxu0 0.0
        %4385 = vmatpush1.msra.mxu0 0.0
        %4386 = vmatprep.subr.mxu0 0.0
        %4387 = vmatpush1.msra.mxu0 0.0
        %4388 = vmatprep.subr.mxu0 0.0
        %4389 = vmatpush1.msra.mxu0 0.0
        %4390 = vmatprep.subr.mxu0 0.0
        %4391 = vmatpush1.msra.mxu0 0.0
        %4392 = vmatprep.subr.mxu0 0.0
        %4393 = vmatpush1.msra.mxu0 0.0
        %4394 = vmatprep.subr.mxu0 0.0
        %4395 = vmatpush1.msra.mxu0 0.0
        %4396 = vmatprep.subr.mxu0 0.0
        %4397 = vmatpush1.msra.mxu0 0.0
        %4398 = vmatprep.subr.mxu0 0.0
        %4399 = vmatpush1.msra.mxu0 0.0
        %4400 = vmatprep.subr.mxu0 0.0
        %4401 = vmatpush1.msra.mxu0 0.0
        %4402 = vmatprep.subr.mxu0 0.0
        %4403 = vmatpush1.msra.mxu0 0.0
        %4404 = vmatprep.subr.mxu0 0.0
        %4405 = vmatpush1.msra.mxu0 0.0
        %4406 = vmatprep.subr.mxu0 0.0
        %4407 = vmatpush1.msra.mxu0 0.0
        %4408 = vmatprep.subr.mxu0 0.0
        %4409 = vmatpush1.msra.mxu0 0.0
        %4410 = vmatprep.subr.mxu0 0.0
        %4411 = vmatpush1.msra.mxu0 0.0
        %4412 = vmatprep.subr.mxu0 0.0
        %4413 = vmatpush1.msra.mxu0 0.0
        %4414 = vmatprep.mubr.f32.mxu0 0.0
        %v4415 = vand.u32 %v644, 4294901760
        %4416 = vmatmul.mubr.f32.gmra.mrb[0].mxu0 %v4415
        %v4417 = vpop.f32.mrb[0].mxu0
        %v4418 = vadd.f32 %v4335, %v4417
        %v4419 = vpop.f32.mrb[0].mxu0
        %v4420 = vadd.f32 %v4337, %v4419
        %4421 = vmatprep.mubr.f32.mxu0 0.0
        %v4422 = vand.u32 %v647, 4294901760
        %4423 = vmatmul.mubr.f32.gmra.mrb[0].mxu0 %v4422
        %v4424 = vpop.f32.mrb[0].mxu0
        %v4425 = vadd.f32 %v4342, %v4424
        %v4426 = vpop.f32.mrb[0].mxu0
        %v4427 = vadd.f32 %v4344, %v4426
        %4428 = vdwg.mxu0
        %v4429 = vand.u32 %v621, 4294901760
        %4430 = vmatprep.subr.mxu0 %v4429
        %v4431 = vand.u32 %v620, 4294901760
        %4432 = vmatpush1.msra.mxu0 %v4431
        %v4433 = vand.u32 %v639, 4294901760
        %4434 = vmatprep.subr.mxu0 %v4433
        %v4435 = vand.u32 %v638, 4294901760
        %4436 = vmatpush1.msra.mxu0 %v4435
        %4437 = vmatprep.subr.mxu0 0.0
        %4438 = vmatpush1.msra.mxu0 0.0
        %4439 = vmatprep.subr.mxu0 0.0
        %4440 = vmatpush1.msra.mxu0 0.0
        %4441 = vmatprep.subr.mxu0 0.0
        %4442 = vmatpush1.msra.mxu0 0.0
        %4443 = vmatprep.subr.mxu0 0.0
        %4444 = vmatpush1.msra.mxu0 0.0
        %4445 = vmatprep.subr.mxu0 0.0
        %4446 = vmatpush1.msra.mxu0 0.0
        %4447 = vmatprep.subr.mxu0 0.0
        %4448 = vmatpush1.msra.mxu0 0.0
        %4449 = vmatprep.subr.mxu0 0.0
        %4450 = vmatpush1.msra.mxu0 0.0
        %4451 = vmatprep.subr.mxu0 0.0
        %4452 = vmatpush1.msra.mxu0 0.0
        %4453 = vmatprep.subr.mxu0 0.0
        %4454 = vmatpush1.msra.mxu0 0.0
        %4455 = vmatprep.subr.mxu0 0.0
        %4456 = vmatpush1.msra.mxu0 0.0
        %4457 = vmatprep.subr.mxu0 0.0
        %4458 = vmatpush1.msra.mxu0 0.0
        %4459 = vmatprep.subr.mxu0 0.0
        %4460 = vmatpush1.msra.mxu0 0.0
        %4461 = vmatprep.subr.mxu0 0.0
        %4462 = vmatpush1.msra.mxu0 0.0
        %4463 = vmatprep.subr.mxu0 0.0
        %4464 = vmatpush1.msra.mxu0 0.0
        %4465 = vmatprep.subr.mxu0 0.0
        %4466 = vmatpush1.msra.mxu0 0.0
        %4467 = vmatprep.subr.mxu0 0.0
        %4468 = vmatpush1.msra.mxu0 0.0
        %4469 = vmatprep.subr.mxu0 0.0
        %4470 = vmatpush1.msra.mxu0 0.0
        %4471 = vmatprep.subr.mxu0 0.0
        %4472 = vmatpush1.msra.mxu0 0.0
        %4473 = vmatprep.subr.mxu0 0.0
        %4474 = vmatpush1.msra.mxu0 0.0
        %4475 = vmatprep.subr.mxu0 0.0
        %4476 = vmatpush1.msra.mxu0 0.0
        %4477 = vmatprep.subr.mxu0 0.0
        %4478 = vmatpush1.msra.mxu0 0.0
        %4479 = vmatprep.subr.mxu0 0.0
        %4480 = vmatpush1.msra.mxu0 0.0
        %4481 = vmatprep.subr.mxu0 0.0
        %4482 = vmatpush1.msra.mxu0 0.0
        %4483 = vmatprep.subr.mxu0 0.0
        %4484 = vmatpush1.msra.mxu0 0.0
        %4485 = vmatprep.subr.mxu0 0.0
        %4486 = vmatpush1.msra.mxu0 0.0
        %4487 = vmatprep.subr.mxu0 0.0
        %4488 = vmatpush1.msra.mxu0 0.0
        %4489 = vmatprep.subr.mxu0 0.0
        %4490 = vmatpush1.msra.mxu0 0.0
        %4491 = vmatprep.subr.mxu0 0.0
        %4492 = vmatpush1.msra.mxu0 0.0
        %4493 = vmatprep.subr.mxu0 0.0
        %4494 = vmatpush1.msra.mxu0 0.0
        %4495 = vmatprep.subr.mxu0 0.0
        %4496 = vmatpush1.msra.mxu0 0.0
        %4497 = vmatprep.mubr.f32.mxu0 0.0
        %v4498 = vand.u32 %v644, 4294901760
        %v4499 = vsub.f32 %v644, %v4498
        %v4500 = vand.u32 %v4499, 4294901760
        %v4501 = vsub.f32 %v4499, %v4500
        %v4502 = vand.u32 %v4501, 4294901760
        %4503 = vmatmul.mubr.f32.gmra.mrb[0].mxu0 %v4502
        %v4504 = vpop.f32.mrb[0].mxu0
        %v4505 = vadd.f32 0.0, %v4504
        %v4506 = vpop.f32.mrb[0].mxu0
        %v4507 = vadd.f32 0.0, %v4506
        %4508 = vmatprep.mubr.f32.mxu0 0.0
        %v4509 = vand.u32 %v647, 4294901760
        %v4510 = vsub.f32 %v647, %v4509
        %v4511 = vand.u32 %v4510, 4294901760
        %v4512 = vsub.f32 %v4510, %v4511
        %v4513 = vand.u32 %v4512, 4294901760
        %4514 = vmatmul.mubr.f32.gmra.mrb[0].mxu0 %v4513
        %v4515 = vpop.f32.mrb[0].mxu0
        %v4516 = vadd.f32 0.0, %v4515
        %v4517 = vpop.f32.mrb[0].mxu0
        %v4518 = vadd.f32 0.0, %v4517
        %4519 = vdwg.mxu0
        %v4520 = vand.u32 %v621, 4294901760
        %v4521 = vsub.f32 %v621, %v4520
        %v4522 = vand.u32 %v4521, 4294901760
        %v4523 = vsub.f32 %v4521, %v4522
        %v4524 = vand.u32 %v4523, 4294901760
        %4525 = vmatprep.subr.mxu0 %v4524
        %v4526 = vand.u32 %v620, 4294901760
        %v4527 = vsub.f32 %v620, %v4526
        %v4528 = vand.u32 %v4527, 4294901760
        %v4529 = vsub.f32 %v4527, %v4528
        %v4530 = vand.u32 %v4529, 4294901760
        %4531 = vmatpush1.msra.mxu0 %v4530
        %v4532 = vand.u32 %v639, 4294901760
        %v4533 = vsub.f32 %v639, %v4532
        %v4534 = vand.u32 %v4533, 4294901760
        %v4535 = vsub.f32 %v4533, %v4534
        %v4536 = vand.u32 %v4535, 4294901760
        %4537 = vmatprep.subr.mxu0 %v4536
        %v4538 = vand.u32 %v638, 4294901760
        %v4539 = vsub.f32 %v638, %v4538
        %v4540 = vand.u32 %v4539, 4294901760
        %v4541 = vsub.f32 %v4539, %v4540
        %v4542 = vand.u32 %v4541, 4294901760
        %4543 = vmatpush1.msra.mxu0 %v4542
        %4544 = vmatprep.subr.mxu0 0.0
        %4545 = vmatpush1.msra.mxu0 0.0
        %4546 = vmatprep.subr.mxu0 0.0
        %4547 = vmatpush1.msra.mxu0 0.0
        %4548 = vmatprep.subr.mxu0 0.0
        %4549 = vmatpush1.msra.mxu0 0.0
        %4550 = vmatprep.subr.mxu0 0.0
        %4551 = vmatpush1.msra.mxu0 0.0
        %4552 = vmatprep.subr.mxu0 0.0
        %4553 = vmatpush1.msra.mxu0 0.0
        %4554 = vmatprep.subr.mxu0 0.0
        %4555 = vmatpush1.msra.mxu0 0.0
        %4556 = vmatprep.subr.mxu0 0.0
        %4557 = vmatpush1.msra.mxu0 0.0
        %4558 = vmatprep.subr.mxu0 0.0
        %4559 = vmatpush1.msra.mxu0 0.0
        %4560 = vmatprep.subr.mxu0 0.0
        %4561 = vmatpush1.msra.mxu0 0.0
        %4562 = vmatprep.subr.mxu0 0.0
        %4563 = vmatpush1.msra.mxu0 0.0
        %4564 = vmatprep.subr.mxu0 0.0
        %4565 = vmatpush1.msra.mxu0 0.0
        %4566 = vmatprep.subr.mxu0 0.0
        %4567 = vmatpush1.msra.mxu0 0.0
        %4568 = vmatprep.subr.mxu0 0.0
        %4569 = vmatpush1.msra.mxu0 0.0
        %4570 = vmatprep.subr.mxu0 0.0
        %4571 = vmatpush1.msra.mxu0 0.0
        %4572 = vmatprep.subr.mxu0 0.0
        %4573 = vmatpush1.msra.mxu0 0.0
        %4574 = vmatprep.subr.mxu0 0.0
        %4575 = vmatpush1.msra.mxu0 0.0
        %4576 = vmatprep.subr.mxu0 0.0
        %4577 = vmatpush1.msra.mxu0 0.0
        %4578 = vmatprep.subr.mxu0 0.0
        %4579 = vmatpush1.msra.mxu0 0.0
        %4580 = vmatprep.subr.mxu0 0.0
        %4581 = vmatpush1.msra.mxu0 0.0
        %4582 = vmatprep.subr.mxu0 0.0
        %4583 = vmatpush1.msra.mxu0 0.0
        %4584 = vmatprep.subr.mxu0 0.0
        %4585 = vmatpush1.msra.mxu0 0.0
        %4586 = vmatprep.subr.mxu0 0.0
        %4587 = vmatpush1.msra.mxu0 0.0
        %4588 = vmatprep.subr.mxu0 0.0
        %4589 = vmatpush1.msra.mxu0 0.0
        %4590 = vmatprep.subr.mxu0 0.0
        %4591 = vmatpush1.msra.mxu0 0.0
        %4592 = vmatprep.subr.mxu0 0.0
        %4593 = vmatpush1.msra.mxu0 0.0
        %4594 = vmatprep.subr.mxu0 0.0
        %4595 = vmatpush1.msra.mxu0 0.0
        %4596 = vmatprep.subr.mxu0 0.0
        %4597 = vmatpush1.msra.mxu0 0.0
        %4598 = vmatprep.subr.mxu0 0.0
        %4599 = vmatpush1.msra.mxu0 0.0
        %4600 = vmatprep.subr.mxu0 0.0
        %4601 = vmatpush1.msra.mxu0 0.0
        %4602 = vmatprep.subr.mxu0 0.0
        %4603 = vmatpush1.msra.mxu0 0.0
        %4604 = vmatprep.mubr.f32.mxu0 0.0
        %v4605 = vand.u32 %v644, 4294901760
        %4606 = vmatmul.mubr.f32.gmra.mrb[0].mxu0 %v4605
        %v4607 = vpop.f32.mrb[0].mxu0
        %v4608 = vadd.f32 %v4505, %v4607
        %v4609 = vpop.f32.mrb[0].mxu0
        %v4610 = vadd.f32 %v4507, %v4609
        %4611 = vmatprep.mubr.f32.mxu0 0.0
        %v4612 = vand.u32 %v647, 4294901760
        %4613 = vmatmul.mubr.f32.gmra.mrb[0].mxu0 %v4612
        %v4614 = vpop.f32.mrb[0].mxu0
        %v4615 = vadd.f32 %v4516, %v4614
        %v4616 = vpop.f32.mrb[0].mxu0
        %v4617 = vadd.f32 %v4518, %v4616
        %4618 = vdwg.mxu0
        %v4619 = vand.u32 %v621, 4294901760
        %v4620 = vsub.f32 %v621, %v4619
        %4621 = vmatprep.subr.mxu0 %v4620
        %v4622 = vand.u32 %v620, 4294901760
        %v4623 = vsub.f32 %v620, %v4622
        %4624 = vmatpush1.msra.mxu0 %v4623
        %v4625 = vand.u32 %v639, 4294901760
        %v4626 = vsub.f32 %v639, %v4625
        %4627 = vmatprep.subr.mxu0 %v4626
        %v4628 = vand.u32 %v638, 4294901760
        %v4629 = vsub.f32 %v638, %v4628
        %4630 = vmatpush1.msra.mxu0 %v4629
        %4631 = vmatprep.subr.mxu0 0.0
        %4632 = vmatpush1.msra.mxu0 0.0
        %4633 = vmatprep.subr.mxu0 0.0
        %4634 = vmatpush1.msra.mxu0 0.0
        %4635 = vmatprep.subr.mxu0 0.0
        %4636 = vmatpush1.msra.mxu0 0.0
        %4637 = vmatprep.subr.mxu0 0.0
        %4638 = vmatpush1.msra.mxu0 0.0
        %4639 = vmatprep.subr.mxu0 0.0
        %4640 = vmatpush1.msra.mxu0 0.0
        %4641 = vmatprep.subr.mxu0 0.0
        %4642 = vmatpush1.msra.mxu0 0.0
        %4643 = vmatprep.subr.mxu0 0.0
        %4644 = vmatpush1.msra.mxu0 0.0
        %4645 = vmatprep.subr.mxu0 0.0
        %4646 = vmatpush1.msra.mxu0 0.0
        %4647 = vmatprep.subr.mxu0 0.0
        %4648 = vmatpush1.msra.mxu0 0.0
        %4649 = vmatprep.subr.mxu0 0.0
        %4650 = vmatpush1.msra.mxu0 0.0
        %4651 = vmatprep.subr.mxu0 0.0
        %4652 = vmatpush1.msra.mxu0 0.0
        %4653 = vmatprep.subr.mxu0 0.0
        %4654 = vmatpush1.msra.mxu0 0.0
        %4655 = vmatprep.subr.mxu0 0.0
        %4656 = vmatpush1.msra.mxu0 0.0
        %4657 = vmatprep.subr.mxu0 0.0
        %4658 = vmatpush1.msra.mxu0 0.0
        %4659 = vmatprep.subr.mxu0 0.0
        %4660 = vmatpush1.msra.mxu0 0.0
        %4661 = vmatprep.subr.mxu0 0.0
        %4662 = vmatpush1.msra.mxu0 0.0
        %4663 = vmatprep.subr.mxu0 0.0
        %4664 = vmatpush1.msra.mxu0 0.0
        %4665 = vmatprep.subr.mxu0 0.0
        %4666 = vmatpush1.msra.mxu0 0.0
        %4667 = vmatprep.subr.mxu0 0.0
        %4668 = vmatpush1.msra.mxu0 0.0
        %4669 = vmatprep.subr.mxu0 0.0
        %4670 = vmatpush1.msra.mxu0 0.0
        %4671 = vmatprep.subr.mxu0 0.0
        %4672 = vmatpush1.msra.mxu0 0.0
        %4673 = vmatprep.subr.mxu0 0.0
        %4674 = vmatpush1.msra.mxu0 0.0
        %4675 = vmatprep.subr.mxu0 0.0
        %4676 = vmatpush1.msra.mxu0 0.0
        %4677 = vmatprep.subr.mxu0 0.0
        %4678 = vmatpush1.msra.mxu0 0.0
        %4679 = vmatprep.subr.mxu0 0.0
        %4680 = vmatpush1.msra.mxu0 0.0
        %4681 = vmatprep.subr.mxu0 0.0
        %4682 = vmatpush1.msra.mxu0 0.0
        %4683 = vmatprep.subr.mxu0 0.0
        %4684 = vmatpush1.msra.mxu0 0.0
        %4685 = vmatprep.subr.mxu0 0.0
        %4686 = vmatpush1.msra.mxu0 0.0
        %4687 = vmatprep.subr.mxu0 0.0
        %4688 = vmatpush1.msra.mxu0 0.0
        %4689 = vmatprep.subr.mxu0 0.0
        %4690 = vmatpush1.msra.mxu0 0.0
        %4691 = vmatprep.mubr.f32.mxu0 0.0
        %v4692 = vand.u32 %v644, 4294901760
        %v4693 = vsub.f32 %v644, %v4692
        %4694 = vmatmul.mubr.f32.gmra.mrb[0].mxu0 %v4693
        %v4695 = vpop.f32.mrb[0].mxu0
        %v4696 = vadd.f32 %v4608, %v4695
        %v4697 = vpop.f32.mrb[0].mxu0
        %v4698 = vadd.f32 %v4610, %v4697
        %4699 = vmatprep.mubr.f32.mxu0 0.0
        %v4700 = vand.u32 %v647, 4294901760
        %v4701 = vsub.f32 %v647, %v4700
        %4702 = vmatmul.mubr.f32.gmra.mrb[0].mxu0 %v4701
        %v4703 = vpop.f32.mrb[0].mxu0
        %v4704 = vadd.f32 %v4615, %v4703
        %v4705 = vpop.f32.mrb[0].mxu0
        %v4706 = vadd.f32 %v4617, %v4705
        %4707 = vdwg.mxu0
        %v4708 = vand.u32 %v621, 4294901760
        %4709 = vmatprep.subr.mxu0 %v4708
        %v4710 = vand.u32 %v620, 4294901760
        %4711 = vmatpush1.msra.mxu0 %v4710
        %v4712 = vand.u32 %v639, 4294901760
        %4713 = vmatprep.subr.mxu0 %v4712
        %v4714 = vand.u32 %v638, 4294901760
        %4715 = vmatpush1.msra.mxu0 %v4714
        %4716 = vmatprep.subr.mxu0 0.0
        %4717 = vmatpush1.msra.mxu0 0.0
        %4718 = vmatprep.subr.mxu0 0.0
        %4719 = vmatpush1.msra.mxu0 0.0
        %4720 = vmatprep.subr.mxu0 0.0
        %4721 = vmatpush1.msra.mxu0 0.0
        %4722 = vmatprep.subr.mxu0 0.0
        %4723 = vmatpush1.msra.mxu0 0.0
        %4724 = vmatprep.subr.mxu0 0.0
        %4725 = vmatpush1.msra.mxu0 0.0
        %4726 = vmatprep.subr.mxu0 0.0
        %4727 = vmatpush1.msra.mxu0 0.0
        %4728 = vmatprep.subr.mxu0 0.0
        %4729 = vmatpush1.msra.mxu0 0.0
        %4730 = vmatprep.subr.mxu0 0.0
        %4731 = vmatpush1.msra.mxu0 0.0
        %4732 = vmatprep.subr.mxu0 0.0
        %4733 = vmatpush1.msra.mxu0 0.0
        %4734 = vmatprep.subr.mxu0 0.0
        %4735 = vmatpush1.msra.mxu0 0.0
        %4736 = vmatprep.subr.mxu0 0.0
        %4737 = vmatpush1.msra.mxu0 0.0
        %4738 = vmatprep.subr.mxu0 0.0
        %4739 = vmatpush1.msra.mxu0 0.0
        %4740 = vmatprep.subr.mxu0 0.0
        %4741 = vmatpush1.msra.mxu0 0.0
        %4742 = vmatprep.subr.mxu0 0.0
        %4743 = vmatpush1.msra.mxu0 0.0
        %4744 = vmatprep.subr.mxu0 0.0
        %4745 = vmatpush1.msra.mxu0 0.0
        %4746 = vmatprep.subr.mxu0 0.0
        %4747 = vmatpush1.msra.mxu0 0.0
        %4748 = vmatprep.subr.mxu0 0.0
        %4749 = vmatpush1.msra.mxu0 0.0
        %4750 = vmatprep.subr.mxu0 0.0
        %4751 = vmatpush1.msra.mxu0 0.0
        %4752 = vmatprep.subr.mxu0 0.0
        %4753 = vmatpush1.msra.mxu0 0.0
        %4754 = vmatprep.subr.mxu0 0.0
        %4755 = vmatpush1.msra.mxu0 0.0
        %4756 = vmatprep.subr.mxu0 0.0
        %4757 = vmatpush1.msra.mxu0 0.0
        %4758 = vmatprep.subr.mxu0 0.0
        %4759 = vmatpush1.msra.mxu0 0.0
        %4760 = vmatprep.subr.mxu0 0.0
        %4761 = vmatpush1.msra.mxu0 0.0
        %4762 = vmatprep.subr.mxu0 0.0
        %4763 = vmatpush1.msra.mxu0 0.0
        %4764 = vmatprep.subr.mxu0 0.0
        %4765 = vmatpush1.msra.mxu0 0.0
        %4766 = vmatprep.subr.mxu0 0.0
        %4767 = vmatpush1.msra.mxu0 0.0
        %4768 = vmatprep.subr.mxu0 0.0
        %4769 = vmatpush1.msra.mxu0 0.0
        %4770 = vmatprep.subr.mxu0 0.0
        %4771 = vmatpush1.msra.mxu0 0.0
        %4772 = vmatprep.subr.mxu0 0.0
        %4773 = vmatpush1.msra.mxu0 0.0
        %4774 = vmatprep.subr.mxu0 0.0
        %4775 = vmatpush1.msra.mxu0 0.0
        %4776 = vmatprep.mubr.f32.mxu0 0.0
        %v4777 = vand.u32 %v644, 4294901760
        %v4778 = vsub.f32 %v644, %v4777
        %v4779 = vand.u32 %v4778, 4294901760
        %4780 = vmatmul.mubr.f32.gmra.mrb[0].mxu0 %v4779
        %v4781 = vpop.f32.mrb[0].mxu0
        %v4782 = vadd.f32 %v4696, %v4781
        %v4783 = vpop.f32.mrb[0].mxu0
        %v4784 = vadd.f32 %v4698, %v4783
        %4785 = vmatprep.mubr.f32.mxu0 0.0
        %v4786 = vand.u32 %v647, 4294901760
        %v4787 = vsub.f32 %v647, %v4786
        %v4788 = vand.u32 %v4787, 4294901760
        %4789 = vmatmul.mubr.f32.gmra.mrb[0].mxu0 %v4788
        %v4790 = vpop.f32.mrb[0].mxu0
        %v4791 = vadd.f32 %v4704, %v4790
        %v4792 = vpop.f32.mrb[0].mxu0
        %v4793 = vadd.f32 %v4706, %v4792
        %4794 = vdwg.mxu0
        %v4795 = vand.u32 %v621, 4294901760
        %v4796 = vsub.f32 %v621, %v4795
        %v4797 = vand.u32 %v4796, 4294901760
        %4798 = vmatprep.subr.mxu0 %v4797
        %v4799 = vand.u32 %v620, 4294901760
        %v4800 = vsub.f32 %v620, %v4799
        %v4801 = vand.u32 %v4800, 4294901760
        %4802 = vmatpush1.msra.mxu0 %v4801
        %v4803 = vand.u32 %v639, 4294901760
        %v4804 = vsub.f32 %v639, %v4803
        %v4805 = vand.u32 %v4804, 4294901760
        %4806 = vmatprep.subr.mxu0 %v4805
        %v4807 = vand.u32 %v638, 4294901760
        %v4808 = vsub.f32 %v638, %v4807
        %v4809 = vand.u32 %v4808, 4294901760
        %4810 = vmatpush1.msra.mxu0 %v4809
        %4811 = vmatprep.subr.mxu0 0.0
        %4812 = vmatpush1.msra.mxu0 0.0
        %4813 = vmatprep.subr.mxu0 0.0
        %4814 = vmatpush1.msra.mxu0 0.0
        %4815 = vmatprep.subr.mxu0 0.0
        %4816 = vmatpush1.msra.mxu0 0.0
        %4817 = vmatprep.subr.mxu0 0.0
        %4818 = vmatpush1.msra.mxu0 0.0
        %4819 = vmatprep.subr.mxu0 0.0
        %4820 = vmatpush1.msra.mxu0 0.0
        %4821 = vmatprep.subr.mxu0 0.0
        %4822 = vmatpush1.msra.mxu0 0.0
        %4823 = vmatprep.subr.mxu0 0.0
        %4824 = vmatpush1.msra.mxu0 0.0
        %4825 = vmatprep.subr.mxu0 0.0
        %4826 = vmatpush1.msra.mxu0 0.0
        %4827 = vmatprep.subr.mxu0 0.0
        %4828 = vmatpush1.msra.mxu0 0.0
        %4829 = vmatprep.subr.mxu0 0.0
        %4830 = vmatpush1.msra.mxu0 0.0
        %4831 = vmatprep.subr.mxu0 0.0
        %4832 = vmatpush1.msra.mxu0 0.0
        %4833 = vmatprep.subr.mxu0 0.0
        %4834 = vmatpush1.msra.mxu0 0.0
        %4835 = vmatprep.subr.mxu0 0.0
        %4836 = vmatpush1.msra.mxu0 0.0
        %4837 = vmatprep.subr.mxu0 0.0
        %4838 = vmatpush1.msra.mxu0 0.0
        %4839 = vmatprep.subr.mxu0 0.0
        %4840 = vmatpush1.msra.mxu0 0.0
        %4841 = vmatprep.subr.mxu0 0.0
        %4842 = vmatpush1.msra.mxu0 0.0
        %4843 = vmatprep.subr.mxu0 0.0
        %4844 = vmatpush1.msra.mxu0 0.0
        %4845 = vmatprep.subr.mxu0 0.0
        %4846 = vmatpush1.msra.mxu0 0.0
        %4847 = vmatprep.subr.mxu0 0.0
        %4848 = vmatpush1.msra.mxu0 0.0
        %4849 = vmatprep.subr.mxu0 0.0
        %4850 = vmatpush1.msra.mxu0 0.0
        %4851 = vmatprep.subr.mxu0 0.0
        %4852 = vmatpush1.msra.mxu0 0.0
        %4853 = vmatprep.subr.mxu0 0.0
        %4854 = vmatpush1.msra.mxu0 0.0
        %4855 = vmatprep.subr.mxu0 0.0
        %4856 = vmatpush1.msra.mxu0 0.0
        %4857 = vmatprep.subr.mxu0 0.0
        %4858 = vmatpush1.msra.mxu0 0.0
        %4859 = vmatprep.subr.mxu0 0.0
        %4860 = vmatpush1.msra.mxu0 0.0
        %4861 = vmatprep.subr.mxu0 0.0
        %4862 = vmatpush1.msra.mxu0 0.0
        %4863 = vmatprep.subr.mxu0 0.0
        %4864 = vmatpush1.msra.mxu0 0.0
        %4865 = vmatprep.subr.mxu0 0.0
        %4866 = vmatpush1.msra.mxu0 0.0
        %4867 = vmatprep.subr.mxu0 0.0
        %4868 = vmatpush1.msra.mxu0 0.0
        %4869 = vmatprep.subr.mxu0 0.0
        %4870 = vmatpush1.msra.mxu0 0.0
        %4871 = vmatprep.mubr.f32.mxu0 0.0
        %v4872 = vand.u32 %v644, 4294901760
        %4873 = vmatmul.mubr.f32.gmra.mrb[0].mxu0 %v4872
        %v4874 = vpop.f32.mrb[0].mxu0
        %v4875 = vadd.f32 %v4782, %v4874
        %v4876 = vpop.f32.mrb[0].mxu0
        %v4877 = vadd.f32 %v4784, %v4876
        %4878 = vmatprep.mubr.f32.mxu0 0.0
        %v4879 = vand.u32 %v647, 4294901760
        %4880 = vmatmul.mubr.f32.gmra.mrb[0].mxu0 %v4879
        %v4881 = vpop.f32.mrb[0].mxu0
        %v4882 = vadd.f32 %v4791, %v4881
        %v4883 = vpop.f32.mrb[0].mxu0
        %v4884 = vadd.f32 %v4793, %v4883
        %4885 = vdwg.mxu0
        %v4886 = vand.u32 %v621, 4294901760
        %4887 = vmatprep.subr.mxu0 %v4886
        %v4888 = vand.u32 %v620, 4294901760
        %4889 = vmatpush1.msra.mxu0 %v4888
        %v4890 = vand.u32 %v639, 4294901760
        %4891 = vmatprep.subr.mxu0 %v4890
        %v4892 = vand.u32 %v638, 4294901760
        %4893 = vmatpush1.msra.mxu0 %v4892
        %4894 = vmatprep.subr.mxu0 0.0
        %4895 = vmatpush1.msra.mxu0 0.0
        %4896 = vmatprep.subr.mxu0 0.0
        %4897 = vmatpush1.msra.mxu0 0.0
        %4898 = vmatprep.subr.mxu0 0.0
        %4899 = vmatpush1.msra.mxu0 0.0
        %4900 = vmatprep.subr.mxu0 0.0
        %4901 = vmatpush1.msra.mxu0 0.0
        %4902 = vmatprep.subr.mxu0 0.0
        %4903 = vmatpush1.msra.mxu0 0.0
        %4904 = vmatprep.subr.mxu0 0.0
        %4905 = vmatpush1.msra.mxu0 0.0
        %4906 = vmatprep.subr.mxu0 0.0
        %4907 = vmatpush1.msra.mxu0 0.0
        %4908 = vmatprep.subr.mxu0 0.0
        %4909 = vmatpush1.msra.mxu0 0.0
        %4910 = vmatprep.subr.mxu0 0.0
        %4911 = vmatpush1.msra.mxu0 0.0
        %4912 = vmatprep.subr.mxu0 0.0
        %4913 = vmatpush1.msra.mxu0 0.0
        %4914 = vmatprep.subr.mxu0 0.0
        %4915 = vmatpush1.msra.mxu0 0.0
        %4916 = vmatprep.subr.mxu0 0.0
        %4917 = vmatpush1.msra.mxu0 0.0
        %4918 = vmatprep.subr.mxu0 0.0
        %4919 = vmatpush1.msra.mxu0 0.0
        %4920 = vmatprep.subr.mxu0 0.0
        %4921 = vmatpush1.msra.mxu0 0.0
        %4922 = vmatprep.subr.mxu0 0.0
        %4923 = vmatpush1.msra.mxu0 0.0
        %4924 = vmatprep.subr.mxu0 0.0
        %4925 = vmatpush1.msra.mxu0 0.0
        %4926 = vmatprep.subr.mxu0 0.0
        %4927 = vmatpush1.msra.mxu0 0.0
        %4928 = vmatprep.subr.mxu0 0.0
        %4929 = vmatpush1.msra.mxu0 0.0
        %4930 = vmatprep.subr.mxu0 0.0
        %4931 = vmatpush1.msra.mxu0 0.0
        %4932 = vmatprep.subr.mxu0 0.0
        %4933 = vmatpush1.msra.mxu0 0.0
        %4934 = vmatprep.subr.mxu0 0.0
        %4935 = vmatpush1.msra.mxu0 0.0
        %4936 = vmatprep.subr.mxu0 0.0
        %4937 = vmatpush1.msra.mxu0 0.0
        %4938 = vmatprep.subr.mxu0 0.0
        %4939 = vmatpush1.msra.mxu0 0.0
        %4940 = vmatprep.subr.mxu0 0.0
        %4941 = vmatpush1.msra.mxu0 0.0
        %4942 = vmatprep.subr.mxu0 0.0
        %4943 = vmatpush1.msra.mxu0 0.0
        %4944 = vmatprep.subr.mxu0 0.0
        %4945 = vmatpush1.msra.mxu0 0.0
        %4946 = vmatprep.subr.mxu0 0.0
        %4947 = vmatpush1.msra.mxu0 0.0
        %4948 = vmatprep.subr.mxu0 0.0
        %4949 = vmatpush1.msra.mxu0 0.0
        %4950 = vmatprep.subr.mxu0 0.0
        %4951 = vmatpush1.msra.mxu0 0.0
        %4952 = vmatprep.subr.mxu0 0.0
        %4953 = vmatpush1.msra.mxu0 0.0
        %4954 = vmatprep.mubr.f32.mxu0 0.0
        %v4955 = vand.u32 %v644, 4294901760
        %4956 = vmatmul.mubr.f32.gmra.mrb[0].mxu0 %v4955
        %v4957 = vpop.f32.mrb[0].mxu0
        %v4958 = vadd.f32 %v4875, %v4957
        %v4959 = vpop.f32.mrb[0].mxu0
        %v4960 = vadd.f32 %v4877, %v4959
        %4961 = vmatprep.mubr.f32.mxu0 0.0
        %v4962 = vand.u32 %v647, 4294901760
        %4963 = vmatmul.mubr.f32.gmra.mrb[0].mxu0 %v4962
        %v4964 = vpop.f32.mrb[0].mxu0
        %v4965 = vadd.f32 %v4882, %v4964
        %v4966 = vpop.f32.mrb[0].mxu0
        %v4967 = vadd.f32 %v4884, %v4966
        %4968 = vdwg.mxu0
        %v4969 = vand.u32 %v623, 4294901760
        %4970 = vmatprep.subr.mxu0 %v4969
        %v4971 = vand.u32 %v622, 4294901760
        %4972 = vmatpush1.msra.mxu0 %v4971
        %v4973 = vand.u32 %v641, 4294901760
        %4974 = vmatprep.subr.mxu0 %v4973
        %v4975 = vand.u32 %v640, 4294901760
        %4976 = vmatpush1.msra.mxu0 %v4975
        %4977 = vmatprep.subr.mxu0 0.0
        %4978 = vmatpush1.msra.mxu0 0.0
        %4979 = vmatprep.subr.mxu0 0.0
        %4980 = vmatpush1.msra.mxu0 0.0
        %4981 = vmatprep.subr.mxu0 0.0
        %4982 = vmatpush1.msra.mxu0 0.0
        %4983 = vmatprep.subr.mxu0 0.0
        %4984 = vmatpush1.msra.mxu0 0.0
        %4985 = vmatprep.subr.mxu0 0.0
        %4986 = vmatpush1.msra.mxu0 0.0
        %4987 = vmatprep.subr.mxu0 0.0
        %4988 = vmatpush1.msra.mxu0 0.0
        %4989 = vmatprep.subr.mxu0 0.0
        %4990 = vmatpush1.msra.mxu0 0.0
        %4991 = vmatprep.subr.mxu0 0.0
        %4992 = vmatpush1.msra.mxu0 0.0
        %4993 = vmatprep.subr.mxu0 0.0
        %4994 = vmatpush1.msra.mxu0 0.0
        %4995 = vmatprep.subr.mxu0 0.0
        %4996 = vmatpush1.msra.mxu0 0.0
        %4997 = vmatprep.subr.mxu0 0.0
        %4998 = vmatpush1.msra.mxu0 0.0
        %4999 = vmatprep.subr.mxu0 0.0
        %5000 = vmatpush1.msra.mxu0 0.0
        %5001 = vmatprep.subr.mxu0 0.0
        %5002 = vmatpush1.msra.mxu0 0.0
        %5003 = vmatprep.subr.mxu0 0.0
        %5004 = vmatpush1.msra.mxu0 0.0
        %5005 = vmatprep.subr.mxu0 0.0
        %5006 = vmatpush1.msra.mxu0 0.0
        %5007 = vmatprep.subr.mxu0 0.0
        %5008 = vmatpush1.msra.mxu0 0.0
        %5009 = vmatprep.subr.mxu0 0.0
        %5010 = vmatpush1.msra.mxu0 0.0
        %5011 = vmatprep.subr.mxu0 0.0
        %5012 = vmatpush1.msra.mxu0 0.0
        %5013 = vmatprep.subr.mxu0 0.0
        %5014 = vmatpush1.msra.mxu0 0.0
        %5015 = vmatprep.subr.mxu0 0.0
        %5016 = vmatpush1.msra.mxu0 0.0
        %5017 = vmatprep.subr.mxu0 0.0
        %5018 = vmatpush1.msra.mxu0 0.0
        %5019 = vmatprep.subr.mxu0 0.0
        %5020 = vmatpush1.msra.mxu0 0.0
        %5021 = vmatprep.subr.mxu0 0.0
        %5022 = vmatpush1.msra.mxu0 0.0
        %5023 = vmatprep.subr.mxu0 0.0
        %5024 = vmatpush1.msra.mxu0 0.0
        %5025 = vmatprep.subr.mxu0 0.0
        %5026 = vmatpush1.msra.mxu0 0.0
        %5027 = vmatprep.subr.mxu0 0.0
        %5028 = vmatpush1.msra.mxu0 0.0
        %5029 = vmatprep.subr.mxu0 0.0
        %5030 = vmatpush1.msra.mxu0 0.0
        %5031 = vmatprep.subr.mxu0 0.0
        %5032 = vmatpush1.msra.mxu0 0.0
        %5033 = vmatprep.subr.mxu0 0.0
        %5034 = vmatpush1.msra.mxu0 0.0
        %5035 = vmatprep.subr.mxu0 0.0
        %5036 = vmatpush1.msra.mxu0 0.0
        %5037 = vmatprep.mubr.f32.mxu0 0.0
        %v5038 = vand.u32 %v644, 4294901760
        %v5039 = vsub.f32 %v644, %v5038
        %v5040 = vand.u32 %v5039, 4294901760
        %v5041 = vsub.f32 %v5039, %v5040
        %v5042 = vand.u32 %v5041, 4294901760
        %5043 = vmatmul.mubr.f32.gmra.mrb[0].mxu0 %v5042
        %v5044 = vpop.f32.mrb[0].mxu0
        %v5045 = vadd.f32 0.0, %v5044
        %v5046 = vpop.f32.mrb[0].mxu0
        %v5047 = vadd.f32 0.0, %v5046
        %5048 = vmatprep.mubr.f32.mxu0 0.0
        %v5049 = vand.u32 %v647, 4294901760
        %v5050 = vsub.f32 %v647, %v5049
        %v5051 = vand.u32 %v5050, 4294901760
        %v5052 = vsub.f32 %v5050, %v5051
        %v5053 = vand.u32 %v5052, 4294901760
        %5054 = vmatmul.mubr.f32.gmra.mrb[0].mxu0 %v5053
        %v5055 = vpop.f32.mrb[0].mxu0
        %v5056 = vadd.f32 0.0, %v5055
        %v5057 = vpop.f32.mrb[0].mxu0
        %v5058 = vadd.f32 0.0, %v5057
        %5059 = vdwg.mxu0
        %v5060 = vand.u32 %v623, 4294901760
        %v5061 = vsub.f32 %v623, %v5060
        %v5062 = vand.u32 %v5061, 4294901760
        %v5063 = vsub.f32 %v5061, %v5062
        %v5064 = vand.u32 %v5063, 4294901760
        %5065 = vmatprep.subr.mxu0 %v5064
        %v5066 = vand.u32 %v622, 4294901760
        %v5067 = vsub.f32 %v622, %v5066
        %v5068 = vand.u32 %v5067, 4294901760
        %v5069 = vsub.f32 %v5067, %v5068
        %v5070 = vand.u32 %v5069, 4294901760
        %5071 = vmatpush1.msra.mxu0 %v5070
        %v5072 = vand.u32 %v641, 4294901760
        %v5073 = vsub.f32 %v641, %v5072
        %v5074 = vand.u32 %v5073, 4294901760
        %v5075 = vsub.f32 %v5073, %v5074
        %v5076 = vand.u32 %v5075, 4294901760
        %5077 = vmatprep.subr.mxu0 %v5076
        %v5078 = vand.u32 %v640, 4294901760
        %v5079 = vsub.f32 %v640, %v5078
        %v5080 = vand.u32 %v5079, 4294901760
        %v5081 = vsub.f32 %v5079, %v5080
        %v5082 = vand.u32 %v5081, 4294901760
        %5083 = vmatpush1.msra.mxu0 %v5082
        %5084 = vmatprep.subr.mxu0 0.0
        %5085 = vmatpush1.msra.mxu0 0.0
        %5086 = vmatprep.subr.mxu0 0.0
        %5087 = vmatpush1.msra.mxu0 0.0
        %5088 = vmatprep.subr.mxu0 0.0
        %5089 = vmatpush1.msra.mxu0 0.0
        %5090 = vmatprep.subr.mxu0 0.0
        %5091 = vmatpush1.msra.mxu0 0.0
        %5092 = vmatprep.subr.mxu0 0.0
        %5093 = vmatpush1.msra.mxu0 0.0
        %5094 = vmatprep.subr.mxu0 0.0
        %5095 = vmatpush1.msra.mxu0 0.0
        %5096 = vmatprep.subr.mxu0 0.0
        %5097 = vmatpush1.msra.mxu0 0.0
        %5098 = vmatprep.subr.mxu0 0.0
        %5099 = vmatpush1.msra.mxu0 0.0
        %5100 = vmatprep.subr.mxu0 0.0
        %5101 = vmatpush1.msra.mxu0 0.0
        %5102 = vmatprep.subr.mxu0 0.0
        %5103 = vmatpush1.msra.mxu0 0.0
        %5104 = vmatprep.subr.mxu0 0.0
        %5105 = vmatpush1.msra.mxu0 0.0
        %5106 = vmatprep.subr.mxu0 0.0
        %5107 = vmatpush1.msra.mxu0 0.0
        %5108 = vmatprep.subr.mxu0 0.0
        %5109 = vmatpush1.msra.mxu0 0.0
        %5110 = vmatprep.subr.mxu0 0.0
        %5111 = vmatpush1.msra.mxu0 0.0
        %5112 = vmatprep.subr.mxu0 0.0
        %5113 = vmatpush1.msra.mxu0 0.0
        %5114 = vmatprep.subr.mxu0 0.0
        %5115 = vmatpush1.msra.mxu0 0.0
        %5116 = vmatprep.subr.mxu0 0.0
        %5117 = vmatpush1.msra.mxu0 0.0
        %5118 = vmatprep.subr.mxu0 0.0
        %5119 = vmatpush1.msra.mxu0 0.0
        %5120 = vmatprep.subr.mxu0 0.0
        %5121 = vmatpush1.msra.mxu0 0.0
        %5122 = vmatprep.subr.mxu0 0.0
        %5123 = vmatpush1.msra.mxu0 0.0
        %5124 = vmatprep.subr.mxu0 0.0
        %5125 = vmatpush1.msra.mxu0 0.0
        %5126 = vmatprep.subr.mxu0 0.0
        %5127 = vmatpush1.msra.mxu0 0.0
        %5128 = vmatprep.subr.mxu0 0.0
        %5129 = vmatpush1.msra.mxu0 0.0
        %5130 = vmatprep.subr.mxu0 0.0
        %5131 = vmatpush1.msra.mxu0 0.0
        %5132 = vmatprep.subr.mxu0 0.0
        %5133 = vmatpush1.msra.mxu0 0.0
        %5134 = vmatprep.subr.mxu0 0.0
        %5135 = vmatpush1.msra.mxu0 0.0
        %5136 = vmatprep.subr.mxu0 0.0
        %5137 = vmatpush1.msra.mxu0 0.0
        %5138 = vmatprep.subr.mxu0 0.0
        %5139 = vmatpush1.msra.mxu0 0.0
        %5140 = vmatprep.subr.mxu0 0.0
        %5141 = vmatpush1.msra.mxu0 0.0
        %5142 = vmatprep.subr.mxu0 0.0
        %5143 = vmatpush1.msra.mxu0 0.0
        %5144 = vmatprep.mubr.f32.mxu0 0.0
        %v5145 = vand.u32 %v644, 4294901760
        %5146 = vmatmul.mubr.f32.gmra.mrb[0].mxu0 %v5145
        %v5147 = vpop.f32.mrb[0].mxu0
        %v5148 = vadd.f32 %v5045, %v5147
        %v5149 = vpop.f32.mrb[0].mxu0
        %v5150 = vadd.f32 %v5047, %v5149
        %5151 = vmatprep.mubr.f32.mxu0 0.0
        %v5152 = vand.u32 %v647, 4294901760
        %5153 = vmatmul.mubr.f32.gmra.mrb[0].mxu0 %v5152
        %v5154 = vpop.f32.mrb[0].mxu0
        %v5155 = vadd.f32 %v5056, %v5154
        %v5156 = vpop.f32.mrb[0].mxu0
        %v5157 = vadd.f32 %v5058, %v5156
        %5158 = vdwg.mxu0
        %v5159 = vand.u32 %v623, 4294901760
        %v5160 = vsub.f32 %v623, %v5159
        %5161 = vmatprep.subr.mxu0 %v5160
        %v5162 = vand.u32 %v622, 4294901760
        %v5163 = vsub.f32 %v622, %v5162
        %5164 = vmatpush1.msra.mxu0 %v5163
        %v5165 = vand.u32 %v641, 4294901760
        %v5166 = vsub.f32 %v641, %v5165
        %5167 = vmatprep.subr.mxu0 %v5166
        %v5168 = vand.u32 %v640, 4294901760
        %v5169 = vsub.f32 %v640, %v5168
        %5170 = vmatpush1.msra.mxu0 %v5169
        %5171 = vmatprep.subr.mxu0 0.0
        %5172 = vmatpush1.msra.mxu0 0.0
        %5173 = vmatprep.subr.mxu0 0.0
        %5174 = vmatpush1.msra.mxu0 0.0
        %5175 = vmatprep.subr.mxu0 0.0
        %5176 = vmatpush1.msra.mxu0 0.0
        %5177 = vmatprep.subr.mxu0 0.0
        %5178 = vmatpush1.msra.mxu0 0.0
        %5179 = vmatprep.subr.mxu0 0.0
        %5180 = vmatpush1.msra.mxu0 0.0
        %5181 = vmatprep.subr.mxu0 0.0
        %5182 = vmatpush1.msra.mxu0 0.0
        %5183 = vmatprep.subr.mxu0 0.0
        %5184 = vmatpush1.msra.mxu0 0.0
        %5185 = vmatprep.subr.mxu0 0.0
        %5186 = vmatpush1.msra.mxu0 0.0
        %5187 = vmatprep.subr.mxu0 0.0
        %5188 = vmatpush1.msra.mxu0 0.0
        %5189 = vmatprep.subr.mxu0 0.0
        %5190 = vmatpush1.msra.mxu0 0.0
        %5191 = vmatprep.subr.mxu0 0.0
        %5192 = vmatpush1.msra.mxu0 0.0
        %5193 = vmatprep.subr.mxu0 0.0
        %5194 = vmatpush1.msra.mxu0 0.0
        %5195 = vmatprep.subr.mxu0 0.0
        %5196 = vmatpush1.msra.mxu0 0.0
        %5197 = vmatprep.subr.mxu0 0.0
        %5198 = vmatpush1.msra.mxu0 0.0
        %5199 = vmatprep.subr.mxu0 0.0
        %5200 = vmatpush1.msra.mxu0 0.0
        %5201 = vmatprep.subr.mxu0 0.0
        %5202 = vmatpush1.msra.mxu0 0.0
        %5203 = vmatprep.subr.mxu0 0.0
        %5204 = vmatpush1.msra.mxu0 0.0
        %5205 = vmatprep.subr.mxu0 0.0
        %5206 = vmatpush1.msra.mxu0 0.0
        %5207 = vmatprep.subr.mxu0 0.0
        %5208 = vmatpush1.msra.mxu0 0.0
        %5209 = vmatprep.subr.mxu0 0.0
        %5210 = vmatpush1.msra.mxu0 0.0
        %5211 = vmatprep.subr.mxu0 0.0
        %5212 = vmatpush1.msra.mxu0 0.0
        %5213 = vmatprep.subr.mxu0 0.0
        %5214 = vmatpush1.msra.mxu0 0.0
        %5215 = vmatprep.subr.mxu0 0.0
        %5216 = vmatpush1.msra.mxu0 0.0
        %5217 = vmatprep.subr.mxu0 0.0
        %5218 = vmatpush1.msra.mxu0 0.0
        %5219 = vmatprep.subr.mxu0 0.0
        %5220 = vmatpush1.msra.mxu0 0.0
        %5221 = vmatprep.subr.mxu0 0.0
        %5222 = vmatpush1.msra.mxu0 0.0
        %5223 = vmatprep.subr.mxu0 0.0
        %5224 = vmatpush1.msra.mxu0 0.0
        %5225 = vmatprep.subr.mxu0 0.0
        %5226 = vmatpush1.msra.mxu0 0.0
        %5227 = vmatprep.subr.mxu0 0.0
        %5228 = vmatpush1.msra.mxu0 0.0
        %5229 = vmatprep.subr.mxu0 0.0
        %5230 = vmatpush1.msra.mxu0 0.0
        %5231 = vmatprep.mubr.f32.mxu0 0.0
        %v5232 = vand.u32 %v644, 4294901760
        %v5233 = vsub.f32 %v644, %v5232
        %5234 = vmatmul.mubr.f32.gmra.mrb[0].mxu0 %v5233
        %v5235 = vpop.f32.mrb[0].mxu0
        %v5236 = vadd.f32 %v5148, %v5235
        %v5237 = vpop.f32.mrb[0].mxu0
        %v5238 = vadd.f32 %v5150, %v5237
        %5239 = vmatprep.mubr.f32.mxu0 0.0
        %v5240 = vand.u32 %v647, 4294901760
        %v5241 = vsub.f32 %v647, %v5240
        %5242 = vmatmul.mubr.f32.gmra.mrb[0].mxu0 %v5241
        %v5243 = vpop.f32.mrb[0].mxu0
        %v5244 = vadd.f32 %v5155, %v5243
        %v5245 = vpop.f32.mrb[0].mxu0
        %v5246 = vadd.f32 %v5157, %v5245
        %5247 = vdwg.mxu0
        %v5248 = vand.u32 %v623, 4294901760
        %5249 = vmatprep.subr.mxu0 %v5248
        %v5250 = vand.u32 %v622, 4294901760
        %5251 = vmatpush1.msra.mxu0 %v5250
        %v5252 = vand.u32 %v641, 4294901760
        %5253 = vmatprep.subr.mxu0 %v5252
        %v5254 = vand.u32 %v640, 4294901760
        %5255 = vmatpush1.msra.mxu0 %v5254
        %5256 = vmatprep.subr.mxu0 0.0
        %5257 = vmatpush1.msra.mxu0 0.0
        %5258 = vmatprep.subr.mxu0 0.0
        %5259 = vmatpush1.msra.mxu0 0.0
        %5260 = vmatprep.subr.mxu0 0.0
        %5261 = vmatpush1.msra.mxu0 0.0
        %5262 = vmatprep.subr.mxu0 0.0
        %5263 = vmatpush1.msra.mxu0 0.0
        %5264 = vmatprep.subr.mxu0 0.0
        %5265 = vmatpush1.msra.mxu0 0.0
        %5266 = vmatprep.subr.mxu0 0.0
        %5267 = vmatpush1.msra.mxu0 0.0
        %5268 = vmatprep.subr.mxu0 0.0
        %5269 = vmatpush1.msra.mxu0 0.0
        %5270 = vmatprep.subr.mxu0 0.0
        %5271 = vmatpush1.msra.mxu0 0.0
        %5272 = vmatprep.subr.mxu0 0.0
        %5273 = vmatpush1.msra.mxu0 0.0
        %5274 = vmatprep.subr.mxu0 0.0
        %5275 = vmatpush1.msra.mxu0 0.0
        %5276 = vmatprep.subr.mxu0 0.0
        %5277 = vmatpush1.msra.mxu0 0.0
        %5278 = vmatprep.subr.mxu0 0.0
        %5279 = vmatpush1.msra.mxu0 0.0
        %5280 = vmatprep.subr.mxu0 0.0
        %5281 = vmatpush1.msra.mxu0 0.0
        %5282 = vmatprep.subr.mxu0 0.0
        %5283 = vmatpush1.msra.mxu0 0.0
        %5284 = vmatprep.subr.mxu0 0.0
        %5285 = vmatpush1.msra.mxu0 0.0
        %5286 = vmatprep.subr.mxu0 0.0
        %5287 = vmatpush1.msra.mxu0 0.0
        %5288 = vmatprep.subr.mxu0 0.0
        %5289 = vmatpush1.msra.mxu0 0.0
        %5290 = vmatprep.subr.mxu0 0.0
        %5291 = vmatpush1.msra.mxu0 0.0
        %5292 = vmatprep.subr.mxu0 0.0
        %5293 = vmatpush1.msra.mxu0 0.0
        %5294 = vmatprep.subr.mxu0 0.0
        %5295 = vmatpush1.msra.mxu0 0.0
        %5296 = vmatprep.subr.mxu0 0.0
        %5297 = vmatpush1.msra.mxu0 0.0
        %5298 = vmatprep.subr.mxu0 0.0
        %5299 = vmatpush1.msra.mxu0 0.0
        %5300 = vmatprep.subr.mxu0 0.0
        %5301 = vmatpush1.msra.mxu0 0.0
        %5302 = vmatprep.subr.mxu0 0.0
        %5303 = vmatpush1.msra.mxu0 0.0
        %5304 = vmatprep.subr.mxu0 0.0
        %5305 = vmatpush1.msra.mxu0 0.0
        %5306 = vmatprep.subr.mxu0 0.0
        %5307 = vmatpush1.msra.mxu0 0.0
        %5308 = vmatprep.subr.mxu0 0.0
        %5309 = vmatpush1.msra.mxu0 0.0
        %5310 = vmatprep.subr.mxu0 0.0
        %5311 = vmatpush1.msra.mxu0 0.0
        %5312 = vmatprep.subr.mxu0 0.0
        %5313 = vmatpush1.msra.mxu0 0.0
        %5314 = vmatprep.subr.mxu0 0.0
        %5315 = vmatpush1.msra.mxu0 0.0
        %5316 = vmatprep.mubr.f32.mxu0 0.0
        %v5317 = vand.u32 %v644, 4294901760
        %v5318 = vsub.f32 %v644, %v5317
        %v5319 = vand.u32 %v5318, 4294901760
        %5320 = vmatmul.mubr.f32.gmra.mrb[0].mxu0 %v5319
        %v5321 = vpop.f32.mrb[0].mxu0
        %v5322 = vadd.f32 %v5236, %v5321
        %v5323 = vpop.f32.mrb[0].mxu0
        %v5324 = vadd.f32 %v5238, %v5323
        %5325 = vmatprep.mubr.f32.mxu0 0.0
        %v5326 = vand.u32 %v647, 4294901760
        %v5327 = vsub.f32 %v647, %v5326
        %v5328 = vand.u32 %v5327, 4294901760
        %5329 = vmatmul.mubr.f32.gmra.mrb[0].mxu0 %v5328
        %v5330 = vpop.f32.mrb[0].mxu0
        %v5331 = vadd.f32 %v5244, %v5330
        %v5332 = vpop.f32.mrb[0].mxu0
        %v5333 = vadd.f32 %v5246, %v5332
        %5334 = vdwg.mxu0
        %v5335 = vand.u32 %v623, 4294901760
        %v5336 = vsub.f32 %v623, %v5335
        %v5337 = vand.u32 %v5336, 4294901760
        %5338 = vmatprep.subr.mxu0 %v5337
        %v5339 = vand.u32 %v622, 4294901760
        %v5340 = vsub.f32 %v622, %v5339
        %v5341 = vand.u32 %v5340, 4294901760
        %5342 = vmatpush1.msra.mxu0 %v5341
        %v5343 = vand.u32 %v641, 4294901760
        %v5344 = vsub.f32 %v641, %v5343
        %v5345 = vand.u32 %v5344, 4294901760
        %5346 = vmatprep.subr.mxu0 %v5345
        %v5347 = vand.u32 %v640, 4294901760
        %v5348 = vsub.f32 %v640, %v5347
        %v5349 = vand.u32 %v5348, 4294901760
        %5350 = vmatpush1.msra.mxu0 %v5349
        %5351 = vmatprep.subr.mxu0 0.0
        %5352 = vmatpush1.msra.mxu0 0.0
        %5353 = vmatprep.subr.mxu0 0.0
        %5354 = vmatpush1.msra.mxu0 0.0
        %5355 = vmatprep.subr.mxu0 0.0
        %5356 = vmatpush1.msra.mxu0 0.0
        %5357 = vmatprep.subr.mxu0 0.0
        %5358 = vmatpush1.msra.mxu0 0.0
        %5359 = vmatprep.subr.mxu0 0.0
        %5360 = vmatpush1.msra.mxu0 0.0
        %5361 = vmatprep.subr.mxu0 0.0
        %5362 = vmatpush1.msra.mxu0 0.0
        %5363 = vmatprep.subr.mxu0 0.0
        %5364 = vmatpush1.msra.mxu0 0.0
        %5365 = vmatprep.subr.mxu0 0.0
        %5366 = vmatpush1.msra.mxu0 0.0
        %5367 = vmatprep.subr.mxu0 0.0
        %5368 = vmatpush1.msra.mxu0 0.0
        %5369 = vmatprep.subr.mxu0 0.0
        %5370 = vmatpush1.msra.mxu0 0.0
        %5371 = vmatprep.subr.mxu0 0.0
        %5372 = vmatpush1.msra.mxu0 0.0
        %5373 = vmatprep.subr.mxu0 0.0
        %5374 = vmatpush1.msra.mxu0 0.0
        %5375 = vmatprep.subr.mxu0 0.0
        %5376 = vmatpush1.msra.mxu0 0.0
        %5377 = vmatprep.subr.mxu0 0.0
        %5378 = vmatpush1.msra.mxu0 0.0
        %5379 = vmatprep.subr.mxu0 0.0
        %5380 = vmatpush1.msra.mxu0 0.0
        %5381 = vmatprep.subr.mxu0 0.0
        %5382 = vmatpush1.msra.mxu0 0.0
        %5383 = vmatprep.subr.mxu0 0.0
        %5384 = vmatpush1.msra.mxu0 0.0
        %5385 = vmatprep.subr.mxu0 0.0
        %5386 = vmatpush1.msra.mxu0 0.0
        %5387 = vmatprep.subr.mxu0 0.0
        %5388 = vmatpush1.msra.mxu0 0.0
        %5389 = vmatprep.subr.mxu0 0.0
        %5390 = vmatpush1.msra.mxu0 0.0
        %5391 = vmatprep.subr.mxu0 0.0
        %5392 = vmatpush1.msra.mxu0 0.0
        %5393 = vmatprep.subr.mxu0 0.0
        %5394 = vmatpush1.msra.mxu0 0.0
        %5395 = vmatprep.subr.mxu0 0.0
        %5396 = vmatpush1.msra.mxu0 0.0
        %5397 = vmatprep.subr.mxu0 0.0
        %5398 = vmatpush1.msra.mxu0 0.0
        %5399 = vmatprep.subr.mxu0 0.0
        %5400 = vmatpush1.msra.mxu0 0.0
        %5401 = vmatprep.subr.mxu0 0.0
        %5402 = vmatpush1.msra.mxu0 0.0
        %5403 = vmatprep.subr.mxu0 0.0
        %5404 = vmatpush1.msra.mxu0 0.0
        %5405 = vmatprep.subr.mxu0 0.0
        %5406 = vmatpush1.msra.mxu0 0.0
        %5407 = vmatprep.subr.mxu0 0.0
        %5408 = vmatpush1.msra.mxu0 0.0
        %5409 = vmatprep.subr.mxu0 0.0
        %5410 = vmatpush1.msra.mxu0 0.0
        %5411 = vmatprep.mubr.f32.mxu0 0.0
        %v5412 = vand.u32 %v644, 4294901760
        %5413 = vmatmul.mubr.f32.gmra.mrb[0].mxu0 %v5412
        %v5414 = vpop.f32.mrb[0].mxu0
        %v5415 = vadd.f32 %v5322, %v5414
        %v5416 = vpop.f32.mrb[0].mxu0
        %v5417 = vadd.f32 %v5324, %v5416
        %5418 = vmatprep.mubr.f32.mxu0 0.0
        %v5419 = vand.u32 %v647, 4294901760
        %5420 = vmatmul.mubr.f32.gmra.mrb[0].mxu0 %v5419
        %v5421 = vpop.f32.mrb[0].mxu0
        %v5422 = vadd.f32 %v5331, %v5421
        %v5423 = vpop.f32.mrb[0].mxu0
        %v5424 = vadd.f32 %v5333, %v5423
        %5425 = vdwg.mxu0
        %v5426 = vand.u32 %v623, 4294901760
        %5427 = vmatprep.subr.mxu0 %v5426
        %v5428 = vand.u32 %v622, 4294901760
        %5429 = vmatpush1.msra.mxu0 %v5428
        %v5430 = vand.u32 %v641, 4294901760
        %5431 = vmatprep.subr.mxu0 %v5430
        %v5432 = vand.u32 %v640, 4294901760
        %5433 = vmatpush1.msra.mxu0 %v5432
        %5434 = vmatprep.subr.mxu0 0.0
        %5435 = vmatpush1.msra.mxu0 0.0
        %5436 = vmatprep.subr.mxu0 0.0
        %5437 = vmatpush1.msra.mxu0 0.0
        %5438 = vmatprep.subr.mxu0 0.0
        %5439 = vmatpush1.msra.mxu0 0.0
        %5440 = vmatprep.subr.mxu0 0.0
        %5441 = vmatpush1.msra.mxu0 0.0
        %5442 = vmatprep.subr.mxu0 0.0
        %5443 = vmatpush1.msra.mxu0 0.0
        %5444 = vmatprep.subr.mxu0 0.0
        %5445 = vmatpush1.msra.mxu0 0.0
        %5446 = vmatprep.subr.mxu0 0.0
        %5447 = vmatpush1.msra.mxu0 0.0
        %5448 = vmatprep.subr.mxu0 0.0
        %5449 = vmatpush1.msra.mxu0 0.0
        %5450 = vmatprep.subr.mxu0 0.0
        %5451 = vmatpush1.msra.mxu0 0.0
        %5452 = vmatprep.subr.mxu0 0.0
        %5453 = vmatpush1.msra.mxu0 0.0
        %5454 = vmatprep.subr.mxu0 0.0
        %5455 = vmatpush1.msra.mxu0 0.0
        %5456 = vmatprep.subr.mxu0 0.0
        %5457 = vmatpush1.msra.mxu0 0.0
        %5458 = vmatprep.subr.mxu0 0.0
        %5459 = vmatpush1.msra.mxu0 0.0
        %5460 = vmatprep.subr.mxu0 0.0
        %5461 = vmatpush1.msra.mxu0 0.0
        %5462 = vmatprep.subr.mxu0 0.0
        %5463 = vmatpush1.msra.mxu0 0.0
        %5464 = vmatprep.subr.mxu0 0.0
        %5465 = vmatpush1.msra.mxu0 0.0
        %5466 = vmatprep.subr.mxu0 0.0
        %5467 = vmatpush1.msra.mxu0 0.0
        %5468 = vmatprep.subr.mxu0 0.0
        %5469 = vmatpush1.msra.mxu0 0.0
        %5470 = vmatprep.subr.mxu0 0.0
        %5471 = vmatpush1.msra.mxu0 0.0
        %5472 = vmatprep.subr.mxu0 0.0
        %5473 = vmatpush1.msra.mxu0 0.0
        %5474 = vmatprep.subr.mxu0 0.0
        %5475 = vmatpush1.msra.mxu0 0.0
        %5476 = vmatprep.subr.mxu0 0.0
        %5477 = vmatpush1.msra.mxu0 0.0
        %5478 = vmatprep.subr.mxu0 0.0
        %5479 = vmatpush1.msra.mxu0 0.0
        %5480 = vmatprep.subr.mxu0 0.0
        %5481 = vmatpush1.msra.mxu0 0.0
        %5482 = vmatprep.subr.mxu0 0.0
        %5483 = vmatpush1.msra.mxu0 0.0
        %5484 = vmatprep.subr.mxu0 0.0
        %5485 = vmatpush1.msra.mxu0 0.0
        %5486 = vmatprep.subr.mxu0 0.0
        %5487 = vmatpush1.msra.mxu0 0.0
        %5488 = vmatprep.subr.mxu0 0.0
        %5489 = vmatpush1.msra.mxu0 0.0
        %5490 = vmatprep.subr.mxu0 0.0
        %5491 = vmatpush1.msra.mxu0 0.0
        %5492 = vmatprep.subr.mxu0 0.0
        %5493 = vmatpush1.msra.mxu0 0.0
        %5494 = vmatprep.mubr.f32.mxu0 0.0
        %v5495 = vand.u32 %v644, 4294901760
        %5496 = vmatmul.mubr.f32.gmra.mrb[0].mxu0 %v5495
        %v5497 = vpop.f32.mrb[0].mxu0
        %v5498 = vadd.f32 %v5415, %v5497
        %v5499 = vpop.f32.mrb[0].mxu0
        %v5500 = vadd.f32 %v5417, %v5499
        %5501 = vmatprep.mubr.f32.mxu0 0.0
        %v5502 = vand.u32 %v647, 4294901760
        %5503 = vmatmul.mubr.f32.gmra.mrb[0].mxu0 %v5502
        %v5504 = vpop.f32.mrb[0].mxu0
        %v5505 = vadd.f32 %v5422, %v5504
        %v5506 = vpop.f32.mrb[0].mxu0
        %v5507 = vadd.f32 %v5424, %v5506
        %5508 = vdwg.mxu0
        %v5512 = vlaneseq
        %v5513 = vshrl.u32 %v5512, 7
        %v5514 = vsub.s32 0, %v5513
        %v5515 = vrot.slane %v371, %v5514
        %v5516 = vlaneseq
        %v5517 = vshrl.u32 %v5516, 7
        %v5518 = vsub.s32 1, %v5517
        %v5519 = vrot.slane %v371, %v5518
        %v5520 = vlaneseq
        %v5521 = vshrl.u32 %v5520, 7
        %v5522 = vsub.s32 2, %v5521
        %v5523 = vrot.slane %v371, %v5522
        %v5524 = vlaneseq
        %v5525 = vshrl.u32 %v5524, 7
        %v5526 = vsub.s32 3, %v5525
        %v5527 = vrot.slane %v371, %v5526
        %v5528 = vlaneseq
        %v5529 = vshrl.u32 %v5528, 7
        %v5530 = vsub.s32 4, %v5529
        %v5531 = vrot.slane %v371, %v5530
        %v5532 = vlaneseq
        %v5533 = vshrl.u32 %v5532, 7
        %v5534 = vsub.s32 5, %v5533
        %v5535 = vrot.slane %v371, %v5534
        %v5536 = vlaneseq
        %v5537 = vshrl.u32 %v5536, 7
        %v5538 = vsub.s32 6, %v5537
        %v5539 = vrot.slane %v371, %v5538
        %v5540 = vlaneseq
        %v5541 = vshrl.u32 %v5540, 7
        %v5542 = vsub.s32 7, %v5541
        %v5543 = vrot.slane %v371, %v5542
        %v5544 = vlaneseq
        %v5545 = vshrl.u32 %v5544, 7
        %v5546 = vsub.s32 0, %v5545
        %v5547 = vrot.slane %v372, %v5546
        %v5548 = vlaneseq
        %v5549 = vshrl.u32 %v5548, 7
        %v5550 = vsub.s32 1, %v5549
        %v5551 = vrot.slane %v372, %v5550
        %v5552 = vlaneseq
        %v5553 = vshrl.u32 %v5552, 7
        %v5554 = vsub.s32 2, %v5553
        %v5555 = vrot.slane %v372, %v5554
        %v5556 = vlaneseq
        %v5557 = vshrl.u32 %v5556, 7
        %v5558 = vsub.s32 3, %v5557
        %v5559 = vrot.slane %v372, %v5558
        %v5560 = vlaneseq
        %v5561 = vshrl.u32 %v5560, 7
        %v5562 = vsub.s32 4, %v5561
        %v5563 = vrot.slane %v372, %v5562
        %v5564 = vlaneseq
        %v5565 = vshrl.u32 %v5564, 7
        %v5566 = vsub.s32 5, %v5565
        %v5567 = vrot.slane %v372, %v5566
        %v5568 = vlaneseq
        %v5569 = vshrl.u32 %v5568, 7
        %v5570 = vsub.s32 6, %v5569
        %v5571 = vrot.slane %v372, %v5570
        %v5572 = vlaneseq
        %v5573 = vshrl.u32 %v5572, 7
        %v5574 = vsub.s32 7, %v5573
        %v5575 = vrot.slane %v372, %v5574
        %v5576 = vlaneseq
        %v5577 = vshrl.u32 %v5576, 7
        %v5578 = vsub.s32 0, %v5577
        %v5579 = vrot.slane %v373, %v5578
        %v5580 = vlaneseq
        %v5581 = vshrl.u32 %v5580, 7
        %v5582 = vsub.s32 1, %v5581
        %v5583 = vrot.slane %v373, %v5582
        %v5602 = vsub.f32 %v403, %v5515
        %v5603 = vsub.f32 %v403, %v5519
        %v5604 = vsub.f32 %v403, %v5523
        %v5605 = vsub.f32 %v403, %v5527
        %v5606 = vsub.f32 %v403, %v5531
        %v5607 = vsub.f32 %v403, %v5535
        %v5608 = vsub.f32 %v403, %v5539
        %v5609 = vsub.f32 %v403, %v5543
        %v5610 = vsub.f32 %v403, %v5547
        %v5611 = vsub.f32 %v403, %v5551
        %v5612 = vsub.f32 %v403, %v5555
        %v5613 = vsub.f32 %v403, %v5559
        %v5614 = vsub.f32 %v403, %v5563
        %v5615 = vsub.f32 %v403, %v5567
        %v5616 = vsub.f32 %v403, %v5571
        %v5617 = vsub.f32 %v403, %v5575
        %v5618 = vsub.f32 %v403, %v5579
        %v5619 = vsub.f32 %v403, %v5583
        %v5620 = vsub.f32 %v404, %v5515
        %v5621 = vsub.f32 %v404, %v5519
        %v5622 = vsub.f32 %v404, %v5523
        %v5623 = vsub.f32 %v404, %v5527
        %v5624 = vsub.f32 %v404, %v5531
        %v5625 = vsub.f32 %v404, %v5535
        %v5626 = vsub.f32 %v404, %v5539
        %v5627 = vsub.f32 %v404, %v5543
        %v5628 = vsub.f32 %v404, %v5547
        %v5629 = vsub.f32 %v404, %v5551
        %v5630 = vsub.f32 %v404, %v5555
        %v5631 = vsub.f32 %v404, %v5559
        %v5632 = vsub.f32 %v404, %v5563
        %v5633 = vsub.f32 %v404, %v5567
        %v5634 = vsub.f32 %v404, %v5571
        %v5635 = vsub.f32 %v404, %v5575
        %v5636 = vsub.f32 %v404, %v5579
        %v5637 = vsub.f32 %v404, %v5583
        %v5638 = vand.u32 2147483647, %v5602
        %v5639 = vand.u32 2147483647, %v5603
        %v5640 = vand.u32 2147483647, %v5604
        %v5641 = vand.u32 2147483647, %v5605
        %v5642 = vand.u32 2147483647, %v5606
        %v5643 = vand.u32 2147483647, %v5607
        %v5644 = vand.u32 2147483647, %v5608
        %v5645 = vand.u32 2147483647, %v5609
        %v5646 = vand.u32 2147483647, %v5610
        %v5647 = vand.u32 2147483647, %v5611
        %v5648 = vand.u32 2147483647, %v5612
        %v5649 = vand.u32 2147483647, %v5613
        %v5650 = vand.u32 2147483647, %v5614
        %v5651 = vand.u32 2147483647, %v5615
        %v5652 = vand.u32 2147483647, %v5616
        %v5653 = vand.u32 2147483647, %v5617
        %v5654 = vand.u32 2147483647, %v5618
        %v5655 = vand.u32 2147483647, %v5619
        %v5656 = vand.u32 2147483647, %v5620
        %v5657 = vand.u32 2147483647, %v5621
        %v5658 = vand.u32 2147483647, %v5622
        %v5659 = vand.u32 2147483647, %v5623
        %v5660 = vand.u32 2147483647, %v5624
        %v5661 = vand.u32 2147483647, %v5625
        %v5662 = vand.u32 2147483647, %v5626
        %v5663 = vand.u32 2147483647, %v5627
        %v5664 = vand.u32 2147483647, %v5628
        %v5665 = vand.u32 2147483647, %v5629
        %v5666 = vand.u32 2147483647, %v5630
        %v5667 = vand.u32 2147483647, %v5631
        %v5668 = vand.u32 2147483647, %v5632
        %v5669 = vand.u32 2147483647, %v5633
        %v5670 = vand.u32 2147483647, %v5634
        %v5671 = vand.u32 2147483647, %v5635
        %v5672 = vand.u32 2147483647, %v5636
        %v5673 = vand.u32 2147483647, %v5637
        %v5674 = vsub.f32 1.0, %v5638
        %v5675 = vsub.f32 1.0, %v5639
        %v5676 = vsub.f32 1.0, %v5640
        %v5677 = vsub.f32 1.0, %v5641
        %v5678 = vsub.f32 1.0, %v5642
        %v5679 = vsub.f32 1.0, %v5643
        %v5680 = vsub.f32 1.0, %v5644
        %v5681 = vsub.f32 1.0, %v5645
        %v5682 = vsub.f32 1.0, %v5646
        %v5683 = vsub.f32 1.0, %v5647
        %v5684 = vsub.f32 1.0, %v5648
        %v5685 = vsub.f32 1.0, %v5649
        %v5686 = vsub.f32 1.0, %v5650
        %v5687 = vsub.f32 1.0, %v5651
        %v5688 = vsub.f32 1.0, %v5652
        %v5689 = vsub.f32 1.0, %v5653
        %v5690 = vsub.f32 1.0, %v5654
        %v5691 = vsub.f32 1.0, %v5655
        %v5692 = vsub.f32 1.0, %v5656
        %v5693 = vsub.f32 1.0, %v5657
        %v5694 = vsub.f32 1.0, %v5658
        %v5695 = vsub.f32 1.0, %v5659
        %v5696 = vsub.f32 1.0, %v5660
        %v5697 = vsub.f32 1.0, %v5661
        %v5698 = vsub.f32 1.0, %v5662
        %v5699 = vsub.f32 1.0, %v5663
        %v5700 = vsub.f32 1.0, %v5664
        %v5701 = vsub.f32 1.0, %v5665
        %v5702 = vsub.f32 1.0, %v5666
        %v5703 = vsub.f32 1.0, %v5667
        %v5704 = vsub.f32 1.0, %v5668
        %v5705 = vsub.f32 1.0, %v5669
        %v5706 = vsub.f32 1.0, %v5670
        %v5707 = vsub.f32 1.0, %v5671
        %v5708 = vsub.f32 1.0, %v5672
        %v5709 = vsub.f32 1.0, %v5673
        %v5710 = vmax.f32 %v5674, 0.0
        %v5711 = vmax.f32 %v5675, 0.0
        %v5712 = vmax.f32 %v5676, 0.0
        %v5713 = vmax.f32 %v5677, 0.0
        %v5714 = vmax.f32 %v5678, 0.0
        %v5715 = vmax.f32 %v5679, 0.0
        %v5716 = vmax.f32 %v5680, 0.0
        %v5717 = vmax.f32 %v5681, 0.0
        %v5718 = vmax.f32 %v5682, 0.0
        %v5719 = vmax.f32 %v5683, 0.0
        %v5720 = vmax.f32 %v5684, 0.0
        %v5721 = vmax.f32 %v5685, 0.0
        %v5722 = vmax.f32 %v5686, 0.0
        %v5723 = vmax.f32 %v5687, 0.0
        %v5724 = vmax.f32 %v5688, 0.0
        %v5725 = vmax.f32 %v5689, 0.0
        %v5726 = vmax.f32 %v5690, 0.0
        %v5727 = vmax.f32 %v5691, 0.0
        %v5728 = vmax.f32 %v5692, 0.0
        %v5729 = vmax.f32 %v5693, 0.0
        %v5730 = vmax.f32 %v5694, 0.0
        %v5731 = vmax.f32 %v5695, 0.0
        %v5732 = vmax.f32 %v5696, 0.0
        %v5733 = vmax.f32 %v5697, 0.0
        %v5734 = vmax.f32 %v5698, 0.0
        %v5735 = vmax.f32 %v5699, 0.0
        %v5736 = vmax.f32 %v5700, 0.0
        %v5737 = vmax.f32 %v5701, 0.0
        %v5738 = vmax.f32 %v5702, 0.0
        %v5739 = vmax.f32 %v5703, 0.0
        %v5740 = vmax.f32 %v5704, 0.0
        %v5741 = vmax.f32 %v5705, 0.0
        %v5742 = vmax.f32 %v5706, 0.0
        %v5743 = vmax.f32 %v5707, 0.0
        %v5744 = vmax.f32 %v5708, 0.0
        %v5745 = vmax.f32 %v5709, 0.0
        %v5746 = vmul.f32 %v5710, %v1178
        %v5747 = vmul.f32 %v5711, %v1180
        %v5748 = vmul.f32 %v5712, %v1718
        %v5749 = vmul.f32 %v5713, %v1720
        %v5750 = vmul.f32 %v5714, %v2258
        %v5751 = vmul.f32 %v5715, %v2260
        %v5752 = vmul.f32 %v5716, %v2798
        %v5753 = vmul.f32 %v5717, %v2800
        %v5754 = vmul.f32 %v5718, %v3338
        %v5755 = vmul.f32 %v5719, %v3340
        %v5756 = vmul.f32 %v5720, %v3878
        %v5757 = vmul.f32 %v5721, %v3880
        %v5758 = vmul.f32 %v5722, %v4418
        %v5759 = vmul.f32 %v5723, %v4420
        %v5760 = vmul.f32 %v5724, %v4958
        %v5761 = vmul.f32 %v5725, %v4960
        %v5762 = vmul.f32 %v5726, %v5498
        %v5763 = vmul.f32 %v5727, %v5500
        %v5764 = vmul.f32 %v5728, %v1185
        %v5765 = vmul.f32 %v5729, %v1187
        %v5766 = vmul.f32 %v5730, %v1725
        %v5767 = vmul.f32 %v5731, %v1727
        %v5768 = vmul.f32 %v5732, %v2265
        %v5769 = vmul.f32 %v5733, %v2267
        %v5770 = vmul.f32 %v5734, %v2805
        %v5771 = vmul.f32 %v5735, %v2807
        %v5772 = vmul.f32 %v5736, %v3345
        %v5773 = vmul.f32 %v5737, %v3347
        %v5774 = vmul.f32 %v5738, %v3885
        %v5775 = vmul.f32 %v5739, %v3887
        %v5776 = vmul.f32 %v5740, %v4425
        %v5777 = vmul.f32 %v5741, %v4427
        %v5778 = vmul.f32 %v5742, %v4965
        %v5779 = vmul.f32 %v5743, %v4967
        %v5780 = vmul.f32 %v5744, %v5505
        %v5781 = vmul.f32 %v5745, %v5507
        %v5782 = vadd.f32 %v5746, %v5764
        %v5783 = vrot.slane %v5782, 4
        %v5784 = vadd.f32 %v5782, %v5783
        %v5785 = vrot.slane %v5784, 2
        %v5786 = vadd.f32 %v5784, %v5785
        %v5787 = vrot.slane %v5786, 1
        %v5788 = vadd.f32 %v5786, %v5787
        %v5789 = vadd.f32 %v5747, %v5765
        %v5790 = vrot.slane %v5789, 4
        %v5791 = vadd.f32 %v5789, %v5790
        %v5792 = vrot.slane %v5791, 2
        %v5793 = vadd.f32 %v5791, %v5792
        %v5794 = vrot.slane %v5793, 1
        %v5795 = vadd.f32 %v5793, %v5794
        %v5796 = vadd.f32 %v5748, %v5766
        %v5797 = vrot.slane %v5796, 4
        %v5798 = vadd.f32 %v5796, %v5797
        %v5799 = vrot.slane %v5798, 2
        %v5800 = vadd.f32 %v5798, %v5799
        %v5801 = vrot.slane %v5800, 1
        %v5802 = vadd.f32 %v5800, %v5801
        %v5803 = vadd.f32 %v5749, %v5767
        %v5804 = vrot.slane %v5803, 4
        %v5805 = vadd.f32 %v5803, %v5804
        %v5806 = vrot.slane %v5805, 2
        %v5807 = vadd.f32 %v5805, %v5806
        %v5808 = vrot.slane %v5807, 1
        %v5809 = vadd.f32 %v5807, %v5808
        %v5810 = vadd.f32 %v5750, %v5768
        %v5811 = vrot.slane %v5810, 4
        %v5812 = vadd.f32 %v5810, %v5811
        %v5813 = vrot.slane %v5812, 2
        %v5814 = vadd.f32 %v5812, %v5813
        %v5815 = vrot.slane %v5814, 1
        %v5816 = vadd.f32 %v5814, %v5815
        %v5817 = vadd.f32 %v5751, %v5769
        %v5818 = vrot.slane %v5817, 4
        %v5819 = vadd.f32 %v5817, %v5818
        %v5820 = vrot.slane %v5819, 2
        %v5821 = vadd.f32 %v5819, %v5820
        %v5822 = vrot.slane %v5821, 1
        %v5823 = vadd.f32 %v5821, %v5822
        %v5824 = vadd.f32 %v5752, %v5770
        %v5825 = vrot.slane %v5824, 4
        %v5826 = vadd.f32 %v5824, %v5825
        %v5827 = vrot.slane %v5826, 2
        %v5828 = vadd.f32 %v5826, %v5827
        %v5829 = vrot.slane %v5828, 1
        %v5830 = vadd.f32 %v5828, %v5829
        %v5831 = vadd.f32 %v5753, %v5771
        %v5832 = vrot.slane %v5831, 4
        %v5833 = vadd.f32 %v5831, %v5832
        %v5834 = vrot.slane %v5833, 2
        %v5835 = vadd.f32 %v5833, %v5834
        %v5836 = vrot.slane %v5835, 1
        %v5837 = vadd.f32 %v5835, %v5836
        %v5838 = vadd.f32 %v5754, %v5772
        %v5839 = vrot.slane %v5838, 4
        %v5840 = vadd.f32 %v5838, %v5839
        %v5841 = vrot.slane %v5840, 2
        %v5842 = vadd.f32 %v5840, %v5841
        %v5843 = vrot.slane %v5842, 1
        %v5844 = vadd.f32 %v5842, %v5843
        %v5845 = vadd.f32 %v5755, %v5773
        %v5846 = vrot.slane %v5845, 4
        %v5847 = vadd.f32 %v5845, %v5846
        %v5848 = vrot.slane %v5847, 2
        %v5849 = vadd.f32 %v5847, %v5848
        %v5850 = vrot.slane %v5849, 1
        %v5851 = vadd.f32 %v5849, %v5850
        %v5852 = vadd.f32 %v5756, %v5774
        %v5853 = vrot.slane %v5852, 4
        %v5854 = vadd.f32 %v5852, %v5853
        %v5855 = vrot.slane %v5854, 2
        %v5856 = vadd.f32 %v5854, %v5855
        %v5857 = vrot.slane %v5856, 1
        %v5858 = vadd.f32 %v5856, %v5857
        %v5859 = vadd.f32 %v5757, %v5775
        %v5860 = vrot.slane %v5859, 4
        %v5861 = vadd.f32 %v5859, %v5860
        %v5862 = vrot.slane %v5861, 2
        %v5863 = vadd.f32 %v5861, %v5862
        %v5864 = vrot.slane %v5863, 1
        %v5865 = vadd.f32 %v5863, %v5864
        %v5866 = vadd.f32 %v5758, %v5776
        %v5867 = vrot.slane %v5866, 4
        %v5868 = vadd.f32 %v5866, %v5867
        %v5869 = vrot.slane %v5868, 2
        %v5870 = vadd.f32 %v5868, %v5869
        %v5871 = vrot.slane %v5870, 1
        %v5872 = vadd.f32 %v5870, %v5871
        %v5873 = vadd.f32 %v5759, %v5777
        %v5874 = vrot.slane %v5873, 4
        %v5875 = vadd.f32 %v5873, %v5874
        %v5876 = vrot.slane %v5875, 2
        %v5877 = vadd.f32 %v5875, %v5876
        %v5878 = vrot.slane %v5877, 1
        %v5879 = vadd.f32 %v5877, %v5878
        %v5880 = vadd.f32 %v5760, %v5778
        %v5881 = vrot.slane %v5880, 4
        %v5882 = vadd.f32 %v5880, %v5881
        %v5883 = vrot.slane %v5882, 2
        %v5884 = vadd.f32 %v5882, %v5883
        %v5885 = vrot.slane %v5884, 1
        %v5886 = vadd.f32 %v5884, %v5885
        %v5887 = vadd.f32 %v5761, %v5779
        %v5888 = vrot.slane %v5887, 4
        %v5889 = vadd.f32 %v5887, %v5888
        %v5890 = vrot.slane %v5889, 2
        %v5891 = vadd.f32 %v5889, %v5890
        %v5892 = vrot.slane %v5891, 1
        %v5893 = vadd.f32 %v5891, %v5892
        %v5894 = vadd.f32 %v5762, %v5780
        %v5895 = vrot.slane %v5894, 4
        %v5896 = vadd.f32 %v5894, %v5895
        %v5897 = vrot.slane %v5896, 2
        %v5898 = vadd.f32 %v5896, %v5897
        %v5899 = vrot.slane %v5898, 1
        %v5900 = vadd.f32 %v5898, %v5899
        %v5901 = vadd.f32 %v5763, %v5781
        %v5902 = vrot.slane %v5901, 4
        %v5903 = vadd.f32 %v5901, %v5902
        %v5904 = vrot.slane %v5903, 2
        %v5905 = vadd.f32 %v5903, %v5904
        %v5906 = vrot.slane %v5905, 1
        %v5907 = vadd.f32 %v5905, %v5906
        %s5908 = sld [smem:[#allocation3]]
        %v5909 = vstv %s5908
        %v5910 = vmul.f32 %v5909, %v396
        %v5911 = vmul.f32 %v5909, %v397
        %v5912 = vmul.f32 %v5910, %v5788
        %v5913 = vmul.f32 %v5911, %v5795
        %v5914 = vadd.f32 %v5912, 0.0
        %v5915 = vadd.f32 %v5913, 0.0
        %s5916 = sld [smem:[#allocation3 + $0x1]]
        %v5917 = vstv %s5916
        %v5918 = vmul.f32 %v5917, %v396
        %v5919 = vmul.f32 %v5917, %v397
        %v5920 = vmul.f32 %v5918, %v5802
        %v5921 = vmul.f32 %v5919, %v5809
        %v5924 = vrot.slane %v5920, 1
        %v5925 = vrot.slane %v5921, 1
        %v5928 = vadd.f32 %v5914, %v5924
        %v5929 = vadd.f32 %v5915, %v5925
        %s5930 = sld [smem:[#allocation3 + $0x2]]
        %v5931 = vstv %s5930
        %v5932 = vmul.f32 %v5931, %v396
        %v5933 = vmul.f32 %v5931, %v397
        %v5934 = vmul.f32 %v5932, %v5816
        %v5935 = vmul.f32 %v5933, %v5823
        %v5938 = vrot.slane %v5934, 2
        %v5939 = vrot.slane %v5935, 2
        %v5942 = vadd.f32 %v5928, %v5938
        %v5943 = vadd.f32 %v5929, %v5939
        %s5944 = sld [smem:[#allocation3 + $0x3]]
        %v5945 = vstv %s5944
        %v5946 = vmul.f32 %v5945, %v396
        %v5947 = vmul.f32 %v5945, %v397
        %v5948 = vmul.f32 %v5946, %v5830
        %v5949 = vmul.f32 %v5947, %v5837
        %v5952 = vrot.slane %v5948, 3
        %v5953 = vrot.slane %v5949, 3
        %v5956 = vadd.f32 %v5942, %v5952
        %v5957 = vadd.f32 %v5943, %v5953
        %s5958 = sld [smem:[#allocation3 + $0x4]]
        %v5959 = vstv %s5958
        %v5960 = vmul.f32 %v5959, %v396
        %v5961 = vmul.f32 %v5959, %v397
        %v5962 = vmul.f32 %v5960, %v5844
        %v5963 = vmul.f32 %v5961, %v5851
        %v5966 = vrot.slane %v5962, 4
        %v5967 = vrot.slane %v5963, 4
        %v5970 = vadd.f32 %v5956, %v5966
        %v5971 = vadd.f32 %v5957, %v5967
        %s5972 = sld [smem:[#allocation3 + $0x5]]
        %v5973 = vstv %s5972
        %v5974 = vmul.f32 %v5973, %v396
        %v5975 = vmul.f32 %v5973, %v397
        %v5976 = vmul.f32 %v5974, %v5858
        %v5977 = vmul.f32 %v5975, %v5865
        %v5980 = vrot.slane %v5976, 5
        %v5981 = vrot.slane %v5977, 5
        %v5984 = vadd.f32 %v5970, %v5980
        %v5985 = vadd.f32 %v5971, %v5981
        %s5986 = sld [smem:[#allocation3 + $0x6]]
        %v5987 = vstv %s5986
        %v5988 = vmul.f32 %v5987, %v396
        %v5989 = vmul.f32 %v5987, %v397
        %v5990 = vmul.f32 %v5988, %v5872
        %v5991 = vmul.f32 %v5989, %v5879
        %v5994 = vrot.slane %v5990, 6
        %v5995 = vrot.slane %v5991, 6
        %v5998 = vadd.f32 %v5984, %v5994
        %v5999 = vadd.f32 %v5985, %v5995
        %s6000 = sld [smem:[#allocation3 + $0x7]]
        %v6001 = vstv %s6000
        %v6002 = vmul.f32 %v6001, %v396
        %v6003 = vmul.f32 %v6001, %v397
        %v6004 = vmul.f32 %v6002, %v5886
        %v6005 = vmul.f32 %v6003, %v5893
        %v6008 = vrot.slane %v6004, 7
        %v6009 = vrot.slane %v6005, 7
        %v6012 = vadd.f32 %v5998, %v6008
        %v6013 = vadd.f32 %v5999, %v6009
        %s6014 = sld [smem:[#allocation3 + $0x8]]
        %v6015 = vstv %s6014
        %v6016 = vmul.f32 %v6015, %v398
        %v6017 = vmul.f32 %v6015, %v399
        %v6018 = vmul.f32 %v6016, %v5900
        %v6019 = vmul.f32 %v6017, %v5907
        %v6020 = vadd.f32 %v6012, %v6018
        %v6021 = vadd.f32 %v6013, %v6019
        %s6022 = sld [smem:[#allocation2]]
        %v6023 = vstv %s6022
        %v6024 = vadd.f32 %v6020, %v6023
        %v6025 = vadd.f32 %v6021, %v6023
        %v6028 = vcombine.low %v6024, %v6025
        %v6030 = vunpack.c.l.s4 1966171168
        %v6031 = vunpack.c.0.s8 %v6030
        %v6032 = vlaneseq
        %v6033 = vshrl.u32 %v6032, 7
        %v6034 = vsub.s32 %v6031, %v6033
        %v6035 = vrot.slane %v6028, %v6034
        %v6037 = vunpack.c.l.s4 1966171168
        %v6038 = vunpack.c.0.s8 %v6037
        %v6039 = vlaneseq
        %v6040 = vshrl.u32 %v6039, 7
        %v6041 = vsub.s32 %v6038, %v6040
        %v6042 = vrot.slane %v6035, %v6041
        %v6044 = vlaneseq
        %vm6045 = vcmp.ge.s32.totalorder %v6044, 0
        %vm6046 = vcmp.lt.s32.totalorder %v6044, 256
        %vm6047 = vmand %vm6045, %vm6046
        %6048 = vst.msk [vmem:[%s335] sm:$0x3] %vm6047, %v6042
        %s6049 = sand.u32 %s196, 1
        %s6050 = scalar_lea.sflag [#allocation4], %s6049
        %s6051 = sand.u32 %s196, 1
        %s6052 = smul.addr %s6051, 2
        %s6053 = scalar_lea.vmem [#allocation6], %s6052
        // Predicated region
        $region49: #{tpu_custom_call.1} parent=43 // pred_check
          %p6054 = pneg %p206
        $region50: #{tpu_custom_call.1} parent=43 // pred_check_branch
          %6056 = sbr.rel (%p6054) target = $region52
        $region51: #{tpu_custom_call.1} parent=43 // pred_region
          %s6057 = smul.u32 2, %s27
          %s6059 = ssub.s32 32, 32
          %6060 = vsyncadd %s6050, %s6059
          %s6061 = smul.addr %s26, 2
          %s6062 = sadd.s32 %s6057, %s6061
          %s6063 = smul.addr %s6062, 16
          %s6064 = scalar_lea.hbm %s6, %s6063
          %s6066 = sshll.u32 %s6053, 4
          %s6067 = int_to_ptr.vmem [resolvable:$true] %s6066
          %6069 = dma.vmem_to_hbm [thread:$0]  %s6067, 32, %s6064, %s6050
        $region52: #{tpu_custom_call.1} parent=43 // pred_fallthru
          _
      $region44: #{tpu_custom_call.1} parent=5 // pred_fallthru
        _
      %p6070 = scmp.le.s32.totalorder 2, %s17
      // Predicated region
      $region53: #{tpu_custom_call.1} parent=5 // pred_check
        %p6071 = pneg %p6070
      $region54: #{tpu_custom_call.1} parent=5 // pred_check_branch
        %6073 = sbr.rel (%p6071) target = $region56
      $region55: #{tpu_custom_call.1} parent=5 // pred_region
        %s6074 = ssub.s32 %s17, 2
        // Predicated region
        $region57: #{tpu_custom_call.1} parent=55 // pred_check
          %p6075 = pneg %p212
        $region58: #{tpu_custom_call.1} parent=55 // pred_check_branch
          %6077 = sbr.rel (%p6075) target = $region60
        $region59: #{tpu_custom_call.1} parent=55 // pred_region
          %s6078 = sand.u32 %s197, 1
          %s6079 = scalar_lea.sflag [#allocation4], %s6078
          %s6080 = sand.u32 %s197, 1
          %s6081 = smul.addr %s6080, 2
          %s6082 = scalar_lea.vmem [#allocation6], %s6081
          %6083 = dma.done %s6079, 32
        $region60: #{tpu_custom_call.1} parent=55 // pred_fallthru
          _
      $region56: #{tpu_custom_call.1} parent=5 // pred_fallthru
        _
    $region6: #{tpu_custom_call.1} parent=1 // loop_footer
      %s21 = sadd.s32 1, %s17
    $region7: #{tpu_custom_call.1} parent=1 // loop_footer_branch
      %16 = sbr.rel target = $region3
    $region8: #{tpu_custom_call.1} parent=1 // loop_exit
      _
    %6084 = vsyncpa [#allocation4], 1
    %s6085 = scalar_lea.sflag [#allocation4], 1
    %6086 = vsyncpa %s6085, 1
    %6087 = vsyncpa [#allocation5], 1
    %s6088 = scalar_lea.sflag [#allocation5], 1
    %6089 = vsyncpa %s6088, 1

</llo_original>
